<compile_context>
chip_gen: v5e
topology: v5e:2x2
jax: 0.10.0
libtpu: 0.0.40
codegen_flags: <defaults>
</compile_context>

<pallas_src>
import functools

import jax
import jax.numpy as jnp
from jax import lax
from jax.experimental import pallas as pl
from jax.experimental.pallas import tpu as pltpu

_BN_EPS = 1e-5      # torch.nn.BatchNorm1d default eps
_NORM_EPS = 1e-12   # torch.nn.functional.normalize default eps

# Generation-aware VMEM budget: ~3/4 of physical VMEM, clamped to a range that is
# safe on v7x (64 MiB physical) and useful on v5e/v6e (128 MiB physical).
try:
    _PHYS_VMEM = int(pltpu.get_tpu_info().vmem_capacity_bytes)
except Exception:  # conservative fallback (v7x-safe)
    _PHYS_VMEM = 64 * 1024 * 1024
_VMEM_LIMIT = max(48 * 1024 * 1024, min((_PHYS_VMEM * 3) // 4, 100 * 1024 * 1024))


# ------------------------------ shared epilogues ----------------------------- #

def _bn(y):
    # BatchNorm1d training mode: batch statistics, biased variance.
    # Affine params at PyTorch init (gamma=1, beta=0) -> omitted.
    mean = jnp.mean(y, axis=0, keepdims=True)
    var = jnp.mean((y - mean) ** 2, axis=0, keepdims=True)
    return (y - mean) * lax.rsqrt(var + _BN_EPS)


def _l2norm(y):
    # F.normalize(., p=2, dim=1): x / max(||x||, eps) == x * rsqrt(max(||x||^2, eps^2))
    sq = jnp.sum(y * y, axis=1, keepdims=True)
    return y * lax.rsqrt(jnp.maximum(sq, _NORM_EPS * _NORM_EPS))


# ----------------------- fused encoder+projector+predictor ------------------- #

def _mec_mlp_kernel(x_ref, enc_w, pw1, pw2, pw3, pb3, qw1, qw2, qb2,
                    proj_ref, z_ref):
    """One grid point == one view.  Everything stays resident in VMEM."""

    def mm(a, w_ref):
        # bf16 MXU inputs (weights are already bf16 in HBM), f32 accumulation.
        return jnp.dot(a.astype(jnp.bfloat16), w_ref[...],
                       preferred_element_type=jnp.float32)

    x = x_ref[0]                                   # [B, in_dim], bf16
    # Stand-in encoder (flatten + Linear) followed by F.normalize(., dim=1).
    f = _l2norm(mm(x, enc_w))
    # Projector: Linear/BN/ReLU, Linear/BN/ReLU, encoder.fc(+bias)/BN(affine=False).
    h = jnp.maximum(_bn(mm(f, pw1)), 0.0)
    h = jnp.maximum(_bn(mm(h, pw2)), 0.0)
    proj = _bn(mm(h, pw3) + pb3[...])
    proj_ref[0] = proj.astype(proj_ref.dtype)
    # Predictor: Linear/BN/ReLU, Linear(+bias).
    q = jnp.maximum(_bn(mm(proj, qw1)), 0.0)
    z_ref[0] = (mm(q, qw2) + qb2[...]).astype(z_ref.dtype)


def pallas_mec_mlp(params, x):
    """x: [2, B, in_dim] bf16 (two views stacked). Returns proj, z: [2, B, dim] f32."""
    two, b, in_dim = x.shape
    dim = params['proj_w3'].shape[1]
    assert two == 2
    assert b % 8 == 0, "batch must be a multiple of 8 (sublane alignment)"

    weights = (params['enc_w'], params['proj_w1'], params['proj_w2'],
               params['proj_w3'], params['proj_b3'], params['pred_w1'],
               params['pred_w2'], params['pred_b2'])

    def whole(arr):
        nd = arr.ndim
        return pl.BlockSpec(arr.shape, lambda v, _nd=nd: (0,) * _nd)

    def view_spec(last):
        return pl.BlockSpec((1, b, last), lambda v: (v, 0, 0))

    return pl.pallas_call(
        _mec_mlp_kernel,
        out_shape=(jax.ShapeDtypeStruct((2, b, dim), jnp.float32),
                   jax.ShapeDtypeStruct((2, b, dim), jnp.float32)),
        grid_spec=pltpu.PrefetchScalarGridSpec(
            num_scalar_prefetch=0,
            grid=(2,),                                   # one grid point per view
            in_specs=[view_spec(in_dim)] + [whole(w) for w in weights],
            out_specs=[view_spec(dim), view_spec(dim)]),
        compiler_params=pltpu.CompilerParams(
            dimension_semantics=("parallel",),           # views -> 2 TCs on v7x
            vmem_limit_bytes=_VMEM_LIMIT),
    )(x, *weights)


# -------------------------- merged MCE loss kernel --------------------------- #

def _mce_pair_kernel(p_ref, z_ref, loss_ref, *, lamda, mu, order):
    """One grid point == one (p, z) pair; emits alignment AND uniformity losses."""
    p = p_ref[0]                                   # [B, n] f32
    z = z_ref[0]
    m, n = p.shape
    inv_m = 1.0 / m

    # F.normalize(., p=2, dim=1) in f32 (rsqrt on the EUP) -- shared by both losses.
    p = _l2norm(p)
    z = _l2norm(z)
    # Centering matrix applied once: J_m @ x == x - mean(x, axis=0)
    pc = p - jnp.mean(p, axis=0, keepdims=True)
    zc = z - jnp.mean(z, axis=0, keepdims=True)

    pb, zb = p.astype(jnp.bfloat16), z.astype(jnp.bfloat16)
    pcb, zcb = pc.astype(jnp.bfloat16), zc.astype(jnp.bfloat16)

    def gram(a, b_centered):
        # (1/m) * a.T @ J_m @ b : bf16 MXU inputs, f32 accumulate.  Contraction on
        # dim 0 of both operands maps to the MXU's transposed-LHS path for these
        # small [B, n] operands (no user-level XLU transpose inserted).
        return inv_m * lax.dot_general(a, b_centered, (((0,), (0,)), ((), ())),
                                       preferred_element_type=jnp.float32)

    row = lax.broadcasted_iota(jnp.int32, (n, n), 0)
    col = lax.broadcasted_iota(jnp.int32, (n, n), 1)
    diag = row == col

    def matrix_log_from_a(a):
        # Truncated Taylor series of log(I + A) around I (A = Q - I).
        # Powers use bf16 MXU inputs with f32 accumulation; running sum stays f32.
        a_b = a.astype(jnp.bfloat16)
        log_q = a
        power = a
        for k in range(2, order + 1):
            power = jnp.dot(power.astype(jnp.bfloat16), a_b,
                            preferred_element_type=jnp.float32)
            log_q = log_q + ((-1.0) ** (k + 1) / k) * power
        return log_q

    # Uniformity (correlation=True): P = lamda*I, Q = gram(p, z) + mu*I.
    #   trace(-P @ logQ) == -lamda * trace(logQ)  -> no P matmul / eye materialization.
    a_u = gram(pb, zcb)
    a_u = jnp.where(diag, a_u + (mu - 1.0), a_u)          # Q - I with mu on the diag
    unif = -lamda * jnp.sum(jnp.where(diag, matrix_log_from_a(a_u), 0.0))

    # Alignment (correlation=False): P = gram(p,p)+mu*I, Q = gram(z,z)+mu*I.
    #   trace(-P @ logQ) == -sum(P * logQ)   (P and logQ symmetric)
    g_pp = gram(pb, pcb)
    p_a = jnp.where(diag, g_pp + mu, g_pp)
    a_a = gram(zb, zcb)
    a_a = jnp.where(diag, a_a + (mu - 1.0), a_a)
    align = -jnp.sum(p_a * matrix_log_from_a(a_a))

    # Lane-dense (8,128) output tile per pair; wrapper reads [:, 0, 0] / [:, 0, 1].
    col8 = lax.broadcasted_iota(jnp.int32, (8, 128), 1)
    loss_ref[0] = jnp.where(col8 == 0, align, jnp.where(col8 == 1, unif, 0.0))


def pallas_mce(proj, z, *, lamda, mu, order):
    """proj, z: [2, B, dim].  Pair 0 = (p2, z1), pair 1 = (p1, z2).

    Returns (align[2], unif[2]).
    """
    # TODO(synk): for very large B the whole-view VMEM residency here should be
    # replaced by a batch-tiled gram accumulation (extra grid axis + scratch).
    two, m, n = proj.shape
    kernel = functools.partial(_mce_pair_kernel, lamda=lamda, mu=mu, order=order)
    out = pl.pallas_call(
        kernel,
        out_shape=jax.ShapeDtypeStruct((2, 8, 128), jnp.float32),
        grid_spec=pltpu.PrefetchScalarGridSpec(
            num_scalar_prefetch=0,
            grid=(2,),                                   # one grid point per pair
            # pair i uses proj of the *other* view and z of view i.
            in_specs=[pl.BlockSpec((1, m, n), lambda i: (1 - i, 0, 0)),
                      pl.BlockSpec((1, m, n), lambda i: (i, 0, 0))],
            out_specs=pl.BlockSpec((1, 8, 128), lambda i: (i, 0, 0))),
        compiler_params=pltpu.CompilerParams(
            dimension_semantics=("parallel",),           # pairs -> 2 TCs on v7x
            vmem_limit_bytes=_VMEM_LIMIT),
    )(proj, z)
    return out[:, 0, 0], out[:, 0, 1]


# ------------------------------ model glue ---------------------------------- #

def _uniform(key, shape, fan_in, dtype=jnp.float32):
    bound = 1.0 / float(fan_in) ** 0.5
    return jax.random.uniform(key, shape, jnp.float32, -bound, bound).astype(dtype)


def init_params(key, in_dim, prev_dim, dim, pred_dim):
    ks = jax.random.split(key, 8)
    bf = jnp.bfloat16
    return {
        # TODO(synk): base_encoder is a constructor-injected backbone (e.g. ResNet);
        # replaced here by a stand-in flatten + Linear encoder producing prev_dim feats.
        'enc_w':   _uniform(ks[0], (in_dim, prev_dim), in_dim, bf),
        'proj_w1': _uniform(ks[1], (prev_dim, prev_dim), prev_dim, bf),  # no bias
        'proj_w2': _uniform(ks[2], (prev_dim, prev_dim), prev_dim, bf),  # no bias
        'proj_w3': _uniform(ks[3], (prev_dim, dim), prev_dim, bf),       # encoder.fc
        'proj_b3': _uniform(ks[4], (1, dim), prev_dim),                  # bias, f32
        'pred_w1': _uniform(ks[5], (dim, pred_dim), dim, bf),            # no bias
        'pred_w2': _uniform(ks[6], (pred_dim, dim), pred_dim, bf),
        'pred_b2': _uniform(ks[7], (1, dim), pred_dim),                  # bias, f32
    }


def mec_forward(params, x1, x2, *, mce_gamma=1.0, mce_lambda=0.5, mce_mu=0.5,
                mce_order=4):
    b = x1.shape[0]
    # Stack the two views on a leading axis (bf16 halves the input DMA bytes);
    # the fused kernel keeps BN per-view because each grid point is one view.
    x = jnp.stack([x1.reshape(b, -1), x2.reshape(b, -1)], axis=0).astype(jnp.bfloat16)

    # One fused pallas_call: encoder + L2-norm + projector + predictor, both views.
    proj, z = pallas_mec_mlp(params, x)              # proj, z: [2, B, dim] f32

    # Teacher branch: deepcopy at init => teacher projector output equals the online
    # projector output; torch.no_grad -> lax.stop_gradient.
    # TODO(synk): a momentum-updated teacher would need its own weight set / pass.
    p = lax.stop_gradient(proj)

    # One merged kernel: both (p, z) pairs, each producing alignment + uniformity.
    align, unif = pallas_mce(p, z, lamda=mce_lambda, mu=mce_mu, order=mce_order)

    alignment_loss = mce_gamma * (align[0] + align[1])
    unif_loss = unif[0] + unif[1]
    loss = 0.5 * (alignment_loss + unif_loss)
    return {'loss': loss, 'alignment_loss': alignment_loss,
            'uniformity_loss': unif_loss, 'd_dict': []}


if __name__ == "__main__":
    # Small but lane-dense shapes: batch multiple of 8, feature dims multiples of 128
    # so MXU tiles and output stores stay unmasked.
    B, C, H, W = 8, 3, 16, 16
    prev_dim, dim, pred_dim = 256, 128, 128

    key = jax.random.PRNGKey(0)
    kp, k1, k2 = jax.random.split(key, 3)
    params = init_params(kp, C * H * W, prev_dim, dim, pred_dim)
    x1 = jax.random.normal(k1, (B, C, H, W), jnp.float32)
    x2 = jax.random.normal(k2, (B, C, H, W), jnp.float32)

    out = jax.jit(mec_forward)(params, x1, x2)
    jax.block_until_ready(out)
    assert jnp.isfinite(out['loss'])
    print("KERNEL_OK")
</pallas_src>

<mosaic_0001>
module attributes {stable_mosaic.version = 11 : i64} {
  func.func @_mce_pair_kernel(%arg0: i32, %arg1: memref<1x8x128xf32, #tpu.memory_space<vmem>>, %arg2: memref<1x8x128xf32, #tpu.memory_space<vmem>>, %arg3: memref<1x8x128xf32, #tpu.memory_space<vmem>>) attributes {dimension_semantics = [#tpu.dimension_semantics<parallel>], iteration_bounds = array<i64: 2>, scalar_prefetch = 0 : i64, scratch_operands = 0 : i64, tpu.core_type = #tpu.core_type<tc>, window_params = [{transform_indices = @transform_0, window_bounds = array<i64: 1, 8, 128>}, {transform_indices = @transform_1, window_bounds = array<i64: 1, 8, 128>}, {transform_indices = @transform_2, window_bounds = array<i64: 1, 8, 128>}]} {
    %c0 = arith.constant 0 : index
    %c0_0 = arith.constant 0 : index
    %c0_1 = arith.constant 0 : index
    %0 = vector.load %arg1[%c0, %c0_0, %c0_1] : memref<1x8x128xf32, #tpu.memory_space<vmem>>, vector<1x8x128xf32>
    %1 = vector.shape_cast %0 : vector<1x8x128xf32> to vector<8x128xf32>
    %c0_2 = arith.constant 0 : index
    %c0_3 = arith.constant 0 : index
    %c0_4 = arith.constant 0 : index
    %2 = vector.load %arg2[%c0_2, %c0_3, %c0_4] : memref<1x8x128xf32, #tpu.memory_space<vmem>>, vector<1x8x128xf32>
    %3 = vector.shape_cast %2 : vector<1x8x128xf32> to vector<8x128xf32>
    %4 = arith.mulf %1, %1 : vector<8x128xf32>
    %cst = arith.constant dense<0.000000e+00> : vector<8xf32>
    %5 = vector.multi_reduction <add>, %4, %cst [1] : vector<8x128xf32> to vector<8xf32>
    %6 = vector.shape_cast %5 : vector<8xf32> to vector<8x1xf32>
    %cst_5 = arith.constant 1.000000e-24 : f32
    %7 = vector.broadcast %cst_5 : f32 to vector<8x1xf32>
    %8 = arith.maximumf %6, %7 : vector<8x1xf32>
    %9 = math.rsqrt %8 : vector<8x1xf32>
    %10 = vector.broadcast %9 : vector<8x1xf32> to vector<8x128xf32>
    %11 = arith.mulf %1, %10 : vector<8x128xf32>
    %12 = arith.mulf %3, %3 : vector<8x128xf32>
    %cst_6 = arith.constant dense<0.000000e+00> : vector<8xf32>
    %13 = vector.multi_reduction <add>, %12, %cst_6 [1] : vector<8x128xf32> to vector<8xf32>
    %14 = vector.shape_cast %13 : vector<8xf32> to vector<8x1xf32>
    %cst_7 = arith.constant 1.000000e-24 : f32
    %15 = vector.broadcast %cst_7 : f32 to vector<8x1xf32>
    %16 = arith.maximumf %14, %15 : vector<8x1xf32>
    %17 = math.rsqrt %16 : vector<8x1xf32>
    %18 = vector.broadcast %17 : vector<8x1xf32> to vector<8x128xf32>
    %19 = arith.mulf %3, %18 : vector<8x128xf32>
    %cst_8 = arith.constant dense<0.000000e+00> : vector<128xf32>
    %20 = vector.multi_reduction <add>, %11, %cst_8 [0] : vector<8x128xf32> to vector<128xf32>
    %21 = vector.shape_cast %20 : vector<128xf32> to vector<1x128xf32>
    %cst_9 = arith.constant 8.000000e+00 : f32
    %22 = vector.broadcast %cst_9 : f32 to vector<1x128xf32>
    %23 = arith.divf %21, %22 : vector<1x128xf32>
    %24 = vector.broadcast %23 : vector<1x128xf32> to vector<8x128xf32>
    %25 = arith.subf %11, %24 : vector<8x128xf32>
    %cst_10 = arith.constant dense<0.000000e+00> : vector<128xf32>
    %26 = vector.multi_reduction <add>, %19, %cst_10 [0] : vector<8x128xf32> to vector<128xf32>
    %27 = vector.shape_cast %26 : vector<128xf32> to vector<1x128xf32>
    %cst_11 = arith.constant 8.000000e+00 : f32
    %28 = vector.broadcast %cst_11 : f32 to vector<1x128xf32>
    %29 = arith.divf %27, %28 : vector<1x128xf32>
    %30 = vector.broadcast %29 : vector<1x128xf32> to vector<8x128xf32>
    %31 = arith.subf %19, %30 : vector<8x128xf32>
    %32 = arith.truncf %11 : vector<8x128xf32> to vector<8x128xbf16>
    %33 = arith.truncf %19 : vector<8x128xf32> to vector<8x128xbf16>
    %34 = arith.truncf %25 : vector<8x128xf32> to vector<8x128xbf16>
    %35 = arith.truncf %31 : vector<8x128xf32> to vector<8x128xbf16>
    %36 = tpu.iota {dimensions = array<i32: 0>} : vector<128x128xi32>
    %37 = tpu.iota {dimensions = array<i32: 1>} : vector<128x128xi32>
    %38 = arith.cmpi eq, %36, %37 : vector<128x128xi32>
    %cst_12 = arith.constant dense<0.000000e+00> : vector<128x128xf32>
    %39 = tpu.matmul %32, %35, %cst_12 {dimension_numbers = #tpu.dot_dimension_numbers<[0], [0], [1], [1], [0, 1, 1, 1], [], []>} : vector<8x128xbf16>, vector<8x128xbf16>, vector<128x128xf32> -> vector<128x128xf32>
    %cst_13 = arith.constant 1.250000e-01 : f32
    %40 = vector.broadcast %cst_13 : f32 to vector<128x128xf32>
    %41 = arith.mulf %40, %39 : vector<128x128xf32>
    %cst_14 = arith.constant -5.000000e-01 : f32
    %42 = vector.broadcast %cst_14 : f32 to vector<128x128xf32>
    %43 = arith.addf %41, %42 : vector<128x128xf32>
    %44 = arith.select %38, %43, %41 : vector<128x128xi1>, vector<128x128xf32>
    %45 = arith.truncf %44 : vector<128x128xf32> to vector<128x128xbf16>
    %46 = arith.truncf %44 : vector<128x128xf32> to vector<128x128xbf16>
    %cst_15 = arith.constant dense<0.000000e+00> : vector<128x128xf32>
    %47 = tpu.matmul %46, %45, %cst_15 {dimension_numbers = #tpu.dot_dimension_numbers<[1], [0], [0], [1], [0, 0, 1, 1], [], []>} : vector<128x128xbf16>, vector<128x128xbf16>, vector<128x128xf32> -> vector<128x128xf32>
    %cst_16 = arith.constant -5.000000e-01 : f32
    %48 = vector.broadcast %cst_16 : f32 to vector<128x128xf32>
    %49 = arith.mulf %48, %47 : vector<128x128xf32>
    %50 = arith.addf %44, %49 : vector<128x128xf32>
    %51 = arith.truncf %47 : vector<128x128xf32> to vector<128x128xbf16>
    %cst_17 = arith.constant dense<0.000000e+00> : vector<128x128xf32>
    %52 = tpu.matmul %51, %45, %cst_17 {dimension_numbers = #tpu.dot_dimension_numbers<[1], [0], [0], [1], [0, 0, 1, 1], [], []>} : vector<128x128xbf16>, vector<128x128xbf16>, vector<128x128xf32> -> vector<128x128xf32>
    %cst_18 = arith.constant 0.333333343 : f32
    %53 = vector.broadcast %cst_18 : f32 to vector<128x128xf32>
    %54 = arith.mulf %53, %52 : vector<128x128xf32>
    %55 = arith.addf %50, %54 : vector<128x128xf32>
    %56 = arith.truncf %52 : vector<128x128xf32> to vector<128x128xbf16>
    %cst_19 = arith.constant dense<0.000000e+00> : vector<128x128xf32>
    %57 = tpu.matmul %56, %45, %cst_19 {dimension_numbers = #tpu.dot_dimension_numbers<[1], [0], [0], [1], [0, 0, 1, 1], [], []>} : vector<128x128xbf16>, vector<128x128xbf16>, vector<128x128xf32> -> vector<128x128xf32>
    %cst_20 = arith.constant -2.500000e-01 : f32
    %58 = vector.broadcast %cst_20 : f32 to vector<128x128xf32>
    %59 = arith.mulf %58, %57 : vector<128x128xf32>
    %60 = arith.addf %55, %59 : vector<128x128xf32>
    %cst_21 = arith.constant 0.000000e+00 : f32
    %61 = vector.broadcast %cst_21 : f32 to vector<128x128xf32>
    %62 = arith.select %38, %60, %61 : vector<128x128xi1>, vector<128x128xf32>
    %63 = vector.shape_cast %62 : vector<128x128xf32> to vector<1x128x128xf32>
    %cst_22 = arith.constant dense<0.000000e+00> : vector<1xf32>
    %64 = vector.multi_reduction <add>, %63, %cst_22 [1, 2] : vector<1x128x128xf32> to vector<1xf32>
    %65 = vector.shape_cast %64 : vector<1xf32> to vector<1x1x1xf32>
    %66 = vector.extract %65[0, 0, 0] : f32 from vector<1x1x1xf32>
    %cst_23 = arith.constant -5.000000e-01 : f32
    %67 = arith.mulf %cst_23, %66 : f32
    %cst_24 = arith.constant dense<0.000000e+00> : vector<128x128xf32>
    %68 = tpu.matmul %32, %34, %cst_24 {dimension_numbers = #tpu.dot_dimension_numbers<[0], [0], [1], [1], [0, 1, 1, 1], [], []>} : vector<8x128xbf16>, vector<8x128xbf16>, vector<128x128xf32> -> vector<128x128xf32>
    %cst_25 = arith.constant 1.250000e-01 : f32
    %69 = vector.broadcast %cst_25 : f32 to vector<128x128xf32>
    %70 = arith.mulf %69, %68 : vector<128x128xf32>
    %cst_26 = arith.constant 5.000000e-01 : f32
    %71 = vector.broadcast %cst_26 : f32 to vector<128x128xf32>
    %72 = arith.addf %70, %71 : vector<128x128xf32>
    %73 = arith.select %38, %72, %70 : vector<128x128xi1>, vector<128x128xf32>
    %cst_27 = arith.constant dense<0.000000e+00> : vector<128x128xf32>
    %74 = tpu.matmul %33, %35, %cst_27 {dimension_numbers = #tpu.dot_dimension_numbers<[0], [0], [1], [1], [0, 1, 1, 1], [], []>} : vector<8x128xbf16>, vector<8x128xbf16>, vector<128x128xf32> -> vector<128x128xf32>
    %cst_28 = arith.constant 1.250000e-01 : f32
    %75 = vector.broadcast %cst_28 : f32 to vector<128x128xf32>
    %76 = arith.mulf %75, %74 : vector<128x128xf32>
    %cst_29 = arith.constant -5.000000e-01 : f32
    %77 = vector.broadcast %cst_29 : f32 to vector<128x128xf32>
    %78 = arith.addf %76, %77 : vector<128x128xf32>
    %79 = arith.select %38, %78, %76 : vector<128x128xi1>, vector<128x128xf32>
    %80 = arith.truncf %79 : vector<128x128xf32> to vector<128x128xbf16>
    %81 = arith.truncf %79 : vector<128x128xf32> to vector<128x128xbf16>
    %cst_30 = arith.constant dense<0.000000e+00> : vector<128x128xf32>
    %82 = tpu.matmul %81, %80, %cst_30 {dimension_numbers = #tpu.dot_dimension_numbers<[1], [0], [0], [1], [0, 0, 1, 1], [], []>} : vector<128x128xbf16>, vector<128x128xbf16>, vector<128x128xf32> -> vector<128x128xf32>
    %cst_31 = arith.constant -5.000000e-01 : f32
    %83 = vector.broadcast %cst_31 : f32 to vector<128x128xf32>
    %84 = arith.mulf %83, %82 : vector<128x128xf32>
    %85 = arith.addf %79, %84 : vector<128x128xf32>
    %86 = arith.truncf %82 : vector<128x128xf32> to vector<128x128xbf16>
    %cst_32 = arith.constant dense<0.000000e+00> : vector<128x128xf32>
    %87 = tpu.matmul %86, %80, %cst_32 {dimension_numbers = #tpu.dot_dimension_numbers<[1], [0], [0], [1], [0, 0, 1, 1], [], []>} : vector<128x128xbf16>, vector<128x128xbf16>, vector<128x128xf32> -> vector<128x128xf32>
    %cst_33 = arith.constant 0.333333343 : f32
    %88 = vector.broadcast %cst_33 : f32 to vector<128x128xf32>
    %89 = arith.mulf %88, %87 : vector<128x128xf32>
    %90 = arith.addf %85, %89 : vector<128x128xf32>
    %91 = arith.truncf %87 : vector<128x128xf32> to vector<128x128xbf16>
    %cst_34 = arith.constant dense<0.000000e+00> : vector<128x128xf32>
    %92 = tpu.matmul %91, %80, %cst_34 {dimension_numbers = #tpu.dot_dimension_numbers<[1], [0], [0], [1], [0, 0, 1, 1], [], []>} : vector<128x128xbf16>, vector<128x128xbf16>, vector<128x128xf32> -> vector<128x128xf32>
    %cst_35 = arith.constant -2.500000e-01 : f32
    %93 = vector.broadcast %cst_35 : f32 to vector<128x128xf32>
    %94 = arith.mulf %93, %92 : vector<128x128xf32>
    %95 = arith.addf %90, %94 : vector<128x128xf32>
    %96 = arith.mulf %73, %95 : vector<128x128xf32>
    %97 = vector.shape_cast %96 : vector<128x128xf32> to vector<1x128x128xf32>
    %cst_36 = arith.constant dense<0.000000e+00> : vector<1xf32>
    %98 = vector.multi_reduction <add>, %97, %cst_36 [1, 2] : vector<1x128x128xf32> to vector<1xf32>
    %99 = vector.shape_cast %98 : vector<1xf32> to vector<1x1x1xf32>
    %100 = vector.extract %99[0, 0, 0] : f32 from vector<1x1x1xf32>
    %cst_37 = arith.constant 0.000000e+00 : f32
    %101 = arith.subf %cst_37, %100 : f32
    %102 = tpu.iota {dimensions = array<i32: 1>} : vector<8x128xi32>
    %c0_i32 = arith.constant 0 : i32
    %103 = vector.broadcast %c0_i32 : i32 to vector<8x128xi32>
    %104 = arith.cmpi eq, %102, %103 : vector<8x128xi32>
    %c1_i32 = arith.constant 1 : i32
    %105 = vector.broadcast %c1_i32 : i32 to vector<8x128xi32>
    %106 = arith.cmpi eq, %102, %105 : vector<8x128xi32>
    %cst_38 = arith.constant 0.000000e+00 : f32
    %107 = vector.broadcast %67 : f32 to vector<8x128xf32>
    %108 = vector.broadcast %cst_38 : f32 to vector<8x128xf32>
    %109 = arith.select %106, %107, %108 : vector<8x128xi1>, vector<8x128xf32>
    %110 = vector.broadcast %101 : f32 to vector<8x128xf32>
    %111 = arith.select %104, %110, %109 : vector<8x128xi1>, vector<8x128xf32>
    %c0_39 = arith.constant 0 : index
    %c0_40 = arith.constant 0 : index
    %c0_41 = arith.constant 0 : index
    %112 = vector.load %arg3[%c0_39, %c0_40, %c0_41] : memref<1x8x128xf32, #tpu.memory_space<vmem>>, vector<1x8x128xf32>
    %113 = vector.shape_cast %112 : vector<1x8x128xf32> to vector<8x128xf32>
    %114 = vector.shape_cast %111 : vector<8x128xf32> to vector<1x8x128xf32>
    tpu.vector_store %arg3[%c0_39, %c0_40, %c0_41], %114 {strides = array<i32>} : memref<1x8x128xf32, #tpu.memory_space<vmem>>, vector<1x8x128xf32>,
    return
  }
  func.func @transform_0(%arg0: i32) -> (i32, i32, i32) {
    %c1_i32 = arith.constant 1 : i32
    %0 = arith.subi %c1_i32, %arg0 : i32
    %c0_i32 = arith.constant 0 : i32
    %c0_i32_0 = arith.constant 0 : i32
    %c0_i32_1 = arith.constant 0 : i32
    return %0, %c0_i32, %c0_i32_0 : i32, i32, i32
  }
  func.func @transform_1(%arg0: i32) -> (i32, i32, i32) {
    %c0_i32 = arith.constant 0 : i32
    %c0_i32_0 = arith.constant 0 : i32
    %c0_i32_1 = arith.constant 0 : i32
    return %arg0, %c0_i32, %c0_i32_0 : i32, i32, i32
  }
  func.func @transform_2(%arg0: i32) -> (i32, i32, i32) {
    %c0_i32 = arith.constant 0 : i32
    %c0_i32_0 = arith.constant 0 : i32
    %c0_i32_1 = arith.constant 0 : i32
    return %arg0, %c0_i32, %c0_i32_0 : i32, i32, i32
  }
}

module attributes {stable_mosaic.version = 11 : i64} {
  func.func @_mec_mlp_kernel(%arg0: i32, %arg1: memref<1x8x768xbf16, #tpu.memory_space<vmem>>, %arg2: memref<768x256xbf16, #tpu.memory_space<vmem>>, %arg3: memref<256x256xbf16, #tpu.memory_space<vmem>>, %arg4: memref<256x256xbf16, #tpu.memory_space<vmem>>, %arg5: memref<256x128xbf16, #tpu.memory_space<vmem>>, %arg6: memref<1x128xf32, #tpu.memory_space<vmem>>, %arg7: memref<128x128xbf16, #tpu.memory_space<vmem>>, %arg8: memref<128x128xbf16, #tpu.memory_space<vmem>>, %arg9: memref<1x128xf32, #tpu.memory_space<vmem>>, %arg10: memref<1x8x128xf32, #tpu.memory_space<vmem>>, %arg11: memref<1x8x128xf32, #tpu.memory_space<vmem>>) attributes {dimension_semantics = [#tpu.dimension_semantics<parallel>], iteration_bounds = array<i64: 2>, scalar_prefetch = 0 : i64, scratch_operands = 0 : i64, tpu.core_type = #tpu.core_type<tc>, window_params = [{transform_indices = @transform_0, window_bounds = array<i64: 1, 8, 768>}, {pipeline_mode = #tpu.pipeline_mode<synchronous>, transform_indices = @transform_1, window_bounds = array<i64: 768, 256>}, {pipeline_mode = #tpu.pipeline_mode<synchronous>, transform_indices = @transform_2, window_bounds = array<i64: 256, 256>}, {pipeline_mode = #tpu.pipeline_mode<synchronous>, transform_indices = @transform_3, window_bounds = array<i64: 256, 256>}, {pipeline_mode = #tpu.pipeline_mode<synchronous>, transform_indices = @transform_4, window_bounds = array<i64: 256, 128>}, {pipeline_mode = #tpu.pipeline_mode<synchronous>, transform_indices = @transform_5, window_bounds = array<i64: 1, 128>}, {pipeline_mode = #tpu.pipeline_mode<synchronous>, transform_indices = @transform_6, window_bounds = array<i64: 128, 128>}, {pipeline_mode = #tpu.pipeline_mode<synchronous>, transform_indices = @transform_7, window_bounds = array<i64: 128, 128>}, {pipeline_mode = #tpu.pipeline_mode<synchronous>, transform_indices = @transform_8, window_bounds = array<i64: 1, 128>}, {transform_indices = @transform_9, window_bounds = array<i64: 1, 8, 128>}, {transform_indices = @transform_10, window_bounds = array<i64: 1, 8, 128>}]} {
    %c0 = arith.constant 0 : index
    %c0_0 = arith.constant 0 : index
    %c0_1 = arith.constant 0 : index
    %0 = vector.load %arg1[%c0, %c0_0, %c0_1] : memref<1x8x768xbf16, #tpu.memory_space<vmem>>, vector<1x8x768xbf16>
    %1 = vector.shape_cast %0 : vector<1x8x768xbf16> to vector<8x768xbf16>
    %c0_2 = arith.constant 0 : index
    %c0_3 = arith.constant 0 : index
    %2 = vector.load %arg2[%c0_2, %c0_3] : memref<768x256xbf16, #tpu.memory_space<vmem>>, vector<768x256xbf16>
    %cst = arith.constant dense<0.000000e+00> : vector<8x256xf32>
    %3 = tpu.matmul %1, %2, %cst {dimension_numbers = #tpu.dot_dimension_numbers<[1], [0], [0], [1], [0, 0, 1, 1], [], []>} : vector<8x768xbf16>, vector<768x256xbf16>, vector<8x256xf32> -> vector<8x256xf32>
    %4 = arith.mulf %3, %3 : vector<8x256xf32>
    %cst_4 = arith.constant dense<0.000000e+00> : vector<8xf32>
    %5 = vector.multi_reduction <add>, %4, %cst_4 [1] : vector<8x256xf32> to vector<8xf32>
    %6 = vector.shape_cast %5 : vector<8xf32> to vector<8x1xf32>
    %cst_5 = arith.constant 1.000000e-24 : f32
    %7 = vector.broadcast %cst_5 : f32 to vector<8x1xf32>
    %8 = arith.maximumf %6, %7 : vector<8x1xf32>
    %9 = math.rsqrt %8 : vector<8x1xf32>
    %10 = vector.broadcast %9 : vector<8x1xf32> to vector<8x256xf32>
    %11 = arith.mulf %3, %10 : vector<8x256xf32>
    %12 = arith.truncf %11 : vector<8x256xf32> to vector<8x256xbf16>
    %c0_6 = arith.constant 0 : index
    %c0_7 = arith.constant 0 : index
    %13 = vector.load %arg3[%c0_6, %c0_7] : memref<256x256xbf16, #tpu.memory_space<vmem>>, vector<256x256xbf16>
    %cst_8 = arith.constant dense<0.000000e+00> : vector<8x256xf32>
    %14 = tpu.matmul %12, %13, %cst_8 {dimension_numbers = #tpu.dot_dimension_numbers<[1], [0], [0], [1], [0, 0, 1, 1], [], []>} : vector<8x256xbf16>, vector<256x256xbf16>, vector<8x256xf32> -> vector<8x256xf32>
    %cst_9 = arith.constant dense<0.000000e+00> : vector<256xf32>
    %15 = vector.multi_reduction <add>, %14, %cst_9 [0] : vector<8x256xf32> to vector<256xf32>
    %16 = vector.shape_cast %15 : vector<256xf32> to vector<1x256xf32>
    %cst_10 = arith.constant 8.000000e+00 : f32
    %17 = vector.broadcast %cst_10 : f32 to vector<1x256xf32>
    %18 = arith.divf %16, %17 : vector<1x256xf32>
    %19 = vector.broadcast %18 : vector<1x256xf32> to vector<8x256xf32>
    %20 = arith.subf %14, %19 : vector<8x256xf32>
    %21 = arith.mulf %20, %20 : vector<8x256xf32>
    %cst_11 = arith.constant dense<0.000000e+00> : vector<256xf32>
    %22 = vector.multi_reduction <add>, %21, %cst_11 [0] : vector<8x256xf32> to vector<256xf32>
    %23 = vector.shape_cast %22 : vector<256xf32> to vector<1x256xf32>
    %cst_12 = arith.constant 8.000000e+00 : f32
    %24 = vector.broadcast %cst_12 : f32 to vector<1x256xf32>
    %25 = arith.divf %23, %24 : vector<1x256xf32>
    %26 = vector.broadcast %18 : vector<1x256xf32> to vector<8x256xf32>
    %27 = arith.subf %14, %26 : vector<8x256xf32>
    %cst_13 = arith.constant 9.99999974E-6 : f32
    %28 = vector.broadcast %cst_13 : f32 to vector<1x256xf32>
    %29 = arith.addf %25, %28 : vector<1x256xf32>
    %30 = math.rsqrt %29 : vector<1x256xf32>
    %31 = vector.broadcast %30 : vector<1x256xf32> to vector<8x256xf32>
    %32 = arith.mulf %27, %31 : vector<8x256xf32>
    %cst_14 = arith.constant 0.000000e+00 : f32
    %33 = vector.broadcast %cst_14 : f32 to vector<8x256xf32>
    %34 = arith.maximumf %32, %33 : vector<8x256xf32>
    %35 = arith.truncf %34 : vector<8x256xf32> to vector<8x256xbf16>
    %c0_15 = arith.constant 0 : index
    %c0_16 = arith.constant 0 : index
    %36 = vector.load %arg4[%c0_15, %c0_16] : memref<256x256xbf16, #tpu.memory_space<vmem>>, vector<256x256xbf16>
    %cst_17 = arith.constant dense<0.000000e+00> : vector<8x256xf32>
    %37 = tpu.matmul %35, %36, %cst_17 {dimension_numbers = #tpu.dot_dimension_numbers<[1], [0], [0], [1], [0, 0, 1, 1], [], []>} : vector<8x256xbf16>, vector<256x256xbf16>, vector<8x256xf32> -> vector<8x256xf32>
    %cst_18 = arith.constant dense<0.000000e+00> : vector<256xf32>
    %38 = vector.multi_reduction <add>, %37, %cst_18 [0] : vector<8x256xf32> to vector<256xf32>
    %39 = vector.shape_cast %38 : vector<256xf32> to vector<1x256xf32>
    %cst_19 = arith.constant 8.000000e+00 : f32
    %40 = vector.broadcast %cst_19 : f32 to vector<1x256xf32>
    %41 = arith.divf %39, %40 : vector<1x256xf32>
    %42 = vector.broadcast %41 : vector<1x256xf32> to vector<8x256xf32>
    %43 = arith.subf %37, %42 : vector<8x256xf32>
    %44 = arith.mulf %43, %43 : vector<8x256xf32>
    %cst_20 = arith.constant dense<0.000000e+00> : vector<256xf32>
    %45 = vector.multi_reduction <add>, %44, %cst_20 [0] : vector<8x256xf32> to vector<256xf32>
    %46 = vector.shape_cast %45 : vector<256xf32> to vector<1x256xf32>
    %cst_21 = arith.constant 8.000000e+00 : f32
    %47 = vector.broadcast %cst_21 : f32 to vector<1x256xf32>
    %48 = arith.divf %46, %47 : vector<1x256xf32>
    %49 = vector.broadcast %41 : vector<1x256xf32> to vector<8x256xf32>
    %50 = arith.subf %37, %49 : vector<8x256xf32>
    %cst_22 = arith.constant 9.99999974E-6 : f32
    %51 = vector.broadcast %cst_22 : f32 to vector<1x256xf32>
    %52 = arith.addf %48, %51 : vector<1x256xf32>
    %53 = math.rsqrt %52 : vector<1x256xf32>
    %54 = vector.broadcast %53 : vector<1x256xf32> to vector<8x256xf32>
    %55 = arith.mulf %50, %54 : vector<8x256xf32>
    %cst_23 = arith.constant 0.000000e+00 : f32
    %56 = vector.broadcast %cst_23 : f32 to vector<8x256xf32>
    %57 = arith.maximumf %55, %56 : vector<8x256xf32>
    %58 = arith.truncf %57 : vector<8x256xf32> to vector<8x256xbf16>
    %c0_24 = arith.constant 0 : index
    %c0_25 = arith.constant 0 : index
    %59 = vector.load %arg5[%c0_24, %c0_25] : memref<256x128xbf16, #tpu.memory_space<vmem>>, vector<256x128xbf16>
    %cst_26 = arith.constant dense<0.000000e+00> : vector<8x128xf32>
    %60 = tpu.matmul %58, %59, %cst_26 {dimension_numbers = #tpu.dot_dimension_numbers<[1], [0], [0], [1], [0, 0, 1, 1], [], []>} : vector<8x256xbf16>, vector<256x128xbf16>, vector<8x128xf32> -> vector<8x128xf32>
    %c0_27 = arith.constant 0 : index
    %c0_28 = arith.constant 0 : index
    %61 = vector.load %arg6[%c0_27, %c0_28] : memref<1x128xf32, #tpu.memory_space<vmem>>, vector<1x128xf32>
    %62 = vector.broadcast %61 : vector<1x128xf32> to vector<8x128xf32>
    %63 = arith.addf %60, %62 : vector<8x128xf32>
    %cst_29 = arith.constant dense<0.000000e+00> : vector<128xf32>
    %64 = vector.multi_reduction <add>, %63, %cst_29 [0] : vector<8x128xf32> to vector<128xf32>
    %65 = vector.shape_cast %64 : vector<128xf32> to vector<1x128xf32>
    %cst_30 = arith.constant 8.000000e+00 : f32
    %66 = vector.broadcast %cst_30 : f32 to vector<1x128xf32>
    %67 = arith.divf %65, %66 : vector<1x128xf32>
    %68 = vector.broadcast %67 : vector<1x128xf32> to vector<8x128xf32>
    %69 = arith.subf %63, %68 : vector<8x128xf32>
    %70 = arith.mulf %69, %69 : vector<8x128xf32>
    %cst_31 = arith.constant dense<0.000000e+00> : vector<128xf32>
    %71 = vector.multi_reduction <add>, %70, %cst_31 [0] : vector<8x128xf32> to vector<128xf32>
    %72 = vector.shape_cast %71 : vector<128xf32> to vector<1x128xf32>
    %cst_32 = arith.constant 8.000000e+00 : f32
    %73 = vector.broadcast %cst_32 : f32 to vector<1x128xf32>
    %74 = arith.divf %72, %73 : vector<1x128xf32>
    %75 = vector.broadcast %67 : vector<1x128xf32> to vector<8x128xf32>
    %76 = arith.subf %63, %75 : vector<8x128xf32>
    %cst_33 = arith.constant 9.99999974E-6 : f32
    %77 = vector.broadcast %cst_33 : f32 to vector<1x128xf32>
    %78 = arith.addf %74, %77 : vector<1x128xf32>
    %79 = math.rsqrt %78 : vector<1x128xf32>
    %80 = vector.broadcast %79 : vector<1x128xf32> to vector<8x128xf32>
    %81 = arith.mulf %76, %80 : vector<8x128xf32>
    %c0_34 = arith.constant 0 : index
    %c0_35 = arith.constant 0 : index
    %c0_36 = arith.constant 0 : index
    %82 = vector.load %arg10[%c0_34, %c0_35, %c0_36] : memref<1x8x128xf32, #tpu.memory_space<vmem>>, vector<1x8x128xf32>
    %83 = vector.shape_cast %82 : vector<1x8x128xf32> to vector<8x128xf32>
    %84 = vector.shape_cast %81 : vector<8x128xf32> to vector<1x8x128xf32>
    tpu.vector_store %arg10[%c0_34, %c0_35, %c0_36], %84 {strides = array<i32>} : memref<1x8x128xf32, #tpu.memory_space<vmem>>, vector<1x8x128xf32>,
    %85 = arith.truncf %81 : vector<8x128xf32> to vector<8x128xbf16>
    %c0_37 = arith.constant 0 : index
    %c0_38 = arith.constant 0 : index
    %86 = vector.load %arg7[%c0_37, %c0_38] : memref<128x128xbf16, #tpu.memory_space<vmem>>, vector<128x128xbf16>
    %cst_39 = arith.constant dense<0.000000e+00> : vector<8x128xf32>
    %87 = tpu.matmul %85, %86, %cst_39 {dimension_numbers = #tpu.dot_dimension_numbers<[1], [0], [0], [1], [0, 0, 1, 1], [], []>} : vector<8x128xbf16>, vector<128x128xbf16>, vector<8x128xf32> -> vector<8x128xf32>
    %cst_40 = arith.constant dense<0.000000e+00> : vector<128xf32>
    %88 = vector.multi_reduction <add>, %87, %cst_40 [0] : vector<8x128xf32> to vector<128xf32>
    %89 = vector.shape_cast %88 : vector<128xf32> to vector<1x128xf32>
    %cst_41 = arith.constant 8.000000e+00 : f32
    %90 = vector.broadcast %cst_41 : f32 to vector<1x128xf32>
    %91 = arith.divf %89, %90 : vector<1x128xf32>
    %92 = vector.broadcast %91 : vector<1x128xf32> to vector<8x128xf32>
    %93 = arith.subf %87, %92 : vector<8x128xf32>
    %94 = arith.mulf %93, %93 : vector<8x128xf32>
    %cst_42 = arith.constant dense<0.000000e+00> : vector<128xf32>
    %95 = vector.multi_reduction <add>, %94, %cst_42 [0] : vector<8x128xf32> to vector<128xf32>
    %96 = vector.shape_cast %95 : vector<128xf32> to vector<1x128xf32>
    %cst_43 = arith.constant 8.000000e+00 : f32
    %97 = vector.broadcast %cst_43 : f32 to vector<1x128xf32>
    %98 = arith.divf %96, %97 : vector<1x128xf32>
    %99 = vector.broadcast %91 : vector<1x128xf32> to vector<8x128xf32>
    %100 = arith.subf %87, %99 : vector<8x128xf32>
    %cst_44 = arith.constant 9.99999974E-6 : f32
    %101 = vector.broadcast %cst_44 : f32 to vector<1x128xf32>
    %102 = arith.addf %98, %101 : vector<1x128xf32>
    %103 = math.rsqrt %102 : vector<1x128xf32>
    %104 = vector.broadcast %103 : vector<1x128xf32> to vector<8x128xf32>
    %105 = arith.mulf %100, %104 : vector<8x128xf32>
    %cst_45 = arith.constant 0.000000e+00 : f32
    %106 = vector.broadcast %cst_45 : f32 to vector<8x128xf32>
    %107 = arith.maximumf %105, %106 : vector<8x128xf32>
    %108 = arith.truncf %107 : vector<8x128xf32> to vector<8x128xbf16>
    %c0_46 = arith.constant 0 : index
    %c0_47 = arith.constant 0 : index
    %109 = vector.load %arg8[%c0_46, %c0_47] : memref<128x128xbf16, #tpu.memory_space<vmem>>, vector<128x128xbf16>
    %cst_48 = arith.constant dense<0.000000e+00> : vector<8x128xf32>
    %110 = tpu.matmul %108, %109, %cst_48 {dimension_numbers = #tpu.dot_dimension_numbers<[1], [0], [0], [1], [0, 0, 1, 1], [], []>} : vector<8x128xbf16>, vector<128x128xbf16>, vector<8x128xf32> -> vector<8x128xf32>
    %c0_49 = arith.constant 0 : index
    %c0_50 = arith.constant 0 : index
    %111 = vector.load %arg9[%c0_49, %c0_50] : memref<1x128xf32, #tpu.memory_space<vmem>>, vector<1x128xf32>
    %112 = vector.broadcast %111 : vector<1x128xf32> to vector<8x128xf32>
    %113 = arith.addf %110, %112 : vector<8x128xf32>
    %c0_51 = arith.constant 0 : index
    %c0_52 = arith.constant 0 : index
    %c0_53 = arith.constant 0 : index
    %114 = vector.load %arg11[%c0_51, %c0_52, %c0_53] : memref<1x8x128xf32, #tpu.memory_space<vmem>>, vector<1x8x128xf32>
    %115 = vector.shape_cast %114 : vector<1x8x128xf32> to vector<8x128xf32>
    %116 = vector.shape_cast %113 : vector<8x128xf32> to vector<1x8x128xf32>
    tpu.vector_store %arg11[%c0_51, %c0_52, %c0_53], %116 {strides = array<i32>} : memref<1x8x128xf32, #tpu.memory_space<vmem>>, vector<1x8x128xf32>,
    return
  }
  func.func @transform_0(%arg0: i32) -> (i32, i32, i32) {
    %c0_i32 = arith.constant 0 : i32
    %c0_i32_0 = arith.constant 0 : i32
    %c0_i32_1 = arith.constant 0 : i32
    return %arg0, %c0_i32, %c0_i32_0 : i32, i32, i32
  }
  func.func @transform_1(%arg0: i32) -> (i32, i32) {
    %c0_i32 = arith.constant 0 : i32
    %c0_i32_0 = arith.constant 0 : i32
    %c0_i32_1 = arith.constant 0 : i32
    return %c0_i32, %c0_i32_0 : i32, i32
  }
  func.func @transform_2(%arg0: i32) -> (i32, i32) {
    %c0_i32 = arith.constant 0 : i32
    %c0_i32_0 = arith.constant 0 : i32
    %c0_i32_1 = arith.constant 0 : i32
    return %c0_i32, %c0_i32_0 : i32, i32
  }
  func.func @transform_3(%arg0: i32) -> (i32, i32) {
    %c0_i32 = arith.constant 0 : i32
    %c0_i32_0 = arith.constant 0 : i32
    %c0_i32_1 = arith.constant 0 : i32
    return %c0_i32, %c0_i32_0 : i32, i32
  }
  func.func @transform_4(%arg0: i32) -> (i32, i32) {
    %c0_i32 = arith.constant 0 : i32
    %c0_i32_0 = arith.constant 0 : i32
    %c0_i32_1 = arith.constant 0 : i32
    return %c0_i32, %c0_i32_0 : i32, i32
  }
  func.func @transform_5(%arg0: i32) -> (i32, i32) {
    %c0_i32 = arith.constant 0 : i32
    %c0_i32_0 = arith.constant 0 : i32
    %c0_i32_1 = arith.constant 0 : i32
    return %c0_i32, %c0_i32_0 : i32, i32
  }
  func.func @transform_6(%arg0: i32) -> (i32, i32) {
    %c0_i32 = arith.constant 0 : i32
    %c0_i32_0 = arith.constant 0 : i32
    %c0_i32_1 = arith.constant 0 : i32
    return %c0_i32, %c0_i32_0 : i32, i32
  }
  func.func @transform_7(%arg0: i32) -> (i32, i32) {
    %c0_i32 = arith.constant 0 : i32
    %c0_i32_0 = arith.constant 0 : i32
    %c0_i32_1 = arith.constant 0 : i32
    return %c0_i32, %c0_i32_0 : i32, i32
  }
  func.func @transform_8(%arg0: i32) -> (i32, i32) {
    %c0_i32 = arith.constant 0 : i32
    %c0_i32_0 = arith.constant 0 : i32
    %c0_i32_1 = arith.constant 0 : i32
    return %c0_i32, %c0_i32_0 : i32, i32
  }
  func.func @transform_9(%arg0: i32) -> (i32, i32, i32) {
    %c0_i32 = arith.constant 0 : i32
    %c0_i32_0 = arith.constant 0 : i32
    %c0_i32_1 = arith.constant 0 : i32
    return %arg0, %c0_i32, %c0_i32_0 : i32, i32, i32
  }
  func.func @transform_10(%arg0: i32) -> (i32, i32, i32) {
    %c0_i32 = arith.constant 0 : i32
    %c0_i32_0 = arith.constant 0 : i32
    %c0_i32_1 = arith.constant 0 : i32
    return %arg0, %c0_i32, %c0_i32_0 : i32, i32, i32
  }
}

</mosaic_0001>

<llo_original>
// kernel: mec_forward.3
$region0: #{mec_forward.3}
  #allocation0 [shape = 'u32[]', space=smem, size = 0x4, offset = 0x4, fixed_abs, tag = 'smem constant byte address 0x4 - core index']
  #allocation1 [shape = 'u32[72,128]{1,0:T(1,128)}', space=vmem, size = 0x9000, scoped, tag = 'internal scratch']
  %s0 = inlined_call_operand.vmem [shape: f32[2,8,128], index: 0, kind: input, shape index: {}]
  %s1 = inlined_call_operand.vmem [shape: f32[2,8,128], index: 1, kind: input, shape index: {}]
  %s2 = inlined_call_operand.vmem [shape: f32[2,8,128], index: 2, kind: output, shape index: {}]
  %s3 = sld [smem:[#allocation0]]
  $region41: #{mec_forward.3} parent=0
    _
  %s5 = ssub.s32 1, %s3
  %s6 = scalar_select 0, %s5, %s3
  loop: start=0, step=1, limit=4
  $region2: #{mec_forward.3} parent=0 // loop_pre_header
    _
  $region3: #{mec_forward.3} parent=0 // loop_header
    %s8 = sphi 0, %s12
    %p9 = scmp.ge.s32.totalorder %s8, 4
    %s20 = sphi 0, %s22
    %s23 = sphi 0, %s20
    %s24 = sphi 0, %s23
    %s40 = sphi 0, %s24
    %s46 = sphi 0, %s48
    %s49 = sphi 0, %s46
    %s50 = sphi 0, %s49
    %s66 = sphi 0, %s50
    %s72 = sphi 0, %s74
    %s75 = sphi 0, %s72
    %s76 = sphi 0, %s75
    %s92 = sphi 0, %s76
  $region4: #{mec_forward.3} parent=0 // loop_header_branch
    %11 = sbr.rel (%p9) target = $region8
  $region5: #{mec_forward.3} parent=0 // loop_body
    %s13 = ssub.s32 %s8, 1
    %s14 = ssub.s32 %s8, 2
    %s15 = sadd.s32 %s8, 1
    %s16 = ssub.s32 1, %s8
    %s17 = ssub.s32 1, %s15
    %s18 = ssub.s32 %s16, %s17
    %p19 = scmp.eq.s32.totalorder %s18, 0
    %s21 = sadd.s32 %s20, 1
    %s22 = scalar_select %p19, %s20, %s21
    %p25 = pneg %p19
    %p26 = scmp.eq.s32.totalorder %s8, 1
    %p27 = por %p25, %p26
    %p28 = scmp.ne.s32.totalorder %s20, %s23
    %p29 = scmp.eq.s32.totalorder %s8, 0
    %p30 = por %p28, %p29
    %p31 = scmp.ne.s32.totalorder %s20, %s23
    %p32 = scmp.eq.s32.totalorder %s13, 1
    %p33 = por %p31, %p32
    %p34 = scmp.ne.s32.totalorder %s23, %s24
    %p35 = scmp.eq.s32.totalorder %s13, 0
    %p36 = por %p34, %p35
    %p37 = scmp.ne.s32.totalorder %s23, %s24
    %p38 = scmp.eq.s32.totalorder %s14, 1
    %p39 = por %p37, %p38
    %p41 = scmp.ne.s32.totalorder %s24, %s40
    %p42 = scmp.eq.s32.totalorder %s14, 0
    %p43 = por %p41, %p42
    %s44 = ssub.s32 %s8, %s15
    %p45 = scmp.eq.s32.totalorder %s44, 0
    %s47 = sadd.s32 %s46, 1
    %s48 = scalar_select %p45, %s46, %s47
    %p51 = pneg %p45
    %p52 = scmp.eq.s32.totalorder %s8, 1
    %p53 = por %p51, %p52
    %p54 = scmp.ne.s32.totalorder %s46, %s49
    %p55 = scmp.eq.s32.totalorder %s8, 0
    %p56 = por %p54, %p55
    %p57 = scmp.ne.s32.totalorder %s46, %s49
    %p58 = scmp.eq.s32.totalorder %s13, 1
    %p59 = por %p57, %p58
    %p60 = scmp.ne.s32.totalorder %s49, %s50
    %p61 = scmp.eq.s32.totalorder %s13, 0
    %p62 = por %p60, %p61
    %p63 = scmp.ne.s32.totalorder %s49, %s50
    %p64 = scmp.eq.s32.totalorder %s14, 1
    %p65 = por %p63, %p64
    %p67 = scmp.ne.s32.totalorder %s50, %s66
    %p68 = scmp.eq.s32.totalorder %s14, 0
    %p69 = por %p67, %p68
    %s70 = ssub.s32 %s8, %s15
    %p71 = scmp.eq.s32.totalorder %s70, 0
    %s73 = sadd.s32 %s72, 1
    %s74 = scalar_select %p71, %s72, %s73
    %p77 = pneg %p71
    %p78 = scmp.eq.s32.totalorder %s8, 1
    %p79 = por %p77, %p78
    %p80 = scmp.ne.s32.totalorder %s72, %s75
    %p81 = scmp.eq.s32.totalorder %s8, 0
    %p82 = por %p80, %p81
    %p83 = scmp.ne.s32.totalorder %s72, %s75
    %p84 = scmp.eq.s32.totalorder %s13, 1
    %p85 = por %p83, %p84
    %p86 = scmp.ne.s32.totalorder %s75, %s76
    %p87 = scmp.eq.s32.totalorder %s13, 0
    %p88 = por %p86, %p87
    %p89 = scmp.ne.s32.totalorder %s75, %s76
    %p90 = scmp.eq.s32.totalorder %s14, 1
    %p91 = por %p89, %p90
    %p93 = scmp.ne.s32.totalorder %s76, %s92
    %p94 = scmp.eq.s32.totalorder %s14, 0
    %p95 = por %p93, %p94
    %p96 = scmp.le.s32.totalorder 1, %s8
    %p97 = scmp.lt.s32.totalorder %s8, 3
    %p98 = pnand %p96, %p97
    %p99 = pneg %p98
    // Predicated region
    $region9: #{mec_forward.3} parent=5 // pred_check
      _
    $region10: #{mec_forward.3} parent=5 // pred_check_branch
      %101 = sbr.rel (%p98) target = $region12
    $region11: #{mec_forward.3} parent=5 // pred_region
      %s102 = ssub.s32 %s8, 1
    $region12: #{mec_forward.3} parent=5 // pred_fallthru
      _
    %p103 = scmp.lt.s32.totalorder %s8, 2
    // Predicated region
    $region13: #{mec_forward.3} parent=5 // pred_check
      %p104 = pneg %p103
    $region14: #{mec_forward.3} parent=5 // pred_check_branch
      %106 = sbr.rel (%p104) target = $region16
    $region15: #{mec_forward.3} parent=5 // pred_region
      // Predicated region
      $region17: #{mec_forward.3} parent=15 // pred_check
        %p107 = pneg %p30
      $region18: #{mec_forward.3} parent=15 // pred_check_branch
        %109 = sbr.rel (%p107) target = $region20
      $region19: #{mec_forward.3} parent=15 // pred_region
        %s110 = ssub.s32 1, %s8
        %p111 = scmp.lt.s32.totalorder %s110, 1
        %s112 = scalar_select %p111, %s110, 1
        %s113 = smul.addr %s112, 8
        %s114 = scalar_lea.vmem %s0, %s113
        %s115 = ssub.s32 1, %s8
      $region20: #{mec_forward.3} parent=15 // pred_fallthru
        _
      // Predicated region
      $region21: #{mec_forward.3} parent=15 // pred_check
        %p116 = pneg %p56
      $region22: #{mec_forward.3} parent=15 // pred_check_branch
        %118 = sbr.rel (%p116) target = $region24
      $region23: #{mec_forward.3} parent=15 // pred_region
        %p119 = scmp.lt.s32.totalorder %s8, 1
        %s120 = scalar_select %p119, %s8, 1
        %s121 = smul.addr %s120, 8
        %s122 = scalar_lea.vmem %s1, %s121
      $region24: #{mec_forward.3} parent=15 // pred_fallthru
        _
    $region16: #{mec_forward.3} parent=5 // pred_fallthru
      _
    %p123 = scmp.le.s32.totalorder 1, %s8
    %p124 = scmp.lt.s32.totalorder %s8, 3
    %p125 = pnand %p123, %p124
    %p126 = pneg %p125
    // Predicated region
    $region25: #{mec_forward.3} parent=5 // pred_check
      _
    $region26: #{mec_forward.3} parent=5 // pred_check_branch
      %128 = sbr.rel (%p125) target = $region28
    $region27: #{mec_forward.3} parent=5 // pred_region
      %s129 = ssub.s32 %s8, 1
      %s130 = ssub.s32 1, %s13
      %p131 = scmp.lt.s32.totalorder %s130, 1
      %s132 = scalar_select %p131, %s130, 1
      %s133 = smul.addr %s132, 8
      %s134 = scalar_lea.vmem %s0, %s133
      %p135 = pneg %p36
      %p136 = pneg %p33
      %p137 = scmp.lt.s32.totalorder %s13, 1
      %s138 = scalar_select %p137, %s13, 1
      %s139 = smul.addr %s138, 8
      %s140 = scalar_lea.vmem %s1, %s139
      %p141 = pneg %p62
      %p142 = pneg %p59
      %p143 = pneg %p88
      %p144 = pneg %p85
      %p145 = scmp.lt.s32.totalorder %s13, 1
      %s146 = scalar_select %p145, %s13, 1
      %s147 = smul.addr %s146, 8
      %s148 = scalar_lea.vmem %s2, %s147
      %s149 = ssub.s32 1, %s13
      %p150 = scmp.lt.s32.totalorder %s149, 1
      %s151 = scalar_select %p150, %s149, 1
      %s152 = smul.addr %s151, 8
      %s153 = scalar_lea.vmem %s0, %s152
      %s154 = ssub.s32 1, %s13
      %p155 = scmp.lt.s32.totalorder %s13, 1
      %s156 = scalar_select %p155, %s13, 1
      %s157 = smul.addr %s156, 8
      %s158 = scalar_lea.vmem %s1, %s157
      %p159 = scmp.lt.s32.totalorder %s13, 1
      %s160 = scalar_select %p159, %s13, 1
      %s161 = smul.addr %s160, 8
      %s162 = scalar_lea.vmem %s2, %s161
      %v164 = vld [vmem:[%s153] sm:$0xff]
      %v165 = vld [vmem:[%s158] sm:$0xff]
      %v166 = vmul.f32 %v164, %v164
      %167 = vadd.xlane.f32.xlu0 %v166
      %v168 = vpop.xlane.xlu0 %167
      %v169 = vmax.f32 %v168, 1e-24
      %v170 = vrsqrt.pop %v169
      %v171 = vmul.f32 %v170, %v169
      %v172 = vmul.f32 %v171, %v170
      %v173 = vmul.f32 0.5, %v172
      %v174 = vsub.f32 1.5, %v173
      %v175 = vmul.f32 %v170, %v174
      %vm176 = vweird.f32 %v169
      %vm177 = vweird.f32 %v170
      %vm178 = vmor %vm176, %vm177
      %v179 = vsel %vm178, %v170, %v175
      %v180 = vmul.f32 %v164, %v179
      %v181 = vmul.f32 %v165, %v165
      %182 = vadd.xlane.f32.xlu0 %v181
      %v183 = vpop.xlane.xlu0 %182
      %v184 = vmax.f32 %v183, 1e-24
      %v185 = vrsqrt.pop %v184
      %v186 = vmul.f32 %v185, %v184
      %v187 = vmul.f32 %v186, %v185
      %v188 = vmul.f32 0.5, %v187
      %v189 = vsub.f32 1.5, %v188
      %v190 = vmul.f32 %v185, %v189
      %vm191 = vweird.f32 %v184
      %vm192 = vweird.f32 %v185
      %vm193 = vmor %vm191, %vm192
      %v194 = vsel %vm193, %v185, %v190
      %v195 = vmul.f32 %v165, %v194
      %v196 = vrot.slane %v180, 4
      %v197 = vadd.f32 %v180, %v196
      %v198 = vrot.slane %v197, 2
      %v199 = vadd.f32 %v197, %v198
      %v200 = vrot.slane %v199, 1
      %v201 = vadd.f32 %v199, %v200
      %v202 = vrcp.pop 8.0
      %v203 = vmul.f32 8.0, %v202
      %v204 = vsub.f32 1.0, %v203
      %v205 = vmul.f32 %v202, %v204
      %v206 = vadd.f32 %v202, %v205
      %vm207 = vweird.f32 %v202
      %v208 = vsel %vm207, %v202, %v206
      %v209 = vmul.f32 %v201, %v208
      %v210 = vsub.f32 %v180, %v209
      %v211 = vrot.slane %v195, 4
      %v212 = vadd.f32 %v195, %v211
      %v213 = vrot.slane %v212, 2
      %v214 = vadd.f32 %v212, %v213
      %v215 = vrot.slane %v214, 1
      %v216 = vadd.f32 %v214, %v215
      %v217 = vmul.f32 %v216, %v208
      %v218 = vsub.f32 %v195, %v217
      %v219 = vpack.c.bf16 %v180, %v180
      %v220 = vpack.c.bf16 %v195, %v195
      %v221 = vpack.c.bf16 %v210, %v210
      %v222 = vpack.c.bf16 %v218, %v218
      %v223 = vlaneseq
      %v224 = vshrl.u32 %v223, 7
      %v225 = vadd.s32 %v224, 8
      %v226 = vadd.s32 %v224, 16
      %v227 = vadd.s32 %v224, 24
      %v228 = vadd.s32 %v224, 32
      %v229 = vadd.s32 %v224, 40
      %v230 = vadd.s32 %v224, 48
      %v231 = vadd.s32 %v224, 56
      %v232 = vadd.s32 %v224, 64
      %v233 = vadd.s32 %v224, 72
      %v234 = vadd.s32 %v224, 80
      %v235 = vadd.s32 %v224, 88
      %v236 = vadd.s32 %v224, 96
      %v237 = vadd.s32 %v224, 104
      %v238 = vadd.s32 %v224, 112
      %v239 = vadd.s32 %v224, 120
      %v240 = vlaneseq
      %v241 = vand.u32 %v240, 127
      %vm242 = vcmp.eq.s32.totalorder %v224, %v241
      %vm243 = vcmp.eq.s32.totalorder %v225, %v241
      %vm244 = vcmp.eq.s32.totalorder %v226, %v241
      %vm245 = vcmp.eq.s32.totalorder %v227, %v241
      %vm246 = vcmp.eq.s32.totalorder %v228, %v241
      %vm247 = vcmp.eq.s32.totalorder %v229, %v241
      %vm248 = vcmp.eq.s32.totalorder %v230, %v241
      %vm249 = vcmp.eq.s32.totalorder %v231, %v241
      %vm250 = vcmp.eq.s32.totalorder %v232, %v241
      %vm251 = vcmp.eq.s32.totalorder %v233, %v241
      %vm252 = vcmp.eq.s32.totalorder %v234, %v241
      %vm253 = vcmp.eq.s32.totalorder %v235, %v241
      %vm254 = vcmp.eq.s32.totalorder %v236, %v241
      %vm255 = vcmp.eq.s32.totalorder %v237, %v241
      %vm256 = vcmp.eq.s32.totalorder %v238, %v241
      %vm257 = vcmp.eq.s32.totalorder %v239, %v241
      %258 = vxpose.xlu0.c.b16.start [1/8] %v219, 128
      %259 = vxpose.xlu0.c.b16.cont [2/8] 0, 128
      %260 = vxpose.xlu0.c.b16.cont [3/8] 0, 128
      %261 = vxpose.xlu0.c.b16.cont [4/8] 0, 128
      %262 = vxpose.xlu0.c.b16.cont [5/8] 0, 128
      %263 = vxpose.xlu0.c.b16.cont [6/8] 0, 128
      %264 = vxpose.xlu0.c.b16.cont [7/8] 0, 128
      %265 = vxpose.xlu0.c.b16.end [8/8] 0, 128
      %v266 = vpop.trf.xlu0
      %v267 = vpop.trf.xlu0
      %v268 = vpop.trf.xlu0
      %v269 = vpop.trf.xlu0
      %v270 = vpop.trf.xlu0
      %v271 = vpop.trf.xlu0
      %v272 = vpop.trf.xlu0
      %v273 = vpop.trf.xlu0
      %vm274 = vcmask 64512
      %v276 = vsel %vm274, %v266, 0
      %v279 = vsel %vm274, %v267, 0
      %v282 = vsel %vm274, %v268, 0
      %v285 = vsel %vm274, %v269, 0
      %v288 = vsel %vm274, %v270, 0
      %v291 = vsel %vm274, %v271, 0
      %v294 = vsel %vm274, %v272, 0
      %v297 = vsel %vm274, %v273, 0
      %vm299 = vcmask 1043456
      %v301 = vsel %vm299, %v222, 0
      %303 = vmatpush.bf16.msra.mxu0 0
      %304 = vmatpush.bf16.msra.mxu0 0
      %305 = vmatpush.bf16.msra.mxu0 0
      %306 = vmatpush.bf16.msra.mxu0 0
      %307 = vmatpush.bf16.msra.mxu0 0
      %308 = vmatpush.bf16.msra.mxu0 0
      %309 = vmatpush.bf16.msra.mxu0 0
      %310 = vmatpush.bf16.msra.mxu0 %v301
      %311 = vmatmul.bf16.gmra.mxu0 %v276
      %v312 = vpop.f32.mrf.mxu0
      %v313 = vadd.f32 0.0, %v312
      %v314 = vpop.f32.mrf.mxu0
      %v315 = vadd.f32 0.0, %v314
      %316 = vmatmul.bf16.gmra.mxu0 %v279
      %v317 = vpop.f32.mrf.mxu0
      %v318 = vadd.f32 0.0, %v317
      %v319 = vpop.f32.mrf.mxu0
      %v320 = vadd.f32 0.0, %v319
      %321 = vmatmul.bf16.gmra.mxu0 %v282
      %v322 = vpop.f32.mrf.mxu0
      %v323 = vadd.f32 0.0, %v322
      %v324 = vpop.f32.mrf.mxu0
      %v325 = vadd.f32 0.0, %v324
      %326 = vmatmul.bf16.gmra.mxu0 %v285
      %v327 = vpop.f32.mrf.mxu0
      %v328 = vadd.f32 0.0, %v327
      %v329 = vpop.f32.mrf.mxu0
      %v330 = vadd.f32 0.0, %v329
      %331 = vmatmul.bf16.gmra.mxu0 %v288
      %v332 = vpop.f32.mrf.mxu0
      %v333 = vadd.f32 0.0, %v332
      %v334 = vpop.f32.mrf.mxu0
      %v335 = vadd.f32 0.0, %v334
      %336 = vmatmul.bf16.gmra.mxu0 %v291
      %v337 = vpop.f32.mrf.mxu0
      %v338 = vadd.f32 0.0, %v337
      %v339 = vpop.f32.mrf.mxu0
      %v340 = vadd.f32 0.0, %v339
      %341 = vmatmul.bf16.gmra.mxu0 %v294
      %v342 = vpop.f32.mrf.mxu0
      %v343 = vadd.f32 0.0, %v342
      %v344 = vpop.f32.mrf.mxu0
      %v345 = vadd.f32 0.0, %v344
      %346 = vmatmul.bf16.gmra.mxu0 %v297
      %v347 = vpop.f32.mrf.mxu0
      %v348 = vadd.f32 0.0, %v347
      %v349 = vpop.f32.mrf.mxu0
      %v350 = vadd.f32 0.0, %v349
      %351 = vdwg.mxu0
      %v352 = vmul.f32 %v313, 0.125
      %v353 = vmul.f32 %v315, 0.125
      %v354 = vmul.f32 %v318, 0.125
      %v355 = vmul.f32 %v320, 0.125
      %v356 = vmul.f32 %v323, 0.125
      %v357 = vmul.f32 %v325, 0.125
      %v358 = vmul.f32 %v328, 0.125
      %v359 = vmul.f32 %v330, 0.125
      %v360 = vmul.f32 %v333, 0.125
      %v361 = vmul.f32 %v335, 0.125
      %v362 = vmul.f32 %v338, 0.125
      %v363 = vmul.f32 %v340, 0.125
      %v364 = vmul.f32 %v343, 0.125
      %v365 = vmul.f32 %v345, 0.125
      %v366 = vmul.f32 %v348, 0.125
      %v367 = vmul.f32 %v350, 0.125
      %v368 = vadd.f32 %v352, -0.5
      %v369 = vadd.f32 %v353, -0.5
      %v370 = vadd.f32 %v354, -0.5
      %v371 = vadd.f32 %v355, -0.5
      %v372 = vadd.f32 %v356, -0.5
      %v373 = vadd.f32 %v357, -0.5
      %v374 = vadd.f32 %v358, -0.5
      %v375 = vadd.f32 %v359, -0.5
      %v376 = vadd.f32 %v360, -0.5
      %v377 = vadd.f32 %v361, -0.5
      %v378 = vadd.f32 %v362, -0.5
      %v379 = vadd.f32 %v363, -0.5
      %v380 = vadd.f32 %v364, -0.5
      %v381 = vadd.f32 %v365, -0.5
      %v382 = vadd.f32 %v366, -0.5
      %v383 = vadd.f32 %v367, -0.5
      %v384 = vsel %vm242, %v368, %v352
      %v385 = vsel %vm243, %v369, %v353
      %v386 = vsel %vm244, %v370, %v354
      %v387 = vsel %vm245, %v371, %v355
      %v388 = vsel %vm246, %v372, %v356
      %v389 = vsel %vm247, %v373, %v357
      %v390 = vsel %vm248, %v374, %v358
      %v391 = vsel %vm249, %v375, %v359
      %v392 = vsel %vm250, %v376, %v360
      %v393 = vsel %vm251, %v377, %v361
      %v394 = vsel %vm252, %v378, %v362
      %v395 = vsel %vm253, %v379, %v363
      %v396 = vsel %vm254, %v380, %v364
      %v397 = vsel %vm255, %v381, %v365
      %v398 = vsel %vm256, %v382, %v366
      %v399 = vsel %vm257, %v383, %v367
      %v400 = vpack.c.bf16 %v385, %v384
      %v401 = vpack.c.bf16 %v387, %v386
      %v402 = vpack.c.bf16 %v389, %v388
      %v403 = vpack.c.bf16 %v391, %v390
      %v404 = vpack.c.bf16 %v393, %v392
      %v405 = vpack.c.bf16 %v395, %v394
      %v406 = vpack.c.bf16 %v397, %v396
      %v407 = vpack.c.bf16 %v399, %v398
      %408 = vmatpush.bf16.msra.mxu0 %v407
      %409 = vmatpush.bf16.msra.mxu0 %v406
      %410 = vmatpush.bf16.msra.mxu0 %v405
      %411 = vmatpush.bf16.msra.mxu0 %v404
      %412 = vmatpush.bf16.msra.mxu0 %v403
      %413 = vmatpush.bf16.msra.mxu0 %v402
      %414 = vmatpush.bf16.msra.mxu0 %v401
      %415 = vmatpush.bf16.msra.mxu0 %v400
      %416 = vmatmul.bf16.gmra.mxu0 %v400
      %v417 = vpop.f32.mrf.mxu0
      %v418 = vadd.f32 0.0, %v417
      %v419 = vpop.f32.mrf.mxu0
      %v420 = vadd.f32 0.0, %v419
      %421 = vmatmul.bf16.gmra.mxu0 %v401
      %v422 = vpop.f32.mrf.mxu0
      %v423 = vadd.f32 0.0, %v422
      %v424 = vpop.f32.mrf.mxu0
      %v425 = vadd.f32 0.0, %v424
      %426 = vmatmul.bf16.gmra.mxu0 %v402
      %v427 = vpop.f32.mrf.mxu0
      %v428 = vadd.f32 0.0, %v427
      %v429 = vpop.f32.mrf.mxu0
      %v430 = vadd.f32 0.0, %v429
      %431 = vmatmul.bf16.gmra.mxu0 %v403
      %v432 = vpop.f32.mrf.mxu0
      %v433 = vadd.f32 0.0, %v432
      %v434 = vpop.f32.mrf.mxu0
      %v435 = vadd.f32 0.0, %v434
      %436 = vmatmul.bf16.gmra.mxu0 %v404
      %v437 = vpop.f32.mrf.mxu0
      %v438 = vadd.f32 0.0, %v437
      %v439 = vpop.f32.mrf.mxu0
      %v440 = vadd.f32 0.0, %v439
      %441 = vmatmul.bf16.gmra.mxu0 %v405
      %v442 = vpop.f32.mrf.mxu0
      %v443 = vadd.f32 0.0, %v442
      %v444 = vpop.f32.mrf.mxu0
      %v445 = vadd.f32 0.0, %v444
      %446 = vmatmul.bf16.gmra.mxu0 %v406
      %v447 = vpop.f32.mrf.mxu0
      %v448 = vadd.f32 0.0, %v447
      %v449 = vpop.f32.mrf.mxu0
      %v450 = vadd.f32 0.0, %v449
      %451 = vmatmul.bf16.gmra.mxu0 %v407
      %v452 = vpop.f32.mrf.mxu0
      %v453 = vadd.f32 0.0, %v452
      %v454 = vpop.f32.mrf.mxu0
      %v455 = vadd.f32 0.0, %v454
      %456 = vdwg.mxu0
      %v457 = vmul.f32 %v418, -0.5
      %v458 = vmul.f32 %v420, -0.5
      %v459 = vmul.f32 %v423, -0.5
      %v460 = vmul.f32 %v425, -0.5
      %v461 = vmul.f32 %v428, -0.5
      %v462 = vmul.f32 %v430, -0.5
      %v463 = vmul.f32 %v433, -0.5
      %v464 = vmul.f32 %v435, -0.5
      %v465 = vmul.f32 %v438, -0.5
      %v466 = vmul.f32 %v440, -0.5
      %v467 = vmul.f32 %v443, -0.5
      %v468 = vmul.f32 %v445, -0.5
      %v469 = vmul.f32 %v448, -0.5
      %v470 = vmul.f32 %v450, -0.5
      %v471 = vmul.f32 %v453, -0.5
      %v472 = vmul.f32 %v455, -0.5
      %v473 = vadd.f32 %v384, %v457
      %v474 = vadd.f32 %v385, %v458
      %v475 = vadd.f32 %v386, %v459
      %v476 = vadd.f32 %v387, %v460
      %v477 = vadd.f32 %v388, %v461
      %v478 = vadd.f32 %v389, %v462
      %v479 = vadd.f32 %v390, %v463
      %v480 = vadd.f32 %v391, %v464
      %v481 = vadd.f32 %v392, %v465
      %v482 = vadd.f32 %v393, %v466
      %v483 = vadd.f32 %v394, %v467
      %v484 = vadd.f32 %v395, %v468
      %v485 = vadd.f32 %v396, %v469
      %v486 = vadd.f32 %v397, %v470
      %v487 = vadd.f32 %v398, %v471
      %v488 = vadd.f32 %v399, %v472
      %v489 = vpack.c.bf16 %v420, %v418
      %v490 = vpack.c.bf16 %v425, %v423
      %v491 = vpack.c.bf16 %v430, %v428
      %v492 = vpack.c.bf16 %v435, %v433
      %v493 = vpack.c.bf16 %v440, %v438
      %v494 = vpack.c.bf16 %v445, %v443
      %v495 = vpack.c.bf16 %v450, %v448
      %v496 = vpack.c.bf16 %v455, %v453
      %497 = vmatpush.bf16.msra.mxu0 %v407
      %498 = vmatpush.bf16.msra.mxu0 %v406
      %499 = vmatpush.bf16.msra.mxu0 %v405
      %500 = vmatpush.bf16.msra.mxu0 %v404
      %501 = vmatpush.bf16.msra.mxu0 %v403
      %502 = vmatpush.bf16.msra.mxu0 %v402
      %503 = vmatpush.bf16.msra.mxu0 %v401
      %504 = vmatpush.bf16.msra.mxu0 %v400
      %505 = vmatmul.bf16.gmra.mxu0 %v489
      %v506 = vpop.f32.mrf.mxu0
      %v507 = vadd.f32 0.0, %v506
      %v508 = vpop.f32.mrf.mxu0
      %v509 = vadd.f32 0.0, %v508
      %510 = vmatmul.bf16.gmra.mxu0 %v490
      %v511 = vpop.f32.mrf.mxu0
      %v512 = vadd.f32 0.0, %v511
      %v513 = vpop.f32.mrf.mxu0
      %v514 = vadd.f32 0.0, %v513
      %515 = vmatmul.bf16.gmra.mxu0 %v491
      %v516 = vpop.f32.mrf.mxu0
      %v517 = vadd.f32 0.0, %v516
      %v518 = vpop.f32.mrf.mxu0
      %v519 = vadd.f32 0.0, %v518
      %520 = vmatmul.bf16.gmra.mxu0 %v492
      %v521 = vpop.f32.mrf.mxu0
      %v522 = vadd.f32 0.0, %v521
      %v523 = vpop.f32.mrf.mxu0
      %v524 = vadd.f32 0.0, %v523
      %525 = vmatmul.bf16.gmra.mxu0 %v493
      %v526 = vpop.f32.mrf.mxu0
      %v527 = vadd.f32 0.0, %v526
      %v528 = vpop.f32.mrf.mxu0
      %v529 = vadd.f32 0.0, %v528
      %530 = vmatmul.bf16.gmra.mxu0 %v494
      %v531 = vpop.f32.mrf.mxu0
      %v532 = vadd.f32 0.0, %v531
      %v533 = vpop.f32.mrf.mxu0
      %v534 = vadd.f32 0.0, %v533
      %535 = vmatmul.bf16.gmra.mxu0 %v495
      %v536 = vpop.f32.mrf.mxu0
      %v537 = vadd.f32 0.0, %v536
      %v538 = vpop.f32.mrf.mxu0
      %v539 = vadd.f32 0.0, %v538
      %540 = vmatmul.bf16.gmra.mxu0 %v496
      %v541 = vpop.f32.mrf.mxu0
      %v542 = vadd.f32 0.0, %v541
      %v543 = vpop.f32.mrf.mxu0
      %v544 = vadd.f32 0.0, %v543
      %545 = vdwg.mxu0
      %v546 = vmul.f32 %v507, 0.33333334
      %v547 = vmul.f32 %v509, 0.33333334
      %v548 = vmul.f32 %v512, 0.33333334
      %v549 = vmul.f32 %v514, 0.33333334
      %v550 = vmul.f32 %v517, 0.33333334
      %v551 = vmul.f32 %v519, 0.33333334
      %v552 = vmul.f32 %v522, 0.33333334
      %v553 = vmul.f32 %v524, 0.33333334
      %v554 = vmul.f32 %v527, 0.33333334
      %v555 = vmul.f32 %v529, 0.33333334
      %v556 = vmul.f32 %v532, 0.33333334
      %v557 = vmul.f32 %v534, 0.33333334
      %v558 = vmul.f32 %v537, 0.33333334
      %v559 = vmul.f32 %v539, 0.33333334
      %v560 = vmul.f32 %v542, 0.33333334
      %v561 = vmul.f32 %v544, 0.33333334
      %v562 = vadd.f32 %v473, %v546
      %v563 = vadd.f32 %v474, %v547
      %v564 = vadd.f32 %v475, %v548
      %v565 = vadd.f32 %v476, %v549
      %v566 = vadd.f32 %v477, %v550
      %v567 = vadd.f32 %v478, %v551
      %v568 = vadd.f32 %v479, %v552
      %v569 = vadd.f32 %v480, %v553
      %v570 = vadd.f32 %v481, %v554
      %v571 = vadd.f32 %v482, %v555
      %v572 = vadd.f32 %v483, %v556
      %v573 = vadd.f32 %v484, %v557
      %v574 = vadd.f32 %v485, %v558
      %v575 = vadd.f32 %v486, %v559
      %v576 = vadd.f32 %v487, %v560
      %v577 = vadd.f32 %v488, %v561
      %v578 = vpack.c.bf16 %v509, %v507
      %v579 = vpack.c.bf16 %v514, %v512
      %v580 = vpack.c.bf16 %v519, %v517
      %v581 = vpack.c.bf16 %v524, %v522
      %v582 = vpack.c.bf16 %v529, %v527
      %v583 = vpack.c.bf16 %v534, %v532
      %v584 = vpack.c.bf16 %v539, %v537
      %v585 = vpack.c.bf16 %v544, %v542
      %586 = vmatpush.bf16.msra.mxu0 %v407
      %587 = vmatpush.bf16.msra.mxu0 %v406
      %588 = vmatpush.bf16.msra.mxu0 %v405
      %589 = vmatpush.bf16.msra.mxu0 %v404
      %590 = vmatpush.bf16.msra.mxu0 %v403
      %591 = vmatpush.bf16.msra.mxu0 %v402
      %592 = vmatpush.bf16.msra.mxu0 %v401
      %593 = vmatpush.bf16.msra.mxu0 %v400
      %594 = vmatmul.bf16.gmra.mxu0 %v578
      %v595 = vpop.f32.mrf.mxu0
      %v596 = vadd.f32 0.0, %v595
      %v597 = vpop.f32.mrf.mxu0
      %v598 = vadd.f32 0.0, %v597
      %599 = vmatmul.bf16.gmra.mxu0 %v579
      %v600 = vpop.f32.mrf.mxu0
      %v601 = vadd.f32 0.0, %v600
      %v602 = vpop.f32.mrf.mxu0
      %v603 = vadd.f32 0.0, %v602
      %604 = vmatmul.bf16.gmra.mxu0 %v580
      %v605 = vpop.f32.mrf.mxu0
      %v606 = vadd.f32 0.0, %v605
      %v607 = vpop.f32.mrf.mxu0
      %v608 = vadd.f32 0.0, %v607
      %609 = vmatmul.bf16.gmra.mxu0 %v581
      %v610 = vpop.f32.mrf.mxu0
      %v611 = vadd.f32 0.0, %v610
      %v612 = vpop.f32.mrf.mxu0
      %v613 = vadd.f32 0.0, %v612
      %614 = vmatmul.bf16.gmra.mxu0 %v582
      %v615 = vpop.f32.mrf.mxu0
      %v616 = vadd.f32 0.0, %v615
      %v617 = vpop.f32.mrf.mxu0
      %v618 = vadd.f32 0.0, %v617
      %619 = vmatmul.bf16.gmra.mxu0 %v583
      %v620 = vpop.f32.mrf.mxu0
      %v621 = vadd.f32 0.0, %v620
      %v622 = vpop.f32.mrf.mxu0
      %v623 = vadd.f32 0.0, %v622
      %624 = vmatmul.bf16.gmra.mxu0 %v584
      %v625 = vpop.f32.mrf.mxu0
      %v626 = vadd.f32 0.0, %v625
      %v627 = vpop.f32.mrf.mxu0
      %v628 = vadd.f32 0.0, %v627
      %629 = vmatmul.bf16.gmra.mxu0 %v585
      %v630 = vpop.f32.mrf.mxu0
      %v631 = vadd.f32 0.0, %v630
      %v632 = vpop.f32.mrf.mxu0
      %v633 = vadd.f32 0.0, %v632
      %634 = vdwg.mxu0
      %v635 = vmul.f32 %v596, -0.25
      %v636 = vmul.f32 %v598, -0.25
      %v637 = vmul.f32 %v601, -0.25
      %v638 = vmul.f32 %v603, -0.25
      %v639 = vmul.f32 %v606, -0.25
      %v640 = vmul.f32 %v608, -0.25
      %v641 = vmul.f32 %v611, -0.25
      %v642 = vmul.f32 %v613, -0.25
      %v643 = vmul.f32 %v616, -0.25
      %v644 = vmul.f32 %v618, -0.25
      %v645 = vmul.f32 %v621, -0.25
      %v646 = vmul.f32 %v623, -0.25
      %v647 = vmul.f32 %v626, -0.25
      %v648 = vmul.f32 %v628, -0.25
      %v649 = vmul.f32 %v631, -0.25
      %v650 = vmul.f32 %v633, -0.25
      %v651 = vadd.f32 %v562, %v635
      %v652 = vadd.f32 %v563, %v636
      %v653 = vadd.f32 %v564, %v637
      %v654 = vadd.f32 %v565, %v638
      %v655 = vadd.f32 %v566, %v639
      %v656 = vadd.f32 %v567, %v640
      %v657 = vadd.f32 %v568, %v641
      %v658 = vadd.f32 %v569, %v642
      %v659 = vadd.f32 %v570, %v643
      %v660 = vadd.f32 %v571, %v644
      %v661 = vadd.f32 %v572, %v645
      %v662 = vadd.f32 %v573, %v646
      %v663 = vadd.f32 %v574, %v647
      %v664 = vadd.f32 %v575, %v648
      %v665 = vadd.f32 %v576, %v649
      %v666 = vadd.f32 %v577, %v650
      %v667 = vsel %vm242, %v651, 0.0
      %v668 = vsel %vm243, %v652, 0.0
      %v669 = vsel %vm244, %v653, 0.0
      %v670 = vsel %vm245, %v654, 0.0
      %v671 = vsel %vm246, %v655, 0.0
      %v672 = vsel %vm247, %v656, 0.0
      %v673 = vsel %vm248, %v657, 0.0
      %v674 = vsel %vm249, %v658, 0.0
      %v675 = vsel %vm250, %v659, 0.0
      %v676 = vsel %vm251, %v660, 0.0
      %v677 = vsel %vm252, %v661, 0.0
      %v678 = vsel %vm253, %v662, 0.0
      %v679 = vsel %vm254, %v663, 0.0
      %v680 = vsel %vm255, %v664, 0.0
      %v681 = vsel %vm256, %v665, 0.0
      %v682 = vsel %vm257, %v666, 0.0
      %v683 = vadd.f32 %v667, %v668
      %v684 = vadd.f32 %v683, %v669
      %v685 = vadd.f32 %v684, %v670
      %v686 = vadd.f32 %v685, %v671
      %v687 = vadd.f32 %v686, %v672
      %v688 = vadd.f32 %v687, %v673
      %v689 = vadd.f32 %v688, %v674
      %v690 = vadd.f32 %v689, %v675
      %v691 = vadd.f32 %v690, %v676
      %v692 = vadd.f32 %v691, %v677
      %v693 = vadd.f32 %v692, %v678
      %v694 = vadd.f32 %v693, %v679
      %v695 = vadd.f32 %v694, %v680
      %v696 = vadd.f32 %v695, %v681
      %v697 = vadd.f32 %v696, %v682
      %698 = vadd.xlane.f32.xlu0 %v697
      %v699 = vpop.xlane.xlu0 %698
      %v700 = vrot.slane %v699, 4
      %v701 = vadd.f32 %v699, %v700
      %v702 = vrot.slane %v701, 2
      %v703 = vadd.f32 %v701, %v702
      %v704 = vrot.slane %v703, 1
      %v705 = vadd.f32 %v703, %v704
      %s706 = vtos %v705
      %s707 = smul.f32 %s706, -0.5
      %v709 = vsel %vm299, %v221, 0
      %711 = vmatpush.bf16.msra.mxu0 0
      %712 = vmatpush.bf16.msra.mxu0 0
      %713 = vmatpush.bf16.msra.mxu0 0
      %714 = vmatpush.bf16.msra.mxu0 0
      %715 = vmatpush.bf16.msra.mxu0 0
      %716 = vmatpush.bf16.msra.mxu0 0
      %717 = vmatpush.bf16.msra.mxu0 0
      %718 = vmatpush.bf16.msra.mxu0 %v709
      %719 = vmatmul.bf16.gmra.mxu0 %v276
      %v720 = vpop.f32.mrf.mxu0
      %v721 = vadd.f32 0.0, %v720
      %v722 = vpop.f32.mrf.mxu0
      %v723 = vadd.f32 0.0, %v722
      %724 = vmatmul.bf16.gmra.mxu0 %v279
      %v725 = vpop.f32.mrf.mxu0
      %v726 = vadd.f32 0.0, %v725
      %v727 = vpop.f32.mrf.mxu0
      %v728 = vadd.f32 0.0, %v727
      %729 = vmatmul.bf16.gmra.mxu0 %v282
      %v730 = vpop.f32.mrf.mxu0
      %v731 = vadd.f32 0.0, %v730
      %v732 = vpop.f32.mrf.mxu0
      %v733 = vadd.f32 0.0, %v732
      %734 = vmatmul.bf16.gmra.mxu0 %v285
      %v735 = vpop.f32.mrf.mxu0
      %v736 = vadd.f32 0.0, %v735
      %v737 = vpop.f32.mrf.mxu0
      %v738 = vadd.f32 0.0, %v737
      %739 = vmatmul.bf16.gmra.mxu0 %v288
      %v740 = vpop.f32.mrf.mxu0
      %v741 = vadd.f32 0.0, %v740
      %v742 = vpop.f32.mrf.mxu0
      %v743 = vadd.f32 0.0, %v742
      %744 = vmatmul.bf16.gmra.mxu0 %v291
      %v745 = vpop.f32.mrf.mxu0
      %v746 = vadd.f32 0.0, %v745
      %v747 = vpop.f32.mrf.mxu0
      %v748 = vadd.f32 0.0, %v747
      %749 = vmatmul.bf16.gmra.mxu0 %v294
      %v750 = vpop.f32.mrf.mxu0
      %v751 = vadd.f32 0.0, %v750
      %v752 = vpop.f32.mrf.mxu0
      %v753 = vadd.f32 0.0, %v752
      %754 = vmatmul.bf16.gmra.mxu0 %v297
      %v755 = vpop.f32.mrf.mxu0
      %v756 = vadd.f32 0.0, %v755
      %v757 = vpop.f32.mrf.mxu0
      %v758 = vadd.f32 0.0, %v757
      %759 = vdwg.mxu0
      %v760 = vmul.f32 %v721, 0.125
      %v761 = vmul.f32 %v723, 0.125
      %v762 = vmul.f32 %v726, 0.125
      %v763 = vmul.f32 %v728, 0.125
      %v764 = vmul.f32 %v731, 0.125
      %v765 = vmul.f32 %v733, 0.125
      %v766 = vmul.f32 %v736, 0.125
      %v767 = vmul.f32 %v738, 0.125
      %v768 = vmul.f32 %v741, 0.125
      %v769 = vmul.f32 %v743, 0.125
      %v770 = vmul.f32 %v746, 0.125
      %v771 = vmul.f32 %v748, 0.125
      %v772 = vmul.f32 %v751, 0.125
      %v773 = vmul.f32 %v753, 0.125
      %v774 = vmul.f32 %v756, 0.125
      %v775 = vmul.f32 %v758, 0.125
      %v776 = vadd.f32 %v760, 0.5
      %v777 = vadd.f32 %v761, 0.5
      %v778 = vadd.f32 %v762, 0.5
      %v779 = vadd.f32 %v763, 0.5
      %v780 = vadd.f32 %v764, 0.5
      %v781 = vadd.f32 %v765, 0.5
      %v782 = vadd.f32 %v766, 0.5
      %v783 = vadd.f32 %v767, 0.5
      %v784 = vadd.f32 %v768, 0.5
      %v785 = vadd.f32 %v769, 0.5
      %v786 = vadd.f32 %v770, 0.5
      %v787 = vadd.f32 %v771, 0.5
      %v788 = vadd.f32 %v772, 0.5
      %v789 = vadd.f32 %v773, 0.5
      %v790 = vadd.f32 %v774, 0.5
      %v791 = vadd.f32 %v775, 0.5
      %v792 = vsel %vm242, %v776, %v760
      %v793 = vsel %vm243, %v777, %v761
      %v794 = vsel %vm244, %v778, %v762
      %v795 = vsel %vm245, %v779, %v763
      %v796 = vsel %vm246, %v780, %v764
      %v797 = vsel %vm247, %v781, %v765
      %v798 = vsel %vm248, %v782, %v766
      %v799 = vsel %vm249, %v783, %v767
      %v800 = vsel %vm250, %v784, %v768
      %v801 = vsel %vm251, %v785, %v769
      %v802 = vsel %vm252, %v786, %v770
      %v803 = vsel %vm253, %v787, %v771
      %v804 = vsel %vm254, %v788, %v772
      %v805 = vsel %vm255, %v789, %v773
      %v806 = vsel %vm256, %v790, %v774
      %v807 = vsel %vm257, %v791, %v775
      %808 = vxpose.xlu0.c.b16.start [1/8] %v220, 128
      %809 = vxpose.xlu0.c.b16.cont [2/8] 0, 128
      %810 = vxpose.xlu0.c.b16.cont [3/8] 0, 128
      %811 = vxpose.xlu0.c.b16.cont [4/8] 0, 128
      %812 = vxpose.xlu0.c.b16.cont [5/8] 0, 128
      %813 = vxpose.xlu0.c.b16.cont [6/8] 0, 128
      %814 = vxpose.xlu0.c.b16.cont [7/8] 0, 128
      %815 = vxpose.xlu0.c.b16.end [8/8] 0, 128
      %v816 = vpop.trf.xlu0
      %v817 = vpop.trf.xlu0
      %v818 = vpop.trf.xlu0
      %v819 = vpop.trf.xlu0
      %v820 = vpop.trf.xlu0
      %v821 = vpop.trf.xlu0
      %v822 = vpop.trf.xlu0
      %v823 = vpop.trf.xlu0
      %v825 = vsel %vm274, %v816, 0
      %v828 = vsel %vm274, %v817, 0
      %v831 = vsel %vm274, %v818, 0
      %v834 = vsel %vm274, %v819, 0
      %v837 = vsel %vm274, %v820, 0
      %v840 = vsel %vm274, %v821, 0
      %v843 = vsel %vm274, %v822, 0
      %v846 = vsel %vm274, %v823, 0
      %848 = vmatpush.bf16.msra.mxu0 0
      %849 = vmatpush.bf16.msra.mxu0 0
      %850 = vmatpush.bf16.msra.mxu0 0
      %851 = vmatpush.bf16.msra.mxu0 0
      %852 = vmatpush.bf16.msra.mxu0 0
      %853 = vmatpush.bf16.msra.mxu0 0
      %854 = vmatpush.bf16.msra.mxu0 0
      %855 = vmatpush.bf16.msra.mxu0 %v301
      %856 = vmatmul.bf16.gmra.mxu0 %v825
      %v857 = vpop.f32.mrf.mxu0
      %v858 = vadd.f32 0.0, %v857
      %v859 = vpop.f32.mrf.mxu0
      %v860 = vadd.f32 0.0, %v859
      %861 = vmatmul.bf16.gmra.mxu0 %v828
      %v862 = vpop.f32.mrf.mxu0
      %v863 = vadd.f32 0.0, %v862
      %v864 = vpop.f32.mrf.mxu0
      %v865 = vadd.f32 0.0, %v864
      %866 = vmatmul.bf16.gmra.mxu0 %v831
      %v867 = vpop.f32.mrf.mxu0
      %v868 = vadd.f32 0.0, %v867
      %v869 = vpop.f32.mrf.mxu0
      %v870 = vadd.f32 0.0, %v869
      %871 = vmatmul.bf16.gmra.mxu0 %v834
      %v872 = vpop.f32.mrf.mxu0
      %v873 = vadd.f32 0.0, %v872
      %v874 = vpop.f32.mrf.mxu0
      %v875 = vadd.f32 0.0, %v874
      %876 = vmatmul.bf16.gmra.mxu0 %v837
      %v877 = vpop.f32.mrf.mxu0
      %v878 = vadd.f32 0.0, %v877
      %v879 = vpop.f32.mrf.mxu0
      %v880 = vadd.f32 0.0, %v879
      %881 = vmatmul.bf16.gmra.mxu0 %v840
      %v882 = vpop.f32.mrf.mxu0
      %v883 = vadd.f32 0.0, %v882
      %v884 = vpop.f32.mrf.mxu0
      %v885 = vadd.f32 0.0, %v884
      %886 = vmatmul.bf16.gmra.mxu0 %v843
      %v887 = vpop.f32.mrf.mxu0
      %v888 = vadd.f32 0.0, %v887
      %v889 = vpop.f32.mrf.mxu0
      %v890 = vadd.f32 0.0, %v889
      %891 = vmatmul.bf16.gmra.mxu0 %v846
      %v892 = vpop.f32.mrf.mxu0
      %v893 = vadd.f32 0.0, %v892
      %v894 = vpop.f32.mrf.mxu0
      %v895 = vadd.f32 0.0, %v894
      %896 = vdwg.mxu0
      %v897 = vmul.f32 %v858, 0.125
      %v898 = vmul.f32 %v860, 0.125
      %v899 = vmul.f32 %v863, 0.125
      %v900 = vmul.f32 %v865, 0.125
      %v901 = vmul.f32 %v868, 0.125
      %v902 = vmul.f32 %v870, 0.125
      %v903 = vmul.f32 %v873, 0.125
      %v904 = vmul.f32 %v875, 0.125
      %v905 = vmul.f32 %v878, 0.125
      %v906 = vmul.f32 %v880, 0.125
      %v907 = vmul.f32 %v883, 0.125
      %v908 = vmul.f32 %v885, 0.125
      %v909 = vmul.f32 %v888, 0.125
      %v910 = vmul.f32 %v890, 0.125
      %v911 = vmul.f32 %v893, 0.125
      %v912 = vmul.f32 %v895, 0.125
      %v913 = vadd.f32 %v897, -0.5
      %v914 = vadd.f32 %v898, -0.5
      %v915 = vadd.f32 %v899, -0.5
      %v916 = vadd.f32 %v900, -0.5
      %v917 = vadd.f32 %v901, -0.5
      %v918 = vadd.f32 %v902, -0.5
      %v919 = vadd.f32 %v903, -0.5
      %v920 = vadd.f32 %v904, -0.5
      %v921 = vadd.f32 %v905, -0.5
      %v922 = vadd.f32 %v906, -0.5
      %v923 = vadd.f32 %v907, -0.5
      %v924 = vadd.f32 %v908, -0.5
      %v925 = vadd.f32 %v909, -0.5
      %v926 = vadd.f32 %v910, -0.5
      %v927 = vadd.f32 %v911, -0.5
      %v928 = vadd.f32 %v912, -0.5
      %v929 = vsel %vm242, %v913, %v897
      %v930 = vsel %vm243, %v914, %v898
      %v931 = vsel %vm244, %v915, %v899
      %v932 = vsel %vm245, %v916, %v900
      %v933 = vsel %vm246, %v917, %v901
      %v934 = vsel %vm247, %v918, %v902
      %v935 = vsel %vm248, %v919, %v903
      %v936 = vsel %vm249, %v920, %v904
      %v937 = vsel %vm250, %v921, %v905
      %v938 = vsel %vm251, %v922, %v906
      %v939 = vsel %vm252, %v923, %v907
      %v940 = vsel %vm253, %v924, %v908
      %v941 = vsel %vm254, %v925, %v909
      %v942 = vsel %vm255, %v926, %v910
      %v943 = vsel %vm256, %v927, %v911
      %v944 = vsel %vm257, %v928, %v912
      %v945 = vpack.c.bf16 %v930, %v929
      %v946 = vpack.c.bf16 %v932, %v931
      %v947 = vpack.c.bf16 %v934, %v933
      %v948 = vpack.c.bf16 %v936, %v935
      %v949 = vpack.c.bf16 %v938, %v937
      %v950 = vpack.c.bf16 %v940, %v939
      %v951 = vpack.c.bf16 %v942, %v941
      %v952 = vpack.c.bf16 %v944, %v943
      %953 = vmatpush.bf16.msra.mxu0 %v952
      %954 = vmatpush.bf16.msra.mxu0 %v951
      %955 = vmatpush.bf16.msra.mxu0 %v950
      %956 = vmatpush.bf16.msra.mxu0 %v949
      %957 = vmatpush.bf16.msra.mxu0 %v948
      %958 = vmatpush.bf16.msra.mxu0 %v947
      %959 = vmatpush.bf16.msra.mxu0 %v946
      %960 = vmatpush.bf16.msra.mxu0 %v945
      %961 = vmatmul.bf16.gmra.mxu0 %v945
      %v962 = vpop.f32.mrf.mxu0
      %v963 = vadd.f32 0.0, %v962
      %v964 = vpop.f32.mrf.mxu0
      %v965 = vadd.f32 0.0, %v964
      %966 = vmatmul.bf16.gmra.mxu0 %v946
      %v967 = vpop.f32.mrf.mxu0
      %v968 = vadd.f32 0.0, %v967
      %v969 = vpop.f32.mrf.mxu0
      %v970 = vadd.f32 0.0, %v969
      %971 = vmatmul.bf16.gmra.mxu0 %v947
      %v972 = vpop.f32.mrf.mxu0
      %v973 = vadd.f32 0.0, %v972
      %v974 = vpop.f32.mrf.mxu0
      %v975 = vadd.f32 0.0, %v974
      %976 = vmatmul.bf16.gmra.mxu0 %v948
      %v977 = vpop.f32.mrf.mxu0
      %v978 = vadd.f32 0.0, %v977
      %v979 = vpop.f32.mrf.mxu0
      %v980 = vadd.f32 0.0, %v979
      %981 = vmatmul.bf16.gmra.mxu0 %v949
      %v982 = vpop.f32.mrf.mxu0
      %v983 = vadd.f32 0.0, %v982
      %v984 = vpop.f32.mrf.mxu0
      %v985 = vadd.f32 0.0, %v984
      %986 = vmatmul.bf16.gmra.mxu0 %v950
      %v987 = vpop.f32.mrf.mxu0
      %v988 = vadd.f32 0.0, %v987
      %v989 = vpop.f32.mrf.mxu0
      %v990 = vadd.f32 0.0, %v989
      %991 = vmatmul.bf16.gmra.mxu0 %v951
      %v992 = vpop.f32.mrf.mxu0
      %v993 = vadd.f32 0.0, %v992
      %v994 = vpop.f32.mrf.mxu0
      %v995 = vadd.f32 0.0, %v994
      %996 = vmatmul.bf16.gmra.mxu0 %v952
      %v997 = vpop.f32.mrf.mxu0
      %v998 = vadd.f32 0.0, %v997
      %v999 = vpop.f32.mrf.mxu0
      %v1000 = vadd.f32 0.0, %v999
      %1001 = vdwg.mxu0
      %v1002 = vmul.f32 %v963, -0.5
      %v1003 = vmul.f32 %v965, -0.5
      %v1004 = vmul.f32 %v968, -0.5
      %v1005 = vmul.f32 %v970, -0.5
      %v1006 = vmul.f32 %v973, -0.5
      %v1007 = vmul.f32 %v975, -0.5
      %v1008 = vmul.f32 %v978, -0.5
      %v1009 = vmul.f32 %v980, -0.5
      %v1010 = vmul.f32 %v983, -0.5
      %v1011 = vmul.f32 %v985, -0.5
      %v1012 = vmul.f32 %v988, -0.5
      %v1013 = vmul.f32 %v990, -0.5
      %v1014 = vmul.f32 %v993, -0.5
      %v1015 = vmul.f32 %v995, -0.5
      %v1016 = vmul.f32 %v998, -0.5
      %v1017 = vmul.f32 %v1000, -0.5
      %v1018 = vadd.f32 %v929, %v1002
      %v1019 = vadd.f32 %v930, %v1003
      %v1020 = vadd.f32 %v931, %v1004
      %v1021 = vadd.f32 %v932, %v1005
      %v1022 = vadd.f32 %v933, %v1006
      %v1023 = vadd.f32 %v934, %v1007
      %v1024 = vadd.f32 %v935, %v1008
      %v1025 = vadd.f32 %v936, %v1009
      %v1026 = vadd.f32 %v937, %v1010
      %v1027 = vadd.f32 %v938, %v1011
      %v1028 = vadd.f32 %v939, %v1012
      %v1029 = vadd.f32 %v940, %v1013
      %v1030 = vadd.f32 %v941, %v1014
      %v1031 = vadd.f32 %v942, %v1015
      %v1032 = vadd.f32 %v943, %v1016
      %v1033 = vadd.f32 %v944, %v1017
      %v1034 = vpack.c.bf16 %v965, %v963
      %v1035 = vpack.c.bf16 %v970, %v968
      %v1036 = vpack.c.bf16 %v975, %v973
      %v1037 = vpack.c.bf16 %v980, %v978
      %v1038 = vpack.c.bf16 %v985, %v983
      %v1039 = vpack.c.bf16 %v990, %v988
      %v1040 = vpack.c.bf16 %v995, %v993
      %v1041 = vpack.c.bf16 %v1000, %v998
      %1042 = vmatpush.bf16.msra.mxu0 %v952
      %1043 = vmatpush.bf16.msra.mxu0 %v951
      %1044 = vmatpush.bf16.msra.mxu0 %v950
      %1045 = vmatpush.bf16.msra.mxu0 %v949
      %1046 = vmatpush.bf16.msra.mxu0 %v948
      %1047 = vmatpush.bf16.msra.mxu0 %v947
      %1048 = vmatpush.bf16.msra.mxu0 %v946
      %1049 = vmatpush.bf16.msra.mxu0 %v945
      %1050 = vmatmul.bf16.gmra.mxu0 %v1034
      %v1051 = vpop.f32.mrf.mxu0
      %v1052 = vadd.f32 0.0, %v1051
      %v1053 = vpop.f32.mrf.mxu0
      %v1054 = vadd.f32 0.0, %v1053
      %1055 = vmatmul.bf16.gmra.mxu0 %v1035
      %v1056 = vpop.f32.mrf.mxu0
      %v1057 = vadd.f32 0.0, %v1056
      %v1058 = vpop.f32.mrf.mxu0
      %v1059 = vadd.f32 0.0, %v1058
      %1060 = vmatmul.bf16.gmra.mxu0 %v1036
      %v1061 = vpop.f32.mrf.mxu0
      %v1062 = vadd.f32 0.0, %v1061
      %v1063 = vpop.f32.mrf.mxu0
      %v1064 = vadd.f32 0.0, %v1063
      %1065 = vmatmul.bf16.gmra.mxu0 %v1037
      %v1066 = vpop.f32.mrf.mxu0
      %v1067 = vadd.f32 0.0, %v1066
      %v1068 = vpop.f32.mrf.mxu0
      %v1069 = vadd.f32 0.0, %v1068
      %1070 = vmatmul.bf16.gmra.mxu0 %v1038
      %v1071 = vpop.f32.mrf.mxu0
      %v1072 = vadd.f32 0.0, %v1071
      %v1073 = vpop.f32.mrf.mxu0
      %v1074 = vadd.f32 0.0, %v1073
      %1075 = vmatmul.bf16.gmra.mxu0 %v1039
      %v1076 = vpop.f32.mrf.mxu0
      %v1077 = vadd.f32 0.0, %v1076
      %v1078 = vpop.f32.mrf.mxu0
      %v1079 = vadd.f32 0.0, %v1078
      %1080 = vmatmul.bf16.gmra.mxu0 %v1040
      %v1081 = vpop.f32.mrf.mxu0
      %v1082 = vadd.f32 0.0, %v1081
      %v1083 = vpop.f32.mrf.mxu0
      %v1084 = vadd.f32 0.0, %v1083
      %1085 = vmatmul.bf16.gmra.mxu0 %v1041
      %v1086 = vpop.f32.mrf.mxu0
      %v1087 = vadd.f32 0.0, %v1086
      %v1088 = vpop.f32.mrf.mxu0
      %v1089 = vadd.f32 0.0, %v1088
      %1090 = vdwg.mxu0
      %v1091 = vmul.f32 %v1052, 0.33333334
      %v1092 = vmul.f32 %v1054, 0.33333334
      %v1093 = vmul.f32 %v1057, 0.33333334
      %v1094 = vmul.f32 %v1059, 0.33333334
      %v1095 = vmul.f32 %v1062, 0.33333334
      %v1096 = vmul.f32 %v1064, 0.33333334
      %v1097 = vmul.f32 %v1067, 0.33333334
      %v1098 = vmul.f32 %v1069, 0.33333334
      %v1099 = vmul.f32 %v1072, 0.33333334
      %v1100 = vmul.f32 %v1074, 0.33333334
      %v1101 = vmul.f32 %v1077, 0.33333334
      %v1102 = vmul.f32 %v1079, 0.33333334
      %v1103 = vmul.f32 %v1082, 0.33333334
      %v1104 = vmul.f32 %v1084, 0.33333334
      %v1105 = vmul.f32 %v1087, 0.33333334
      %v1106 = vmul.f32 %v1089, 0.33333334
      %v1107 = vadd.f32 %v1018, %v1091
      %v1108 = vadd.f32 %v1019, %v1092
      %v1109 = vadd.f32 %v1020, %v1093
      %v1110 = vadd.f32 %v1021, %v1094
      %v1111 = vadd.f32 %v1022, %v1095
      %v1112 = vadd.f32 %v1023, %v1096
      %v1113 = vadd.f32 %v1024, %v1097
      %v1114 = vadd.f32 %v1025, %v1098
      %v1115 = vadd.f32 %v1026, %v1099
      %v1116 = vadd.f32 %v1027, %v1100
      %v1117 = vadd.f32 %v1028, %v1101
      %v1118 = vadd.f32 %v1029, %v1102
      %v1119 = vadd.f32 %v1030, %v1103
      %v1120 = vadd.f32 %v1031, %v1104
      %v1121 = vadd.f32 %v1032, %v1105
      %v1122 = vadd.f32 %v1033, %v1106
      %v1123 = vpack.c.bf16 %v1054, %v1052
      %v1124 = vpack.c.bf16 %v1059, %v1057
      %v1125 = vpack.c.bf16 %v1064, %v1062
      %v1126 = vpack.c.bf16 %v1069, %v1067
      %v1127 = vpack.c.bf16 %v1074, %v1072
      %v1128 = vpack.c.bf16 %v1079, %v1077
      %v1129 = vpack.c.bf16 %v1084, %v1082
      %v1130 = vpack.c.bf16 %v1089, %v1087
      %1131 = vmatpush.bf16.msra.mxu0 %v952
      %1132 = vmatpush.bf16.msra.mxu0 %v951
      %1133 = vmatpush.bf16.msra.mxu0 %v950
      %1134 = vmatpush.bf16.msra.mxu0 %v949
      %1135 = vmatpush.bf16.msra.mxu0 %v948
      %1136 = vmatpush.bf16.msra.mxu0 %v947
      %1137 = vmatpush.bf16.msra.mxu0 %v946
      %1138 = vmatpush.bf16.msra.mxu0 %v945
      %1139 = vmatmul.bf16.gmra.mxu0 %v1123
      %v1140 = vpop.f32.mrf.mxu0
      %v1141 = vadd.f32 0.0, %v1140
      %v1142 = vpop.f32.mrf.mxu0
      %v1143 = vadd.f32 0.0, %v1142
      %1144 = vmatmul.bf16.gmra.mxu0 %v1124
      %v1145 = vpop.f32.mrf.mxu0
      %v1146 = vadd.f32 0.0, %v1145
      %v1147 = vpop.f32.mrf.mxu0
      %v1148 = vadd.f32 0.0, %v1147
      %1149 = vmatmul.bf16.gmra.mxu0 %v1125
      %v1150 = vpop.f32.mrf.mxu0
      %v1151 = vadd.f32 0.0, %v1150
      %v1152 = vpop.f32.mrf.mxu0
      %v1153 = vadd.f32 0.0, %v1152
      %1154 = vmatmul.bf16.gmra.mxu0 %v1126
      %v1155 = vpop.f32.mrf.mxu0
      %v1156 = vadd.f32 0.0, %v1155
      %v1157 = vpop.f32.mrf.mxu0
      %v1158 = vadd.f32 0.0, %v1157
      %1159 = vmatmul.bf16.gmra.mxu0 %v1127
      %v1160 = vpop.f32.mrf.mxu0
      %v1161 = vadd.f32 0.0, %v1160
      %v1162 = vpop.f32.mrf.mxu0
      %v1163 = vadd.f32 0.0, %v1162
      %1164 = vmatmul.bf16.gmra.mxu0 %v1128
      %v1165 = vpop.f32.mrf.mxu0
      %v1166 = vadd.f32 0.0, %v1165
      %v1167 = vpop.f32.mrf.mxu0
      %v1168 = vadd.f32 0.0, %v1167
      %1169 = vmatmul.bf16.gmra.mxu0 %v1129
      %v1170 = vpop.f32.mrf.mxu0
      %v1171 = vadd.f32 0.0, %v1170
      %v1172 = vpop.f32.mrf.mxu0
      %v1173 = vadd.f32 0.0, %v1172
      %1174 = vmatmul.bf16.gmra.mxu0 %v1130
      %v1175 = vpop.f32.mrf.mxu0
      %v1176 = vadd.f32 0.0, %v1175
      %v1177 = vpop.f32.mrf.mxu0
      %v1178 = vadd.f32 0.0, %v1177
      %1179 = vdwg.mxu0
      %v1180 = vmul.f32 %v1141, -0.25
      %v1181 = vmul.f32 %v1143, -0.25
      %v1182 = vmul.f32 %v1146, -0.25
      %v1183 = vmul.f32 %v1148, -0.25
      %v1184 = vmul.f32 %v1151, -0.25
      %v1185 = vmul.f32 %v1153, -0.25
      %v1186 = vmul.f32 %v1156, -0.25
      %v1187 = vmul.f32 %v1158, -0.25
      %v1188 = vmul.f32 %v1161, -0.25
      %v1189 = vmul.f32 %v1163, -0.25
      %v1190 = vmul.f32 %v1166, -0.25
      %v1191 = vmul.f32 %v1168, -0.25
      %v1192 = vmul.f32 %v1171, -0.25
      %v1193 = vmul.f32 %v1173, -0.25
      %v1194 = vmul.f32 %v1176, -0.25
      %v1195 = vmul.f32 %v1178, -0.25
      %v1196 = vadd.f32 %v1107, %v1180
      %v1197 = vadd.f32 %v1108, %v1181
      %v1198 = vadd.f32 %v1109, %v1182
      %v1199 = vadd.f32 %v1110, %v1183
      %v1200 = vadd.f32 %v1111, %v1184
      %v1201 = vadd.f32 %v1112, %v1185
      %v1202 = vadd.f32 %v1113, %v1186
      %v1203 = vadd.f32 %v1114, %v1187
      %v1204 = vadd.f32 %v1115, %v1188
      %v1205 = vadd.f32 %v1116, %v1189
      %v1206 = vadd.f32 %v1117, %v1190
      %v1207 = vadd.f32 %v1118, %v1191
      %v1208 = vadd.f32 %v1119, %v1192
      %v1209 = vadd.f32 %v1120, %v1193
      %v1210 = vadd.f32 %v1121, %v1194
      %v1211 = vadd.f32 %v1122, %v1195
      %v1212 = vmul.f32 %v792, %v1196
      %v1213 = vmul.f32 %v793, %v1197
      %v1214 = vmul.f32 %v794, %v1198
      %v1215 = vmul.f32 %v795, %v1199
      %v1216 = vmul.f32 %v796, %v1200
      %v1217 = vmul.f32 %v797, %v1201
      %v1218 = vmul.f32 %v798, %v1202
      %v1219 = vmul.f32 %v799, %v1203
      %v1220 = vmul.f32 %v800, %v1204
      %v1221 = vmul.f32 %v801, %v1205
      %v1222 = vmul.f32 %v802, %v1206
      %v1223 = vmul.f32 %v803, %v1207
      %v1224 = vmul.f32 %v804, %v1208
      %v1225 = vmul.f32 %v805, %v1209
      %v1226 = vmul.f32 %v806, %v1210
      %v1227 = vmul.f32 %v807, %v1211
      %v1228 = vadd.f32 %v1212, %v1213
      %v1229 = vadd.f32 %v1228, %v1214
      %v1230 = vadd.f32 %v1229, %v1215
      %v1231 = vadd.f32 %v1230, %v1216
      %v1232 = vadd.f32 %v1231, %v1217
      %v1233 = vadd.f32 %v1232, %v1218
      %v1234 = vadd.f32 %v1233, %v1219
      %v1235 = vadd.f32 %v1234, %v1220
      %v1236 = vadd.f32 %v1235, %v1221
      %v1237 = vadd.f32 %v1236, %v1222
      %v1238 = vadd.f32 %v1237, %v1223
      %v1239 = vadd.f32 %v1238, %v1224
      %v1240 = vadd.f32 %v1239, %v1225
      %v1241 = vadd.f32 %v1240, %v1226
      %v1242 = vadd.f32 %v1241, %v1227
      %1243 = vadd.xlane.f32.xlu0 %v1242
      %v1244 = vpop.xlane.xlu0 %1243
      %v1245 = vrot.slane %v1244, 4
      %v1246 = vadd.f32 %v1244, %v1245
      %v1247 = vrot.slane %v1246, 2
      %v1248 = vadd.f32 %v1246, %v1247
      %v1249 = vrot.slane %v1248, 1
      %v1250 = vadd.f32 %v1248, %v1249
      %s1251 = vtos %v1250
      %s1252 = ssub.f32 0.0, %s1251
      %vm1253 = vcmp.eq.s32.totalorder %v241, 0
      %vm1254 = vcmp.eq.s32.totalorder %v241, 1
      %v1255 = vstv %s707
      %v1256 = vsel %vm1254, %v1255, 0.0
      %v1257 = vstv %s1252
      %v1258 = vsel %vm1253, %v1257, %v1256
      %1259 = vst [vmem:[%s162] sm:$0xff] %v1258
      %p1260 = scmp.lt.s32.totalorder %s13, 1
      %s1261 = scalar_select %p1260, %s13, 1
      %s1262 = smul.addr %s1261, 8
      %s1263 = scalar_lea.vmem %s2, %s1262
      // Predicated region
      $region29: #{mec_forward.3} parent=27 // pred_check
        %p1264 = pneg %p85
      $region30: #{mec_forward.3} parent=27 // pred_check_branch
        %1266 = sbr.rel (%p1264) target = $region32
      $region31: #{mec_forward.3} parent=27 // pred_region
        _
      $region32: #{mec_forward.3} parent=27 // pred_fallthru
        _
    $region28: #{mec_forward.3} parent=5 // pred_fallthru
      _
    %p1267 = scmp.le.s32.totalorder 2, %s8
    // Predicated region
    $region33: #{mec_forward.3} parent=5 // pred_check
      %p1268 = pneg %p1267
    $region34: #{mec_forward.3} parent=5 // pred_check_branch
      %1270 = sbr.rel (%p1268) target = $region36
    $region35: #{mec_forward.3} parent=5 // pred_region
      %s1271 = ssub.s32 %s8, 2
      // Predicated region
      $region37: #{mec_forward.3} parent=35 // pred_check
        %p1272 = pneg %p91
      $region38: #{mec_forward.3} parent=35 // pred_check_branch
        %1274 = sbr.rel (%p1272) target = $region40
      $region39: #{mec_forward.3} parent=35 // pred_region
        %p1275 = scmp.lt.s32.totalorder %s14, 1
        %s1276 = scalar_select %p1275, %s14, 1
        %s1277 = smul.addr %s1276, 8
        %s1278 = scalar_lea.vmem %s2, %s1277
      $region40: #{mec_forward.3} parent=35 // pred_fallthru
        _
    $region36: #{mec_forward.3} parent=5 // pred_fallthru
      _
  $region6: #{mec_forward.3} parent=0 // loop_footer
    %s12 = sadd.s32 1, %s8
  $region7: #{mec_forward.3} parent=0 // loop_footer_branch
    %7 = sbr.rel target = $region3
  $region8: #{mec_forward.3} parent=0 // loop_exit
    _

// kernel: mec_forward.2
$region0: #{mec_forward.2}
  #allocation0 [shape = 'u32[]', space=smem, size = 0x4, offset = 0x4, fixed_abs, tag = 'smem constant byte address 0x4 - core index']
  #allocation1 [shape = 'u32[72,128]{1,0:T(1,128)}', space=vmem, size = 0x9000, scoped, tag = 'internal scratch']
  %s0 = inlined_call_operand.vmem [shape: bf16[2,8,768], index: 0, kind: input, shape index: {}]
  %s1 = inlined_call_operand.vmem [shape: bf16[768,256], index: 1, kind: input, shape index: {}]
  %s2 = inlined_call_operand.vmem [shape: bf16[256,256], index: 2, kind: input, shape index: {}]
  %s3 = inlined_call_operand.vmem [shape: bf16[256,256], index: 3, kind: input, shape index: {}]
  %s4 = inlined_call_operand.hbm [shape: bf16[256,128], index: 4, kind: input, shape index: {}]
  %s5 = inlined_call_operand.vmem [shape: f32[1,128], index: 5, kind: input, shape index: {}]
  %s6 = inlined_call_operand.hbm [shape: bf16[128,128], index: 6, kind: input, shape index: {}]
  %s7 = inlined_call_operand.hbm [shape: bf16[128,128], index: 7, kind: input, shape index: {}]
  %s8 = inlined_call_operand.vmem [shape: f32[1,128], index: 8, kind: input, shape index: {}]
  %s9 = inlined_call_operand.vmem [shape: f32[2,8,128], index: 9, kind: output, shape index: {0}]
  %s10 = inlined_call_operand.vmem [shape: f32[2,8,128], index: 10, kind: output, shape index: {1}]
  %11 = xla_tuple %s9, %s10
  %s12 = sld [smem:[#allocation0]]
  $region89: #{mec_forward.2} parent=0
    _
  %s14 = ssub.s32 1, %s12
  %s15 = scalar_select 0, %s14, %s12
  $region1: #{mec_forward.2} parent=0
    #allocation2 [shape = 'u8[65536]{0}', space=vmem, size = 0x10000, scoped, tag = 'input window, operand 4, single buffered']
    #allocation3 [shape = 's32[2]{0}', space=sflag, size = 0x8, scoped, tag = 'scoped memory for mec_forward.2']
    #allocation4 [shape = 'u8[32768]{0}', space=vmem, size = 0x8000, scoped, tag = 'input window, operand 6, single buffered']
    #allocation5 [shape = 's32[1]{0}', space=sflag, size = 0x4, scoped, tag = 'scoped memory for mec_forward.2']
    #allocation6 [shape = 'u8[32768]{0}', space=vmem, size = 0x8000, scoped, tag = 'input window, operand 7, single buffered']
    %16 = vsyncpa [#allocation3], 0
    %17 = vsyncpa [#allocation5], 0
    loop: start=0, step=1, limit=4
    $region2: #{mec_forward.2} parent=1 // loop_pre_header
      _
    $region3: #{mec_forward.2} parent=1 // loop_header
      %s19 = sphi 0, %s23
      %p20 = scmp.ge.s32.totalorder %s19, 4
      %s29 = sphi 0, %s31
      %s32 = sphi 0, %s29
      %s33 = sphi 0, %s32
      %s49 = sphi 0, %s33
      %s53 = sphi 0, %s53
      %s55 = sphi 0, %s53
      %s56 = sphi 0, %s55
      %s70 = sphi 0, %s56
      %s74 = sphi 0, %s74
      %s76 = sphi 0, %s74
      %s77 = sphi 0, %s76
      %s91 = sphi 0, %s77
      %s95 = sphi 0, %s95
      %s97 = sphi 0, %s95
      %s98 = sphi 0, %s97
      %s112 = sphi 0, %s98
      %s116 = sphi 0, %s116
      %s118 = sphi 0, %s116
      %s119 = sphi 0, %s118
      %s133 = sphi 0, %s119
      %s137 = sphi 0, %s137
      %s139 = sphi 0, %s137
      %s140 = sphi 0, %s139
      %s154 = sphi 0, %s140
      %s158 = sphi 0, %s158
      %s160 = sphi 0, %s158
      %s161 = sphi 0, %s160
      %s175 = sphi 0, %s161
      %s179 = sphi 0, %s179
      %s181 = sphi 0, %s179
      %s182 = sphi 0, %s181
      %s196 = sphi 0, %s182
      %s200 = sphi 0, %s200
      %s202 = sphi 0, %s200
      %s203 = sphi 0, %s202
      %s217 = sphi 0, %s203
      %s223 = sphi 0, %s225
      %s226 = sphi 0, %s223
      %s227 = sphi 0, %s226
      %s243 = sphi 0, %s227
      %s249 = sphi 0, %s251
      %s252 = sphi 0, %s249
      %s253 = sphi 0, %s252
      %s269 = sphi 0, %s253
    $region4: #{mec_forward.2} parent=1 // loop_header_branch
      %22 = sbr.rel (%p20) target = $region8
    $region5: #{mec_forward.2} parent=1 // loop_body
      %s24 = ssub.s32 %s19, 1
      %s25 = ssub.s32 %s19, 2
      %s26 = sadd.s32 %s19, 1
      %s27 = ssub.s32 %s19, %s26
      %p28 = scmp.eq.s32.totalorder %s27, 0
      %s30 = sadd.s32 %s29, 1
      %s31 = scalar_select %p28, %s29, %s30
      %p34 = pneg %p28
      %p35 = scmp.eq.s32.totalorder %s19, 1
      %p36 = por %p34, %p35
      %p37 = scmp.ne.s32.totalorder %s29, %s32
      %p38 = scmp.eq.s32.totalorder %s19, 0
      %p39 = por %p37, %p38
      %p40 = scmp.ne.s32.totalorder %s29, %s32
      %p41 = scmp.eq.s32.totalorder %s24, 1
      %p42 = por %p40, %p41
      %p43 = scmp.ne.s32.totalorder %s32, %s33
      %p44 = scmp.eq.s32.totalorder %s24, 0
      %p45 = por %p43, %p44
      %p46 = scmp.ne.s32.totalorder %s32, %s33
      %p47 = scmp.eq.s32.totalorder %s25, 1
      %p48 = por %p46, %p47
      %p50 = scmp.ne.s32.totalorder %s33, %s49
      %p51 = scmp.eq.s32.totalorder %s25, 0
      %p52 = por %p50, %p51
      %s54 = sadd.s32 %s53, 1
      %p57 = scmp.eq.s32.totalorder %s19, 1
      %p58 = scmp.ne.s32.totalorder %s53, %s55
      %p59 = scmp.eq.s32.totalorder %s19, 0
      %p60 = por %p58, %p59
      %p61 = scmp.ne.s32.totalorder %s53, %s55
      %p62 = scmp.eq.s32.totalorder %s24, 1
      %p63 = por %p61, %p62
      %p64 = scmp.ne.s32.totalorder %s55, %s56
      %p65 = scmp.eq.s32.totalorder %s24, 0
      %p66 = por %p64, %p65
      %p67 = scmp.ne.s32.totalorder %s55, %s56
      %p68 = scmp.eq.s32.totalorder %s25, 1
      %p69 = por %p67, %p68
      %p71 = scmp.ne.s32.totalorder %s56, %s70
      %p72 = scmp.eq.s32.totalorder %s25, 0
      %p73 = por %p71, %p72
      %s75 = sadd.s32 %s74, 1
      %p78 = scmp.eq.s32.totalorder %s19, 1
      %p79 = scmp.ne.s32.totalorder %s74, %s76
      %p80 = scmp.eq.s32.totalorder %s19, 0
      %p81 = por %p79, %p80
      %p82 = scmp.ne.s32.totalorder %s74, %s76
      %p83 = scmp.eq.s32.totalorder %s24, 1
      %p84 = por %p82, %p83
      %p85 = scmp.ne.s32.totalorder %s76, %s77
      %p86 = scmp.eq.s32.totalorder %s24, 0
      %p87 = por %p85, %p86
      %p88 = scmp.ne.s32.totalorder %s76, %s77
      %p89 = scmp.eq.s32.totalorder %s25, 1
      %p90 = por %p88, %p89
      %p92 = scmp.ne.s32.totalorder %s77, %s91
      %p93 = scmp.eq.s32.totalorder %s25, 0
      %p94 = por %p92, %p93
      %s96 = sadd.s32 %s95, 1
      %p99 = scmp.eq.s32.totalorder %s19, 1
      %p100 = scmp.ne.s32.totalorder %s95, %s97
      %p101 = scmp.eq.s32.totalorder %s19, 0
      %p102 = por %p100, %p101
      %p103 = scmp.ne.s32.totalorder %s95, %s97
      %p104 = scmp.eq.s32.totalorder %s24, 1
      %p105 = por %p103, %p104
      %p106 = scmp.ne.s32.totalorder %s97, %s98
      %p107 = scmp.eq.s32.totalorder %s24, 0
      %p108 = por %p106, %p107
      %p109 = scmp.ne.s32.totalorder %s97, %s98
      %p110 = scmp.eq.s32.totalorder %s25, 1
      %p111 = por %p109, %p110
      %p113 = scmp.ne.s32.totalorder %s98, %s112
      %p114 = scmp.eq.s32.totalorder %s25, 0
      %p115 = por %p113, %p114
      %s117 = sadd.s32 %s116, 1
      %p120 = scmp.eq.s32.totalorder %s19, 1
      %p121 = scmp.ne.s32.totalorder %s116, %s118
      %p122 = scmp.eq.s32.totalorder %s19, 0
      %p123 = por %p121, %p122
      %p124 = scmp.ne.s32.totalorder %s116, %s118
      %p125 = scmp.eq.s32.totalorder %s24, 1
      %p126 = por %p124, %p125
      %p127 = scmp.ne.s32.totalorder %s118, %s119
      %p128 = scmp.eq.s32.totalorder %s24, 0
      %p129 = por %p127, %p128
      %p130 = scmp.ne.s32.totalorder %s118, %s119
      %p131 = scmp.eq.s32.totalorder %s25, 1
      %p132 = por %p130, %p131
      %p134 = scmp.ne.s32.totalorder %s119, %s133
      %p135 = scmp.eq.s32.totalorder %s25, 0
      %p136 = por %p134, %p135
      %s138 = sadd.s32 %s137, 1
      %p141 = scmp.eq.s32.totalorder %s19, 1
      %p142 = scmp.ne.s32.totalorder %s137, %s139
      %p143 = scmp.eq.s32.totalorder %s19, 0
      %p144 = por %p142, %p143
      %p145 = scmp.ne.s32.totalorder %s137, %s139
      %p146 = scmp.eq.s32.totalorder %s24, 1
      %p147 = por %p145, %p146
      %p148 = scmp.ne.s32.totalorder %s139, %s140
      %p149 = scmp.eq.s32.totalorder %s24, 0
      %p150 = por %p148, %p149
      %p151 = scmp.ne.s32.totalorder %s139, %s140
      %p152 = scmp.eq.s32.totalorder %s25, 1
      %p153 = por %p151, %p152
      %p155 = scmp.ne.s32.totalorder %s140, %s154
      %p156 = scmp.eq.s32.totalorder %s25, 0
      %p157 = por %p155, %p156
      %s159 = sadd.s32 %s158, 1
      %p162 = scmp.eq.s32.totalorder %s19, 1
      %p163 = scmp.ne.s32.totalorder %s158, %s160
      %p164 = scmp.eq.s32.totalorder %s19, 0
      %p165 = por %p163, %p164
      %p166 = scmp.ne.s32.totalorder %s158, %s160
      %p167 = scmp.eq.s32.totalorder %s24, 1
      %p168 = por %p166, %p167
      %p169 = scmp.ne.s32.totalorder %s160, %s161
      %p170 = scmp.eq.s32.totalorder %s24, 0
      %p171 = por %p169, %p170
      %p172 = scmp.ne.s32.totalorder %s160, %s161
      %p173 = scmp.eq.s32.totalorder %s25, 1
      %p174 = por %p172, %p173
      %p176 = scmp.ne.s32.totalorder %s161, %s175
      %p177 = scmp.eq.s32.totalorder %s25, 0
      %p178 = por %p176, %p177
      %s180 = sadd.s32 %s179, 1
      %p183 = scmp.eq.s32.totalorder %s19, 1
      %p184 = scmp.ne.s32.totalorder %s179, %s181
      %p185 = scmp.eq.s32.totalorder %s19, 0
      %p186 = por %p184, %p185
      %p187 = scmp.ne.s32.totalorder %s179, %s181
      %p188 = scmp.eq.s32.totalorder %s24, 1
      %p189 = por %p187, %p188
      %p190 = scmp.ne.s32.totalorder %s181, %s182
      %p191 = scmp.eq.s32.totalorder %s24, 0
      %p192 = por %p190, %p191
      %p193 = scmp.ne.s32.totalorder %s181, %s182
      %p194 = scmp.eq.s32.totalorder %s25, 1
      %p195 = por %p193, %p194
      %p197 = scmp.ne.s32.totalorder %s182, %s196
      %p198 = scmp.eq.s32.totalorder %s25, 0
      %p199 = por %p197, %p198
      %s201 = sadd.s32 %s200, 1
      %p204 = scmp.eq.s32.totalorder %s19, 1
      %p205 = scmp.ne.s32.totalorder %s200, %s202
      %p206 = scmp.eq.s32.totalorder %s19, 0
      %p207 = por %p205, %p206
      %p208 = scmp.ne.s32.totalorder %s200, %s202
      %p209 = scmp.eq.s32.totalorder %s24, 1
      %p210 = por %p208, %p209
      %p211 = scmp.ne.s32.totalorder %s202, %s203
      %p212 = scmp.eq.s32.totalorder %s24, 0
      %p213 = por %p211, %p212
      %p214 = scmp.ne.s32.totalorder %s202, %s203
      %p215 = scmp.eq.s32.totalorder %s25, 1
      %p216 = por %p214, %p215
      %p218 = scmp.ne.s32.totalorder %s203, %s217
      %p219 = scmp.eq.s32.totalorder %s25, 0
      %p220 = por %p218, %p219
      %s221 = ssub.s32 %s19, %s26
      %p222 = scmp.eq.s32.totalorder %s221, 0
      %s224 = sadd.s32 %s223, 1
      %s225 = scalar_select %p222, %s223, %s224
      %p228 = pneg %p222
      %p229 = scmp.eq.s32.totalorder %s19, 1
      %p230 = por %p228, %p229
      %p231 = scmp.ne.s32.totalorder %s223, %s226
      %p232 = scmp.eq.s32.totalorder %s19, 0
      %p233 = por %p231, %p232
      %p234 = scmp.ne.s32.totalorder %s223, %s226
      %p235 = scmp.eq.s32.totalorder %s24, 1
      %p236 = por %p234, %p235
      %p237 = scmp.ne.s32.totalorder %s226, %s227
      %p238 = scmp.eq.s32.totalorder %s24, 0
      %p239 = por %p237, %p238
      %p240 = scmp.ne.s32.totalorder %s226, %s227
      %p241 = scmp.eq.s32.totalorder %s25, 1
      %p242 = por %p240, %p241
      %p244 = scmp.ne.s32.totalorder %s227, %s243
      %p245 = scmp.eq.s32.totalorder %s25, 0
      %p246 = por %p244, %p245
      %s247 = ssub.s32 %s19, %s26
      %p248 = scmp.eq.s32.totalorder %s247, 0
      %s250 = sadd.s32 %s249, 1
      %s251 = scalar_select %p248, %s249, %s250
      %p254 = pneg %p248
      %p255 = scmp.eq.s32.totalorder %s19, 1
      %p256 = por %p254, %p255
      %p257 = scmp.ne.s32.totalorder %s249, %s252
      %p258 = scmp.eq.s32.totalorder %s19, 0
      %p259 = por %p257, %p258
      %p260 = scmp.ne.s32.totalorder %s249, %s252
      %p261 = scmp.eq.s32.totalorder %s24, 1
      %p262 = por %p260, %p261
      %p263 = scmp.ne.s32.totalorder %s252, %s253
      %p264 = scmp.eq.s32.totalorder %s24, 0
      %p265 = por %p263, %p264
      %p266 = scmp.ne.s32.totalorder %s252, %s253
      %p267 = scmp.eq.s32.totalorder %s25, 1
      %p268 = por %p266, %p267
      %p270 = scmp.ne.s32.totalorder %s253, %s269
      %p271 = scmp.eq.s32.totalorder %s25, 0
      %p272 = por %p270, %p271
      %p273 = scmp.le.s32.totalorder 1, %s19
      %p274 = scmp.lt.s32.totalorder %s19, 3
      %p275 = pnand %p273, %p274
      %p276 = pneg %p275
      // Predicated region
      $region9: #{mec_forward.2} parent=5 // pred_check
        _
      $region10: #{mec_forward.2} parent=5 // pred_check_branch
        %278 = sbr.rel (%p275) target = $region12
      $region11: #{mec_forward.2} parent=5 // pred_region
        %s279 = ssub.s32 %s19, 1
        // Predicated region
        $region13: #{mec_forward.2} parent=11 // pred_check
          %p280 = pneg %p66
        $region14: #{mec_forward.2} parent=11 // pred_check_branch
          %282 = sbr.rel (%p280) target = $region16
        $region15: #{mec_forward.2} parent=11 // pred_region
          _
        $region16: #{mec_forward.2} parent=11 // pred_fallthru
          _
        // Predicated region
        $region17: #{mec_forward.2} parent=11 // pred_check
          %p283 = pneg %p87
        $region18: #{mec_forward.2} parent=11 // pred_check_branch
          %285 = sbr.rel (%p283) target = $region20
        $region19: #{mec_forward.2} parent=11 // pred_region
          _
        $region20: #{mec_forward.2} parent=11 // pred_fallthru
          _
        // Predicated region
        $region21: #{mec_forward.2} parent=11 // pred_check
          %p286 = pneg %p108
        $region22: #{mec_forward.2} parent=11 // pred_check_branch
          %288 = sbr.rel (%p286) target = $region24
        $region23: #{mec_forward.2} parent=11 // pred_region
          _
        $region24: #{mec_forward.2} parent=11 // pred_fallthru
          _
        // Predicated region
        $region25: #{mec_forward.2} parent=11 // pred_check
          %p289 = pneg %p129
        $region26: #{mec_forward.2} parent=11 // pred_check_branch
          %291 = sbr.rel (%p289) target = $region28
        $region27: #{mec_forward.2} parent=11 // pred_region
          %293 = vsyncadd [#allocation3], 0
          %s294 = sshll.u32 %s4, 4
          %s295 = int_to_ptr.hbm [resolvable:$true] %s294
          %s296 = sshll.u32 [#allocation2], 4
          %s297 = int_to_ptr.vmem [resolvable:$true] %s296
          %302 = dma.hbm_to_vmem [thread:$0]  %s295, 2048, %s297, [#allocation3], 64, 64, 4
        $region28: #{mec_forward.2} parent=11 // pred_fallthru
          _
        // Predicated region
        $region29: #{mec_forward.2} parent=11 // pred_check
          %p303 = pneg %p150
        $region30: #{mec_forward.2} parent=11 // pred_check_branch
          %305 = sbr.rel (%p303) target = $region32
        $region31: #{mec_forward.2} parent=11 // pred_region
          _
        $region32: #{mec_forward.2} parent=11 // pred_fallthru
          _
        // Predicated region
        $region33: #{mec_forward.2} parent=11 // pred_check
          %p306 = pneg %p171
        $region34: #{mec_forward.2} parent=11 // pred_check_branch
          %308 = sbr.rel (%p306) target = $region36
        $region35: #{mec_forward.2} parent=11 // pred_region
          %310 = vsyncadd [#allocation5], 0
          %s311 = sshll.u32 %s6, 4
          %s312 = int_to_ptr.hbm [resolvable:$true] %s311
          %s313 = sshll.u32 [#allocation4], 4
          %s314 = int_to_ptr.vmem [resolvable:$true] %s313
          %319 = dma.hbm_to_vmem [thread:$0]  %s312, 1024, %s314, [#allocation5], 64, 64, 4
        $region36: #{mec_forward.2} parent=11 // pred_fallthru
          _
        // Predicated region
        $region37: #{mec_forward.2} parent=11 // pred_check
          %p320 = pneg %p192
        $region38: #{mec_forward.2} parent=11 // pred_check_branch
          %322 = sbr.rel (%p320) target = $region40
        $region39: #{mec_forward.2} parent=11 // pred_region
          %324 = vsyncadd [#allocation5], 0
          %s325 = sshll.u32 %s7, 4
          %s326 = int_to_ptr.hbm [resolvable:$true] %s325
          %s327 = sshll.u32 [#allocation6], 4
          %s328 = int_to_ptr.vmem [resolvable:$true] %s327
          %333 = dma.hbm_to_vmem [thread:$0]  %s326, 1024, %s328, [#allocation5], 64, 64, 4
        $region40: #{mec_forward.2} parent=11 // pred_fallthru
          _
        // Predicated region
        $region41: #{mec_forward.2} parent=11 // pred_check
          %p334 = pneg %p213
        $region42: #{mec_forward.2} parent=11 // pred_check_branch
          %336 = sbr.rel (%p334) target = $region44
        $region43: #{mec_forward.2} parent=11 // pred_region
          _
        $region44: #{mec_forward.2} parent=11 // pred_fallthru
          _
      $region12: #{mec_forward.2} parent=5 // pred_fallthru
        _
      %p337 = scmp.lt.s32.totalorder %s19, 2
      // Predicated region
      $region45: #{mec_forward.2} parent=5 // pred_check
        %p338 = pneg %p337
      $region46: #{mec_forward.2} parent=5 // pred_check_branch
        %340 = sbr.rel (%p338) target = $region48
      $region47: #{mec_forward.2} parent=5 // pred_region
        // Predicated region
        $region49: #{mec_forward.2} parent=47 // pred_check
          %p341 = pneg %p39
        $region50: #{mec_forward.2} parent=47 // pred_check_branch
          %343 = sbr.rel (%p341) target = $region52
        $region51: #{mec_forward.2} parent=47 // pred_region
          %p344 = scmp.lt.s32.totalorder %s19, 1
          %s345 = scalar_select %p344, %s19, 1
          %s346 = smul.addr %s345, 6
          %s347 = smul.addr %s346, 4
          %s348 = scalar_lea.vmem %s0, %s347
        $region52: #{mec_forward.2} parent=47 // pred_fallthru
          _
      $region48: #{mec_forward.2} parent=5 // pred_fallthru
        _
      %p349 = scmp.le.s32.totalorder 1, %s19
      %p350 = scmp.lt.s32.totalorder %s19, 3
      %p351 = pnand %p349, %p350
      %p352 = pneg %p351
      // Predicated region
      $region53: #{mec_forward.2} parent=5 // pred_check
        _
      $region54: #{mec_forward.2} parent=5 // pred_check_branch
        %354 = sbr.rel (%p351) target = $region56
      $region55: #{mec_forward.2} parent=5 // pred_region
        %s355 = ssub.s32 %s19, 1
        // Predicated region
        $region57: #{mec_forward.2} parent=55 // pred_check
          %p356 = pneg %p129
        $region58: #{mec_forward.2} parent=55 // pred_check_branch
          %358 = sbr.rel (%p356) target = $region60
        $region59: #{mec_forward.2} parent=55 // pred_region
          %360 = dma.done [#allocation3], 2048
        $region60: #{mec_forward.2} parent=55 // pred_fallthru
          _
        // Predicated region
        $region61: #{mec_forward.2} parent=55 // pred_check
          %p361 = pneg %p171
        $region62: #{mec_forward.2} parent=55 // pred_check_branch
          %363 = sbr.rel (%p361) target = $region64
        $region63: #{mec_forward.2} parent=55 // pred_region
          %365 = dma.done [#allocation5], 1024
        $region64: #{mec_forward.2} parent=55 // pred_fallthru
          _
        // Predicated region
        $region65: #{mec_forward.2} parent=55 // pred_check
          %p366 = pneg %p192
        $region66: #{mec_forward.2} parent=55 // pred_check_branch
          %368 = sbr.rel (%p366) target = $region68
        $region67: #{mec_forward.2} parent=55 // pred_region
          %370 = dma.done [#allocation5], 1024
        $region68: #{mec_forward.2} parent=55 // pred_fallthru
          _
        %p371 = scmp.lt.s32.totalorder %s24, 1
        %s372 = scalar_select %p371, %s24, 1
        %s373 = smul.addr %s372, 6
        %s374 = smul.addr %s373, 4
        %s375 = scalar_lea.vmem %s0, %s374
        %p376 = pneg %p45
        %p377 = pneg %p42
        %p378 = pneg %p66
        %p379 = pneg %p63
        %p380 = pneg %p87
        %p381 = pneg %p84
        %p382 = pneg %p108
        %p383 = pneg %p105
        %p384 = pneg %p129
        %p385 = pneg %p126
        %p386 = pneg %p150
        %p387 = pneg %p147
        %p388 = pneg %p171
        %p389 = pneg %p168
        %p390 = pneg %p192
        %p391 = pneg %p189
        %p392 = pneg %p213
        %p393 = pneg %p210
        %p394 = pneg %p239
        %p395 = pneg %p236
        %p396 = scmp.lt.s32.totalorder %s24, 1
        %s397 = scalar_select %p396, %s24, 1
        %s398 = smul.addr %s397, 8
        %s399 = scalar_lea.vmem %s9, %s398
        %p400 = pneg %p265
        %p401 = pneg %p262
        %p402 = scmp.lt.s32.totalorder %s24, 1
        %s403 = scalar_select %p402, %s24, 1
        %s404 = smul.addr %s403, 8
        %s405 = scalar_lea.vmem %s10, %s404
        %p406 = scmp.lt.s32.totalorder %s24, 1
        %s407 = scalar_select %p406, %s24, 1
        %s408 = smul.addr %s407, 6
        %s409 = smul.addr %s408, 4
        %s410 = scalar_lea.vmem %s0, %s409
        %p411 = scmp.lt.s32.totalorder %s24, 1
        %s412 = scalar_select %p411, %s24, 1
        %s413 = smul.addr %s412, 8
        %s414 = scalar_lea.vmem %s9, %s413
        %p415 = scmp.lt.s32.totalorder %s24, 1
        %s416 = scalar_select %p415, %s24, 1
        %s417 = smul.addr %s416, 8
        %s418 = scalar_lea.vmem %s10, %s417
        %v419 = vld [vmem:[%s410] sm:$0xff]
        %v420 = vld [vmem:[%s410 + $0x8] sm:$0xff]
        %v421 = vld [vmem:[%s410 + $0x10] sm:$0xff]
        %v422 = vld [vmem:[%s1] sm:$0xff]
        %v423 = vld [vmem:[%s1 + $0x8] sm:$0xff]
        %v424 = vld [vmem:[%s1 + $0x10] sm:$0xff]
        %v425 = vld [vmem:[%s1 + $0x18] sm:$0xff]
        %v426 = vld [vmem:[%s1 + $0x20] sm:$0xff]
        %v427 = vld [vmem:[%s1 + $0x28] sm:$0xff]
        %v428 = vld [vmem:[%s1 + $0x30] sm:$0xff]
        %v429 = vld [vmem:[%s1 + $0x38] sm:$0xff]
        %v430 = vld [vmem:[%s1 + $0x40] sm:$0xff]
        %v431 = vld [vmem:[%s1 + $0x48] sm:$0xff]
        %v432 = vld [vmem:[%s1 + $0x50] sm:$0xff]
        %v433 = vld [vmem:[%s1 + $0x58] sm:$0xff]
        %v434 = vld [vmem:[%s1 + $0x60] sm:$0xff]
        %v435 = vld [vmem:[%s1 + $0x68] sm:$0xff]
        %v436 = vld [vmem:[%s1 + $0x70] sm:$0xff]
        %v437 = vld [vmem:[%s1 + $0x78] sm:$0xff]
        %v438 = vld [vmem:[%s1 + $0x80] sm:$0xff]
        %v439 = vld [vmem:[%s1 + $0x88] sm:$0xff]
        %v440 = vld [vmem:[%s1 + $0x90] sm:$0xff]
        %v441 = vld [vmem:[%s1 + $0x98] sm:$0xff]
        %v442 = vld [vmem:[%s1 + $0xa0] sm:$0xff]
        %v443 = vld [vmem:[%s1 + $0xa8] sm:$0xff]
        %v444 = vld [vmem:[%s1 + $0xb0] sm:$0xff]
        %v445 = vld [vmem:[%s1 + $0xb8] sm:$0xff]
        %v446 = vld [vmem:[%s1 + $0xc0] sm:$0xff]
        %v447 = vld [vmem:[%s1 + $0xc8] sm:$0xff]
        %v448 = vld [vmem:[%s1 + $0xd0] sm:$0xff]
        %v449 = vld [vmem:[%s1 + $0xd8] sm:$0xff]
        %v450 = vld [vmem:[%s1 + $0xe0] sm:$0xff]
        %v451 = vld [vmem:[%s1 + $0xe8] sm:$0xff]
        %v452 = vld [vmem:[%s1 + $0xf0] sm:$0xff]
        %v453 = vld [vmem:[%s1 + $0xf8] sm:$0xff]
        %v454 = vld [vmem:[%s1 + $0x100] sm:$0xff]
        %v455 = vld [vmem:[%s1 + $0x108] sm:$0xff]
        %v456 = vld [vmem:[%s1 + $0x110] sm:$0xff]
        %v457 = vld [vmem:[%s1 + $0x118] sm:$0xff]
        %v458 = vld [vmem:[%s1 + $0x120] sm:$0xff]
        %v459 = vld [vmem:[%s1 + $0x128] sm:$0xff]
        %v460 = vld [vmem:[%s1 + $0x130] sm:$0xff]
        %v461 = vld [vmem:[%s1 + $0x138] sm:$0xff]
        %v462 = vld [vmem:[%s1 + $0x140] sm:$0xff]
        %v463 = vld [vmem:[%s1 + $0x148] sm:$0xff]
        %v464 = vld [vmem:[%s1 + $0x150] sm:$0xff]
        %v465 = vld [vmem:[%s1 + $0x158] sm:$0xff]
        %v466 = vld [vmem:[%s1 + $0x160] sm:$0xff]
        %v467 = vld [vmem:[%s1 + $0x168] sm:$0xff]
        %v468 = vld [vmem:[%s1 + $0x170] sm:$0xff]
        %v469 = vld [vmem:[%s1 + $0x178] sm:$0xff]
        %v470 = vld [vmem:[%s1 + $0x180] sm:$0xff]
        %v471 = vld [vmem:[%s1 + $0x188] sm:$0xff]
        %v472 = vld [vmem:[%s1 + $0x190] sm:$0xff]
        %v473 = vld [vmem:[%s1 + $0x198] sm:$0xff]
        %v474 = vld [vmem:[%s1 + $0x1a0] sm:$0xff]
        %v475 = vld [vmem:[%s1 + $0x1a8] sm:$0xff]
        %v476 = vld [vmem:[%s1 + $0x1b0] sm:$0xff]
        %v477 = vld [vmem:[%s1 + $0x1b8] sm:$0xff]
        %v478 = vld [vmem:[%s1 + $0x1c0] sm:$0xff]
        %v479 = vld [vmem:[%s1 + $0x1c8] sm:$0xff]
        %v480 = vld [vmem:[%s1 + $0x1d0] sm:$0xff]
        %v481 = vld [vmem:[%s1 + $0x1d8] sm:$0xff]
        %v482 = vld [vmem:[%s1 + $0x1e0] sm:$0xff]
        %v483 = vld [vmem:[%s1 + $0x1e8] sm:$0xff]
        %v484 = vld [vmem:[%s1 + $0x1f0] sm:$0xff]
        %v485 = vld [vmem:[%s1 + $0x1f8] sm:$0xff]
        %v486 = vld [vmem:[%s1 + $0x200] sm:$0xff]
        %v487 = vld [vmem:[%s1 + $0x208] sm:$0xff]
        %v488 = vld [vmem:[%s1 + $0x210] sm:$0xff]
        %v489 = vld [vmem:[%s1 + $0x218] sm:$0xff]
        %v490 = vld [vmem:[%s1 + $0x220] sm:$0xff]
        %v491 = vld [vmem:[%s1 + $0x228] sm:$0xff]
        %v492 = vld [vmem:[%s1 + $0x230] sm:$0xff]
        %v493 = vld [vmem:[%s1 + $0x238] sm:$0xff]
        %v494 = vld [vmem:[%s1 + $0x240] sm:$0xff]
        %v495 = vld [vmem:[%s1 + $0x248] sm:$0xff]
        %v496 = vld [vmem:[%s1 + $0x250] sm:$0xff]
        %v497 = vld [vmem:[%s1 + $0x258] sm:$0xff]
        %v498 = vld [vmem:[%s1 + $0x260] sm:$0xff]
        %v499 = vld [vmem:[%s1 + $0x268] sm:$0xff]
        %v500 = vld [vmem:[%s1 + $0x270] sm:$0xff]
        %v501 = vld [vmem:[%s1 + $0x278] sm:$0xff]
        %v502 = vld [vmem:[%s1 + $0x280] sm:$0xff]
        %v503 = vld [vmem:[%s1 + $0x288] sm:$0xff]
        %v504 = vld [vmem:[%s1 + $0x290] sm:$0xff]
        %v505 = vld [vmem:[%s1 + $0x298] sm:$0xff]
        %v506 = vld [vmem:[%s1 + $0x2a0] sm:$0xff]
        %v507 = vld [vmem:[%s1 + $0x2a8] sm:$0xff]
        %v508 = vld [vmem:[%s1 + $0x2b0] sm:$0xff]
        %v509 = vld [vmem:[%s1 + $0x2b8] sm:$0xff]
        %v510 = vld [vmem:[%s1 + $0x2c0] sm:$0xff]
        %v511 = vld [vmem:[%s1 + $0x2c8] sm:$0xff]
        %v512 = vld [vmem:[%s1 + $0x2d0] sm:$0xff]
        %v513 = vld [vmem:[%s1 + $0x2d8] sm:$0xff]
        %v514 = vld [vmem:[%s1 + $0x2e0] sm:$0xff]
        %v515 = vld [vmem:[%s1 + $0x2e8] sm:$0xff]
        %v516 = vld [vmem:[%s1 + $0x2f0] sm:$0xff]
        %v517 = vld [vmem:[%s1 + $0x2f8] sm:$0xff]
        %v521 = vunpack.c.l.b16 %v419
        %v522 = vunpack.c.h.b16 %v419
        %v523 = vunpack.c.l.b16 %v420
        %v524 = vunpack.c.h.b16 %v420
        %v525 = vunpack.c.l.b16 %v421
        %v526 = vunpack.c.h.b16 %v421
        %v527 = vpack.c.b16 %v521, %v521
        %v528 = vpack.c.b16 %v522, %v522
        %v529 = vpack.c.b16 %v523, %v523
        %v530 = vpack.c.b16 %v524, %v524
        %v531 = vpack.c.b16 %v525, %v525
        %v532 = vpack.c.b16 %v526, %v526
        %v635 = vunpack.c.l.b16 %v422
        %v636 = vunpack.c.h.b16 %v422
        %v637 = vunpack.c.l.b16 %v423
        %v638 = vunpack.c.h.b16 %v423
        %v639 = vunpack.c.l.b16 %v424
        %v640 = vunpack.c.h.b16 %v424
        %v641 = vunpack.c.l.b16 %v425
        %v642 = vunpack.c.h.b16 %v425
        %v643 = vunpack.c.l.b16 %v426
        %v644 = vunpack.c.h.b16 %v426
        %v645 = vunpack.c.l.b16 %v427
        %v646 = vunpack.c.h.b16 %v427
        %v647 = vunpack.c.l.b16 %v428
        %v648 = vunpack.c.h.b16 %v428
        %v649 = vunpack.c.l.b16 %v429
        %v650 = vunpack.c.h.b16 %v429
        %v651 = vunpack.c.l.b16 %v430
        %v652 = vunpack.c.h.b16 %v430
        %v653 = vunpack.c.l.b16 %v431
        %v654 = vunpack.c.h.b16 %v431
        %v655 = vunpack.c.l.b16 %v432
        %v656 = vunpack.c.h.b16 %v432
        %v657 = vunpack.c.l.b16 %v433
        %v658 = vunpack.c.h.b16 %v433
        %v659 = vunpack.c.l.b16 %v434
        %v660 = vunpack.c.h.b16 %v434
        %v661 = vunpack.c.l.b16 %v435
        %v662 = vunpack.c.h.b16 %v435
        %v663 = vunpack.c.l.b16 %v436
        %v664 = vunpack.c.h.b16 %v436
        %v665 = vunpack.c.l.b16 %v437
        %v666 = vunpack.c.h.b16 %v437
        %v667 = vunpack.c.l.b16 %v438
        %v668 = vunpack.c.h.b16 %v438
        %v669 = vunpack.c.l.b16 %v439
        %v670 = vunpack.c.h.b16 %v439
        %v671 = vunpack.c.l.b16 %v440
        %v672 = vunpack.c.h.b16 %v440
        %v673 = vunpack.c.l.b16 %v441
        %v674 = vunpack.c.h.b16 %v441
        %v675 = vunpack.c.l.b16 %v442
        %v676 = vunpack.c.h.b16 %v442
        %v677 = vunpack.c.l.b16 %v443
        %v678 = vunpack.c.h.b16 %v443
        %v679 = vunpack.c.l.b16 %v444
        %v680 = vunpack.c.h.b16 %v444
        %v681 = vunpack.c.l.b16 %v445
        %v682 = vunpack.c.h.b16 %v445
        %v683 = vunpack.c.l.b16 %v446
        %v684 = vunpack.c.h.b16 %v446
        %v685 = vunpack.c.l.b16 %v447
        %v686 = vunpack.c.h.b16 %v447
        %v687 = vunpack.c.l.b16 %v448
        %v688 = vunpack.c.h.b16 %v448
        %v689 = vunpack.c.l.b16 %v449
        %v690 = vunpack.c.h.b16 %v449
        %v691 = vunpack.c.l.b16 %v450
        %v692 = vunpack.c.h.b16 %v450
        %v693 = vunpack.c.l.b16 %v451
        %v694 = vunpack.c.h.b16 %v451
        %v695 = vunpack.c.l.b16 %v452
        %v696 = vunpack.c.h.b16 %v452
        %v697 = vunpack.c.l.b16 %v453
        %v698 = vunpack.c.h.b16 %v453
        %v699 = vunpack.c.l.b16 %v454
        %v700 = vunpack.c.h.b16 %v454
        %v701 = vunpack.c.l.b16 %v455
        %v702 = vunpack.c.h.b16 %v455
        %v703 = vunpack.c.l.b16 %v456
        %v704 = vunpack.c.h.b16 %v456
        %v705 = vunpack.c.l.b16 %v457
        %v706 = vunpack.c.h.b16 %v457
        %v707 = vunpack.c.l.b16 %v458
        %v708 = vunpack.c.h.b16 %v458
        %v709 = vunpack.c.l.b16 %v459
        %v710 = vunpack.c.h.b16 %v459
        %v711 = vunpack.c.l.b16 %v460
        %v712 = vunpack.c.h.b16 %v460
        %v713 = vunpack.c.l.b16 %v461
        %v714 = vunpack.c.h.b16 %v461
        %v715 = vunpack.c.l.b16 %v462
        %v716 = vunpack.c.h.b16 %v462
        %v717 = vunpack.c.l.b16 %v463
        %v718 = vunpack.c.h.b16 %v463
        %v719 = vunpack.c.l.b16 %v464
        %v720 = vunpack.c.h.b16 %v464
        %v721 = vunpack.c.l.b16 %v465
        %v722 = vunpack.c.h.b16 %v465
        %v723 = vunpack.c.l.b16 %v466
        %v724 = vunpack.c.h.b16 %v466
        %v725 = vunpack.c.l.b16 %v467
        %v726 = vunpack.c.h.b16 %v467
        %v727 = vunpack.c.l.b16 %v468
        %v728 = vunpack.c.h.b16 %v468
        %v729 = vunpack.c.l.b16 %v469
        %v730 = vunpack.c.h.b16 %v469
        %v731 = vunpack.c.l.b16 %v470
        %v732 = vunpack.c.h.b16 %v470
        %v733 = vunpack.c.l.b16 %v471
        %v734 = vunpack.c.h.b16 %v471
        %v735 = vunpack.c.l.b16 %v472
        %v736 = vunpack.c.h.b16 %v472
        %v737 = vunpack.c.l.b16 %v473
        %v738 = vunpack.c.h.b16 %v473
        %v739 = vunpack.c.l.b16 %v474
        %v740 = vunpack.c.h.b16 %v474
        %v741 = vunpack.c.l.b16 %v475
        %v742 = vunpack.c.h.b16 %v475
        %v743 = vunpack.c.l.b16 %v476
        %v744 = vunpack.c.h.b16 %v476
        %v745 = vunpack.c.l.b16 %v477
        %v746 = vunpack.c.h.b16 %v477
        %v747 = vunpack.c.l.b16 %v478
        %v748 = vunpack.c.h.b16 %v478
        %v749 = vunpack.c.l.b16 %v479
        %v750 = vunpack.c.h.b16 %v479
        %v751 = vunpack.c.l.b16 %v480
        %v752 = vunpack.c.h.b16 %v480
        %v753 = vunpack.c.l.b16 %v481
        %v754 = vunpack.c.h.b16 %v481
        %v755 = vunpack.c.l.b16 %v482
        %v756 = vunpack.c.h.b16 %v482
        %v757 = vunpack.c.l.b16 %v483
        %v758 = vunpack.c.h.b16 %v483
        %v759 = vunpack.c.l.b16 %v484
        %v760 = vunpack.c.h.b16 %v484
        %v761 = vunpack.c.l.b16 %v485
        %v762 = vunpack.c.h.b16 %v485
        %v763 = vunpack.c.l.b16 %v486
        %v764 = vunpack.c.h.b16 %v486
        %v765 = vunpack.c.l.b16 %v487
        %v766 = vunpack.c.h.b16 %v487
        %v767 = vunpack.c.l.b16 %v488
        %v768 = vunpack.c.h.b16 %v488
        %v769 = vunpack.c.l.b16 %v489
        %v770 = vunpack.c.h.b16 %v489
        %v771 = vunpack.c.l.b16 %v490
        %v772 = vunpack.c.h.b16 %v490
        %v773 = vunpack.c.l.b16 %v491
        %v774 = vunpack.c.h.b16 %v491
        %v775 = vunpack.c.l.b16 %v492
        %v776 = vunpack.c.h.b16 %v492
        %v777 = vunpack.c.l.b16 %v493
        %v778 = vunpack.c.h.b16 %v493
        %v779 = vunpack.c.l.b16 %v494
        %v780 = vunpack.c.h.b16 %v494
        %v781 = vunpack.c.l.b16 %v495
        %v782 = vunpack.c.h.b16 %v495
        %v783 = vunpack.c.l.b16 %v496
        %v784 = vunpack.c.h.b16 %v496
        %v785 = vunpack.c.l.b16 %v497
        %v786 = vunpack.c.h.b16 %v497
        %v787 = vunpack.c.l.b16 %v498
        %v788 = vunpack.c.h.b16 %v498
        %v789 = vunpack.c.l.b16 %v499
        %v790 = vunpack.c.h.b16 %v499
        %v791 = vunpack.c.l.b16 %v500
        %v792 = vunpack.c.h.b16 %v500
        %v793 = vunpack.c.l.b16 %v501
        %v794 = vunpack.c.h.b16 %v501
        %v795 = vunpack.c.l.b16 %v502
        %v796 = vunpack.c.h.b16 %v502
        %v797 = vunpack.c.l.b16 %v503
        %v798 = vunpack.c.h.b16 %v503
        %v799 = vunpack.c.l.b16 %v504
        %v800 = vunpack.c.h.b16 %v504
        %v801 = vunpack.c.l.b16 %v505
        %v802 = vunpack.c.h.b16 %v505
        %v803 = vunpack.c.l.b16 %v506
        %v804 = vunpack.c.h.b16 %v506
        %v805 = vunpack.c.l.b16 %v507
        %v806 = vunpack.c.h.b16 %v507
        %v807 = vunpack.c.l.b16 %v508
        %v808 = vunpack.c.h.b16 %v508
        %v809 = vunpack.c.l.b16 %v509
        %v810 = vunpack.c.h.b16 %v509
        %v811 = vunpack.c.l.b16 %v510
        %v812 = vunpack.c.h.b16 %v510
        %v813 = vunpack.c.l.b16 %v511
        %v814 = vunpack.c.h.b16 %v511
        %v815 = vunpack.c.l.b16 %v512
        %v816 = vunpack.c.h.b16 %v512
        %v817 = vunpack.c.l.b16 %v513
        %v818 = vunpack.c.h.b16 %v513
        %v819 = vunpack.c.l.b16 %v514
        %v820 = vunpack.c.h.b16 %v514
        %v821 = vunpack.c.l.b16 %v515
        %v822 = vunpack.c.h.b16 %v515
        %v823 = vunpack.c.l.b16 %v516
        %v824 = vunpack.c.h.b16 %v516
        %v825 = vunpack.c.l.b16 %v517
        %v826 = vunpack.c.h.b16 %v517
        %v827 = vpack.c.b16 %v637, %v635
        %v828 = vpack.c.b16 %v638, %v636
        %v829 = vpack.c.b16 %v641, %v639
        %v830 = vpack.c.b16 %v642, %v640
        %v831 = vpack.c.b16 %v645, %v643
        %v832 = vpack.c.b16 %v646, %v644
        %v833 = vpack.c.b16 %v649, %v647
        %v834 = vpack.c.b16 %v650, %v648
        %v835 = vpack.c.b16 %v653, %v651
        %v836 = vpack.c.b16 %v654, %v652
        %v837 = vpack.c.b16 %v657, %v655
        %v838 = vpack.c.b16 %v658, %v656
        %v839 = vpack.c.b16 %v661, %v659
        %v840 = vpack.c.b16 %v662, %v660
        %v841 = vpack.c.b16 %v665, %v663
        %v842 = vpack.c.b16 %v666, %v664
        %v843 = vpack.c.b16 %v669, %v667
        %v844 = vpack.c.b16 %v670, %v668
        %v845 = vpack.c.b16 %v673, %v671
        %v846 = vpack.c.b16 %v674, %v672
        %v847 = vpack.c.b16 %v677, %v675
        %v848 = vpack.c.b16 %v678, %v676
        %v849 = vpack.c.b16 %v681, %v679
        %v850 = vpack.c.b16 %v682, %v680
        %v851 = vpack.c.b16 %v685, %v683
        %v852 = vpack.c.b16 %v686, %v684
        %v853 = vpack.c.b16 %v689, %v687
        %v854 = vpack.c.b16 %v690, %v688
        %v855 = vpack.c.b16 %v693, %v691
        %v856 = vpack.c.b16 %v694, %v692
        %v857 = vpack.c.b16 %v697, %v695
        %v858 = vpack.c.b16 %v698, %v696
        %v859 = vpack.c.b16 %v701, %v699
        %v860 = vpack.c.b16 %v702, %v700
        %v861 = vpack.c.b16 %v705, %v703
        %v862 = vpack.c.b16 %v706, %v704
        %v863 = vpack.c.b16 %v709, %v707
        %v864 = vpack.c.b16 %v710, %v708
        %v865 = vpack.c.b16 %v713, %v711
        %v866 = vpack.c.b16 %v714, %v712
        %v867 = vpack.c.b16 %v717, %v715
        %v868 = vpack.c.b16 %v718, %v716
        %v869 = vpack.c.b16 %v721, %v719
        %v870 = vpack.c.b16 %v722, %v720
        %v871 = vpack.c.b16 %v725, %v723
        %v872 = vpack.c.b16 %v726, %v724
        %v873 = vpack.c.b16 %v729, %v727
        %v874 = vpack.c.b16 %v730, %v728
        %v875 = vpack.c.b16 %v733, %v731
        %v876 = vpack.c.b16 %v734, %v732
        %v877 = vpack.c.b16 %v737, %v735
        %v878 = vpack.c.b16 %v738, %v736
        %v879 = vpack.c.b16 %v741, %v739
        %v880 = vpack.c.b16 %v742, %v740
        %v881 = vpack.c.b16 %v745, %v743
        %v882 = vpack.c.b16 %v746, %v744
        %v883 = vpack.c.b16 %v749, %v747
        %v884 = vpack.c.b16 %v750, %v748
        %v885 = vpack.c.b16 %v753, %v751
        %v886 = vpack.c.b16 %v754, %v752
        %v887 = vpack.c.b16 %v757, %v755
        %v888 = vpack.c.b16 %v758, %v756
        %v889 = vpack.c.b16 %v761, %v759
        %v890 = vpack.c.b16 %v762, %v760
        %v891 = vpack.c.b16 %v765, %v763
        %v892 = vpack.c.b16 %v766, %v764
        %v893 = vpack.c.b16 %v769, %v767
        %v894 = vpack.c.b16 %v770, %v768
        %v895 = vpack.c.b16 %v773, %v771
        %v896 = vpack.c.b16 %v774, %v772
        %v897 = vpack.c.b16 %v777, %v775
        %v898 = vpack.c.b16 %v778, %v776
        %v899 = vpack.c.b16 %v781, %v779
        %v900 = vpack.c.b16 %v782, %v780
        %v901 = vpack.c.b16 %v785, %v783
        %v902 = vpack.c.b16 %v786, %v784
        %v903 = vpack.c.b16 %v789, %v787
        %v904 = vpack.c.b16 %v790, %v788
        %v905 = vpack.c.b16 %v793, %v791
        %v906 = vpack.c.b16 %v794, %v792
        %v907 = vpack.c.b16 %v797, %v795
        %v908 = vpack.c.b16 %v798, %v796
        %v909 = vpack.c.b16 %v801, %v799
        %v910 = vpack.c.b16 %v802, %v800
        %v911 = vpack.c.b16 %v805, %v803
        %v912 = vpack.c.b16 %v806, %v804
        %v913 = vpack.c.b16 %v809, %v807
        %v914 = vpack.c.b16 %v810, %v808
        %v915 = vpack.c.b16 %v813, %v811
        %v916 = vpack.c.b16 %v814, %v812
        %v917 = vpack.c.b16 %v817, %v815
        %v918 = vpack.c.b16 %v818, %v816
        %v919 = vpack.c.b16 %v821, %v819
        %v920 = vpack.c.b16 %v822, %v820
        %v921 = vpack.c.b16 %v825, %v823
        %v922 = vpack.c.b16 %v826, %v824
        %1019 = vmatpush.bf16.msra.mxu0 %v841
        %1020 = vmatpush.bf16.msra.mxu0 %v839
        %1021 = vmatpush.bf16.msra.mxu0 %v837
        %1022 = vmatpush.bf16.msra.mxu0 %v835
        %1023 = vmatpush.bf16.msra.mxu0 %v833
        %1024 = vmatpush.bf16.msra.mxu0 %v831
        %1025 = vmatpush.bf16.msra.mxu0 %v829
        %1026 = vmatpush.bf16.msra.mxu0 %v827
        %1027 = vmatmul.bf16.gmra.mxu0 %v527
        %v1028 = vpop.f32.mrf.mxu0
        %v1029 = vadd.f32 0.0, %v1028
        %v1030 = vpop.f32.mrf.mxu0
        %1031 = vdwg.mxu0
        %1032 = vmatpush.bf16.msra.mxu0 %v857
        %1033 = vmatpush.bf16.msra.mxu0 %v855
        %1034 = vmatpush.bf16.msra.mxu0 %v853
        %1035 = vmatpush.bf16.msra.mxu0 %v851
        %1036 = vmatpush.bf16.msra.mxu0 %v849
        %1037 = vmatpush.bf16.msra.mxu0 %v847
        %1038 = vmatpush.bf16.msra.mxu0 %v845
        %1039 = vmatpush.bf16.msra.mxu0 %v843
        %1040 = vmatmul.bf16.gmra.mxu0 %v528
        %v1041 = vpop.f32.mrf.mxu0
        %v1042 = vadd.f32 %v1029, %v1041
        %v1043 = vpop.f32.mrf.mxu0
        %1044 = vdwg.mxu0
        %1045 = vmatpush.bf16.msra.mxu0 %v873
        %1046 = vmatpush.bf16.msra.mxu0 %v871
        %1047 = vmatpush.bf16.msra.mxu0 %v869
        %1048 = vmatpush.bf16.msra.mxu0 %v867
        %1049 = vmatpush.bf16.msra.mxu0 %v865
        %1050 = vmatpush.bf16.msra.mxu0 %v863
        %1051 = vmatpush.bf16.msra.mxu0 %v861
        %1052 = vmatpush.bf16.msra.mxu0 %v859
        %1053 = vmatmul.bf16.gmra.mxu0 %v529
        %v1054 = vpop.f32.mrf.mxu0
        %v1055 = vadd.f32 %v1042, %v1054
        %v1056 = vpop.f32.mrf.mxu0
        %1057 = vdwg.mxu0
        %1058 = vmatpush.bf16.msra.mxu0 %v889
        %1059 = vmatpush.bf16.msra.mxu0 %v887
        %1060 = vmatpush.bf16.msra.mxu0 %v885
        %1061 = vmatpush.bf16.msra.mxu0 %v883
        %1062 = vmatpush.bf16.msra.mxu0 %v881
        %1063 = vmatpush.bf16.msra.mxu0 %v879
        %1064 = vmatpush.bf16.msra.mxu0 %v877
        %1065 = vmatpush.bf16.msra.mxu0 %v875
        %1066 = vmatmul.bf16.gmra.mxu0 %v530
        %v1067 = vpop.f32.mrf.mxu0
        %v1068 = vadd.f32 %v1055, %v1067
        %v1069 = vpop.f32.mrf.mxu0
        %1070 = vdwg.mxu0
        %1071 = vmatpush.bf16.msra.mxu0 %v905
        %1072 = vmatpush.bf16.msra.mxu0 %v903
        %1073 = vmatpush.bf16.msra.mxu0 %v901
        %1074 = vmatpush.bf16.msra.mxu0 %v899
        %1075 = vmatpush.bf16.msra.mxu0 %v897
        %1076 = vmatpush.bf16.msra.mxu0 %v895
        %1077 = vmatpush.bf16.msra.mxu0 %v893
        %1078 = vmatpush.bf16.msra.mxu0 %v891
        %1079 = vmatmul.bf16.gmra.mxu0 %v531
        %v1080 = vpop.f32.mrf.mxu0
        %v1081 = vadd.f32 %v1068, %v1080
        %v1082 = vpop.f32.mrf.mxu0
        %1083 = vdwg.mxu0
        %1084 = vmatpush.bf16.msra.mxu0 %v921
        %1085 = vmatpush.bf16.msra.mxu0 %v919
        %1086 = vmatpush.bf16.msra.mxu0 %v917
        %1087 = vmatpush.bf16.msra.mxu0 %v915
        %1088 = vmatpush.bf16.msra.mxu0 %v913
        %1089 = vmatpush.bf16.msra.mxu0 %v911
        %1090 = vmatpush.bf16.msra.mxu0 %v909
        %1091 = vmatpush.bf16.msra.mxu0 %v907
        %1092 = vmatmul.bf16.gmra.mxu0 %v532
        %v1093 = vpop.f32.mrf.mxu0
        %v1094 = vadd.f32 %v1081, %v1093
        %v1095 = vpop.f32.mrf.mxu0
        %1096 = vdwg.mxu0
        %1097 = vmatpush.bf16.msra.mxu0 %v842
        %1098 = vmatpush.bf16.msra.mxu0 %v840
        %1099 = vmatpush.bf16.msra.mxu0 %v838
        %1100 = vmatpush.bf16.msra.mxu0 %v836
        %1101 = vmatpush.bf16.msra.mxu0 %v834
        %1102 = vmatpush.bf16.msra.mxu0 %v832
        %1103 = vmatpush.bf16.msra.mxu0 %v830
        %1104 = vmatpush.bf16.msra.mxu0 %v828
        %1105 = vmatmul.bf16.gmra.mxu0 %v527
        %v1106 = vpop.f32.mrf.mxu0
        %v1107 = vadd.f32 0.0, %v1106
        %v1108 = vpop.f32.mrf.mxu0
        %1109 = vdwg.mxu0
        %1110 = vmatpush.bf16.msra.mxu0 %v858
        %1111 = vmatpush.bf16.msra.mxu0 %v856
        %1112 = vmatpush.bf16.msra.mxu0 %v854
        %1113 = vmatpush.bf16.msra.mxu0 %v852
        %1114 = vmatpush.bf16.msra.mxu0 %v850
        %1115 = vmatpush.bf16.msra.mxu0 %v848
        %1116 = vmatpush.bf16.msra.mxu0 %v846
        %1117 = vmatpush.bf16.msra.mxu0 %v844
        %1118 = vmatmul.bf16.gmra.mxu0 %v528
        %v1119 = vpop.f32.mrf.mxu0
        %v1120 = vadd.f32 %v1107, %v1119
        %v1121 = vpop.f32.mrf.mxu0
        %1122 = vdwg.mxu0
        %1123 = vmatpush.bf16.msra.mxu0 %v874
        %1124 = vmatpush.bf16.msra.mxu0 %v872
        %1125 = vmatpush.bf16.msra.mxu0 %v870
        %1126 = vmatpush.bf16.msra.mxu0 %v868
        %1127 = vmatpush.bf16.msra.mxu0 %v866
        %1128 = vmatpush.bf16.msra.mxu0 %v864
        %1129 = vmatpush.bf16.msra.mxu0 %v862
        %1130 = vmatpush.bf16.msra.mxu0 %v860
        %1131 = vmatmul.bf16.gmra.mxu0 %v529
        %v1132 = vpop.f32.mrf.mxu0
        %v1133 = vadd.f32 %v1120, %v1132
        %v1134 = vpop.f32.mrf.mxu0
        %1135 = vdwg.mxu0
        %1136 = vmatpush.bf16.msra.mxu0 %v890
        %1137 = vmatpush.bf16.msra.mxu0 %v888
        %1138 = vmatpush.bf16.msra.mxu0 %v886
        %1139 = vmatpush.bf16.msra.mxu0 %v884
        %1140 = vmatpush.bf16.msra.mxu0 %v882
        %1141 = vmatpush.bf16.msra.mxu0 %v880
        %1142 = vmatpush.bf16.msra.mxu0 %v878
        %1143 = vmatpush.bf16.msra.mxu0 %v876
        %1144 = vmatmul.bf16.gmra.mxu0 %v530
        %v1145 = vpop.f32.mrf.mxu0
        %v1146 = vadd.f32 %v1133, %v1145
        %v1147 = vpop.f32.mrf.mxu0
        %1148 = vdwg.mxu0
        %1149 = vmatpush.bf16.msra.mxu0 %v906
        %1150 = vmatpush.bf16.msra.mxu0 %v904
        %1151 = vmatpush.bf16.msra.mxu0 %v902
        %1152 = vmatpush.bf16.msra.mxu0 %v900
        %1153 = vmatpush.bf16.msra.mxu0 %v898
        %1154 = vmatpush.bf16.msra.mxu0 %v896
        %1155 = vmatpush.bf16.msra.mxu0 %v894
        %1156 = vmatpush.bf16.msra.mxu0 %v892
        %1157 = vmatmul.bf16.gmra.mxu0 %v531
        %v1158 = vpop.f32.mrf.mxu0
        %v1159 = vadd.f32 %v1146, %v1158
        %v1160 = vpop.f32.mrf.mxu0
        %1161 = vdwg.mxu0
        %1162 = vmatpush.bf16.msra.mxu0 %v922
        %1163 = vmatpush.bf16.msra.mxu0 %v920
        %1164 = vmatpush.bf16.msra.mxu0 %v918
        %1165 = vmatpush.bf16.msra.mxu0 %v916
        %1166 = vmatpush.bf16.msra.mxu0 %v914
        %1167 = vmatpush.bf16.msra.mxu0 %v912
        %1168 = vmatpush.bf16.msra.mxu0 %v910
        %1169 = vmatpush.bf16.msra.mxu0 %v908
        %1170 = vmatmul.bf16.gmra.mxu0 %v532
        %v1171 = vpop.f32.mrf.mxu0
        %v1172 = vadd.f32 %v1159, %v1171
        %v1173 = vpop.f32.mrf.mxu0
        %1174 = vdwg.mxu0
        %v1175 = vmul.f32 %v1094, %v1094
        %v1176 = vmul.f32 %v1172, %v1172
        %v1177 = vadd.f32 %v1175, %v1176
        %1178 = vadd.xlane.f32.xlu0 %v1177
        %v1179 = vpop.xlane.xlu0 %1178
        %v1180 = vmax.f32 %v1179, 1e-24
        %v1181 = vrsqrt.pop %v1180
        %v1182 = vmul.f32 %v1181, %v1180
        %v1183 = vmul.f32 %v1182, %v1181
        %v1184 = vmul.f32 0.5, %v1183
        %v1185 = vsub.f32 1.5, %v1184
        %v1186 = vmul.f32 %v1181, %v1185
        %vm1187 = vweird.f32 %v1180
        %vm1188 = vweird.f32 %v1181
        %vm1189 = vmor %vm1187, %vm1188
        %v1190 = vsel %vm1189, %v1181, %v1186
        %v1191 = vmul.f32 %v1094, %v1190
        %v1192 = vmul.f32 %v1172, %v1190
        %v1193 = vpack.c.bf16 %v1191, %v1191
        %v1194 = vpack.c.bf16 %v1192, %v1192
        %v1195 = vld [vmem:[%s2] sm:$0xff]
        %v1196 = vld [vmem:[%s2 + $0x8] sm:$0xff]
        %v1197 = vld [vmem:[%s2 + $0x10] sm:$0xff]
        %v1198 = vld [vmem:[%s2 + $0x18] sm:$0xff]
        %v1199 = vld [vmem:[%s2 + $0x20] sm:$0xff]
        %v1200 = vld [vmem:[%s2 + $0x28] sm:$0xff]
        %v1201 = vld [vmem:[%s2 + $0x30] sm:$0xff]
        %v1202 = vld [vmem:[%s2 + $0x38] sm:$0xff]
        %v1203 = vld [vmem:[%s2 + $0x40] sm:$0xff]
        %v1204 = vld [vmem:[%s2 + $0x48] sm:$0xff]
        %v1205 = vld [vmem:[%s2 + $0x50] sm:$0xff]
        %v1206 = vld [vmem:[%s2 + $0x58] sm:$0xff]
        %v1207 = vld [vmem:[%s2 + $0x60] sm:$0xff]
        %v1208 = vld [vmem:[%s2 + $0x68] sm:$0xff]
        %v1209 = vld [vmem:[%s2 + $0x70] sm:$0xff]
        %v1210 = vld [vmem:[%s2 + $0x78] sm:$0xff]
        %v1211 = vld [vmem:[%s2 + $0x80] sm:$0xff]
        %v1212 = vld [vmem:[%s2 + $0x88] sm:$0xff]
        %v1213 = vld [vmem:[%s2 + $0x90] sm:$0xff]
        %v1214 = vld [vmem:[%s2 + $0x98] sm:$0xff]
        %v1215 = vld [vmem:[%s2 + $0xa0] sm:$0xff]
        %v1216 = vld [vmem:[%s2 + $0xa8] sm:$0xff]
        %v1217 = vld [vmem:[%s2 + $0xb0] sm:$0xff]
        %v1218 = vld [vmem:[%s2 + $0xb8] sm:$0xff]
        %v1219 = vld [vmem:[%s2 + $0xc0] sm:$0xff]
        %v1220 = vld [vmem:[%s2 + $0xc8] sm:$0xff]
        %v1221 = vld [vmem:[%s2 + $0xd0] sm:$0xff]
        %v1222 = vld [vmem:[%s2 + $0xd8] sm:$0xff]
        %v1223 = vld [vmem:[%s2 + $0xe0] sm:$0xff]
        %v1224 = vld [vmem:[%s2 + $0xe8] sm:$0xff]
        %v1225 = vld [vmem:[%s2 + $0xf0] sm:$0xff]
        %v1226 = vld [vmem:[%s2 + $0xf8] sm:$0xff]
        %v1259 = vunpack.c.l.b16 %v1195
        %v1260 = vunpack.c.h.b16 %v1195
        %v1261 = vunpack.c.l.b16 %v1196
        %v1262 = vunpack.c.h.b16 %v1196
        %v1263 = vunpack.c.l.b16 %v1197
        %v1264 = vunpack.c.h.b16 %v1197
        %v1265 = vunpack.c.l.b16 %v1198
        %v1266 = vunpack.c.h.b16 %v1198
        %v1267 = vunpack.c.l.b16 %v1199
        %v1268 = vunpack.c.h.b16 %v1199
        %v1269 = vunpack.c.l.b16 %v1200
        %v1270 = vunpack.c.h.b16 %v1200
        %v1271 = vunpack.c.l.b16 %v1201
        %v1272 = vunpack.c.h.b16 %v1201
        %v1273 = vunpack.c.l.b16 %v1202
        %v1274 = vunpack.c.h.b16 %v1202
        %v1275 = vunpack.c.l.b16 %v1203
        %v1276 = vunpack.c.h.b16 %v1203
        %v1277 = vunpack.c.l.b16 %v1204
        %v1278 = vunpack.c.h.b16 %v1204
        %v1279 = vunpack.c.l.b16 %v1205
        %v1280 = vunpack.c.h.b16 %v1205
        %v1281 = vunpack.c.l.b16 %v1206
        %v1282 = vunpack.c.h.b16 %v1206
        %v1283 = vunpack.c.l.b16 %v1207
        %v1284 = vunpack.c.h.b16 %v1207
        %v1285 = vunpack.c.l.b16 %v1208
        %v1286 = vunpack.c.h.b16 %v1208
        %v1287 = vunpack.c.l.b16 %v1209
        %v1288 = vunpack.c.h.b16 %v1209
        %v1289 = vunpack.c.l.b16 %v1210
        %v1290 = vunpack.c.h.b16 %v1210
        %v1291 = vunpack.c.l.b16 %v1211
        %v1292 = vunpack.c.h.b16 %v1211
        %v1293 = vunpack.c.l.b16 %v1212
        %v1294 = vunpack.c.h.b16 %v1212
        %v1295 = vunpack.c.l.b16 %v1213
        %v1296 = vunpack.c.h.b16 %v1213
        %v1297 = vunpack.c.l.b16 %v1214
        %v1298 = vunpack.c.h.b16 %v1214
        %v1299 = vunpack.c.l.b16 %v1215
        %v1300 = vunpack.c.h.b16 %v1215
        %v1301 = vunpack.c.l.b16 %v1216
        %v1302 = vunpack.c.h.b16 %v1216
        %v1303 = vunpack.c.l.b16 %v1217
        %v1304 = vunpack.c.h.b16 %v1217
        %v1305 = vunpack.c.l.b16 %v1218
        %v1306 = vunpack.c.h.b16 %v1218
        %v1307 = vunpack.c.l.b16 %v1219
        %v1308 = vunpack.c.h.b16 %v1219
        %v1309 = vunpack.c.l.b16 %v1220
        %v1310 = vunpack.c.h.b16 %v1220
        %v1311 = vunpack.c.l.b16 %v1221
        %v1312 = vunpack.c.h.b16 %v1221
        %v1313 = vunpack.c.l.b16 %v1222
        %v1314 = vunpack.c.h.b16 %v1222
        %v1315 = vunpack.c.l.b16 %v1223
        %v1316 = vunpack.c.h.b16 %v1223
        %v1317 = vunpack.c.l.b16 %v1224
        %v1318 = vunpack.c.h.b16 %v1224
        %v1319 = vunpack.c.l.b16 %v1225
        %v1320 = vunpack.c.h.b16 %v1225
        %v1321 = vunpack.c.l.b16 %v1226
        %v1322 = vunpack.c.h.b16 %v1226
        %v1323 = vpack.c.b16 %v1261, %v1259
        %v1324 = vpack.c.b16 %v1262, %v1260
        %v1325 = vpack.c.b16 %v1265, %v1263
        %v1326 = vpack.c.b16 %v1266, %v1264
        %v1327 = vpack.c.b16 %v1269, %v1267
        %v1328 = vpack.c.b16 %v1270, %v1268
        %v1329 = vpack.c.b16 %v1273, %v1271
        %v1330 = vpack.c.b16 %v1274, %v1272
        %v1331 = vpack.c.b16 %v1277, %v1275
        %v1332 = vpack.c.b16 %v1278, %v1276
        %v1333 = vpack.c.b16 %v1281, %v1279
        %v1334 = vpack.c.b16 %v1282, %v1280
        %v1335 = vpack.c.b16 %v1285, %v1283
        %v1336 = vpack.c.b16 %v1286, %v1284
        %v1337 = vpack.c.b16 %v1289, %v1287
        %v1338 = vpack.c.b16 %v1290, %v1288
        %v1339 = vpack.c.b16 %v1293, %v1291
        %v1340 = vpack.c.b16 %v1294, %v1292
        %v1341 = vpack.c.b16 %v1297, %v1295
        %v1342 = vpack.c.b16 %v1298, %v1296
        %v1343 = vpack.c.b16 %v1301, %v1299
        %v1344 = vpack.c.b16 %v1302, %v1300
        %v1345 = vpack.c.b16 %v1305, %v1303
        %v1346 = vpack.c.b16 %v1306, %v1304
        %v1347 = vpack.c.b16 %v1309, %v1307
        %v1348 = vpack.c.b16 %v1310, %v1308
        %v1349 = vpack.c.b16 %v1313, %v1311
        %v1350 = vpack.c.b16 %v1314, %v1312
        %v1351 = vpack.c.b16 %v1317, %v1315
        %v1352 = vpack.c.b16 %v1318, %v1316
        %v1353 = vpack.c.b16 %v1321, %v1319
        %v1354 = vpack.c.b16 %v1322, %v1320
        %1387 = vmatpush.bf16.msra.mxu0 %v1337
        %1388 = vmatpush.bf16.msra.mxu0 %v1335
        %1389 = vmatpush.bf16.msra.mxu0 %v1333
        %1390 = vmatpush.bf16.msra.mxu0 %v1331
        %1391 = vmatpush.bf16.msra.mxu0 %v1329
        %1392 = vmatpush.bf16.msra.mxu0 %v1327
        %1393 = vmatpush.bf16.msra.mxu0 %v1325
        %1394 = vmatpush.bf16.msra.mxu0 %v1323
        %1395 = vmatmul.bf16.gmra.mxu0 %v1193
        %v1396 = vpop.f32.mrf.mxu0
        %v1397 = vadd.f32 0.0, %v1396
        %v1398 = vpop.f32.mrf.mxu0
        %1399 = vdwg.mxu0
        %1400 = vmatpush.bf16.msra.mxu0 %v1353
        %1401 = vmatpush.bf16.msra.mxu0 %v1351
        %1402 = vmatpush.bf16.msra.mxu0 %v1349
        %1403 = vmatpush.bf16.msra.mxu0 %v1347
        %1404 = vmatpush.bf16.msra.mxu0 %v1345
        %1405 = vmatpush.bf16.msra.mxu0 %v1343
        %1406 = vmatpush.bf16.msra.mxu0 %v1341
        %1407 = vmatpush.bf16.msra.mxu0 %v1339
        %1408 = vmatmul.bf16.gmra.mxu0 %v1194
        %v1409 = vpop.f32.mrf.mxu0
        %v1410 = vadd.f32 %v1397, %v1409
        %v1411 = vpop.f32.mrf.mxu0
        %1412 = vdwg.mxu0
        %1413 = vmatpush.bf16.msra.mxu0 %v1338
        %1414 = vmatpush.bf16.msra.mxu0 %v1336
        %1415 = vmatpush.bf16.msra.mxu0 %v1334
        %1416 = vmatpush.bf16.msra.mxu0 %v1332
        %1417 = vmatpush.bf16.msra.mxu0 %v1330
        %1418 = vmatpush.bf16.msra.mxu0 %v1328
        %1419 = vmatpush.bf16.msra.mxu0 %v1326
        %1420 = vmatpush.bf16.msra.mxu0 %v1324
        %1421 = vmatmul.bf16.gmra.mxu0 %v1193
        %v1422 = vpop.f32.mrf.mxu0
        %v1423 = vadd.f32 0.0, %v1422
        %v1424 = vpop.f32.mrf.mxu0
        %1425 = vdwg.mxu0
        %1426 = vmatpush.bf16.msra.mxu0 %v1354
        %1427 = vmatpush.bf16.msra.mxu0 %v1352
        %1428 = vmatpush.bf16.msra.mxu0 %v1350
        %1429 = vmatpush.bf16.msra.mxu0 %v1348
        %1430 = vmatpush.bf16.msra.mxu0 %v1346
        %1431 = vmatpush.bf16.msra.mxu0 %v1344
        %1432 = vmatpush.bf16.msra.mxu0 %v1342
        %1433 = vmatpush.bf16.msra.mxu0 %v1340
        %1434 = vmatmul.bf16.gmra.mxu0 %v1194
        %v1435 = vpop.f32.mrf.mxu0
        %v1436 = vadd.f32 %v1423, %v1435
        %v1437 = vpop.f32.mrf.mxu0
        %1438 = vdwg.mxu0
        %v1439 = vrot.slane %v1410, 4
        %v1440 = vadd.f32 %v1410, %v1439
        %v1441 = vrot.slane %v1440, 2
        %v1442 = vadd.f32 %v1440, %v1441
        %v1443 = vrot.slane %v1442, 1
        %v1444 = vadd.f32 %v1442, %v1443
        %v1445 = vrot.slane %v1436, 4
        %v1446 = vadd.f32 %v1436, %v1445
        %v1447 = vrot.slane %v1446, 2
        %v1448 = vadd.f32 %v1446, %v1447
        %v1449 = vrot.slane %v1448, 1
        %v1450 = vadd.f32 %v1448, %v1449
        %v1451 = vrcp.pop 8.0
        %v1452 = vmul.f32 8.0, %v1451
        %v1453 = vsub.f32 1.0, %v1452
        %v1454 = vmul.f32 %v1451, %v1453
        %v1455 = vadd.f32 %v1451, %v1454
        %vm1456 = vweird.f32 %v1451
        %v1457 = vsel %vm1456, %v1451, %v1455
        %v1458 = vmul.f32 %v1444, %v1457
        %v1459 = vmul.f32 %v1450, %v1457
        %v1460 = vsub.f32 %v1410, %v1458
        %v1461 = vsub.f32 %v1436, %v1459
        %v1462 = vmul.f32 %v1460, %v1460
        %v1463 = vmul.f32 %v1461, %v1461
        %v1464 = vrot.slane %v1462, 4
        %v1465 = vadd.f32 %v1462, %v1464
        %v1466 = vrot.slane %v1465, 2
        %v1467 = vadd.f32 %v1465, %v1466
        %v1468 = vrot.slane %v1467, 1
        %v1469 = vadd.f32 %v1467, %v1468
        %v1470 = vrot.slane %v1463, 4
        %v1471 = vadd.f32 %v1463, %v1470
        %v1472 = vrot.slane %v1471, 2
        %v1473 = vadd.f32 %v1471, %v1472
        %v1474 = vrot.slane %v1473, 1
        %v1475 = vadd.f32 %v1473, %v1474
        %v1476 = vmul.f32 %v1469, %v1457
        %v1477 = vmul.f32 %v1475, %v1457
        %v1478 = vadd.f32 %v1476, 1e-05
        %v1479 = vadd.f32 %v1477, 1e-05
        %v1480 = vrsqrt.pop %v1478
        %v1481 = vmul.f32 %v1480, %v1478
        %v1482 = vmul.f32 %v1481, %v1480
        %v1483 = vmul.f32 0.5, %v1482
        %v1484 = vsub.f32 1.5, %v1483
        %v1485 = vmul.f32 %v1480, %v1484
        %vm1486 = vweird.f32 %v1478
        %vm1487 = vweird.f32 %v1480
        %vm1488 = vmor %vm1486, %vm1487
        %v1489 = vsel %vm1488, %v1480, %v1485
        %v1490 = vrsqrt.pop %v1479
        %v1491 = vmul.f32 %v1490, %v1479
        %v1492 = vmul.f32 %v1491, %v1490
        %v1493 = vmul.f32 0.5, %v1492
        %v1494 = vsub.f32 1.5, %v1493
        %v1495 = vmul.f32 %v1490, %v1494
        %vm1496 = vweird.f32 %v1479
        %vm1497 = vweird.f32 %v1490
        %vm1498 = vmor %vm1496, %vm1497
        %v1499 = vsel %vm1498, %v1490, %v1495
        %v1500 = vmul.f32 %v1460, %v1489
        %v1501 = vmul.f32 %v1461, %v1499
        %v1502 = vmax.f32 %v1500, 0.0
        %v1503 = vmax.f32 %v1501, 0.0
        %v1504 = vpack.c.bf16 %v1502, %v1502
        %v1505 = vpack.c.bf16 %v1503, %v1503
        %v1506 = vld [vmem:[%s3] sm:$0xff]
        %v1507 = vld [vmem:[%s3 + $0x8] sm:$0xff]
        %v1508 = vld [vmem:[%s3 + $0x10] sm:$0xff]
        %v1509 = vld [vmem:[%s3 + $0x18] sm:$0xff]
        %v1510 = vld [vmem:[%s3 + $0x20] sm:$0xff]
        %v1511 = vld [vmem:[%s3 + $0x28] sm:$0xff]
        %v1512 = vld [vmem:[%s3 + $0x30] sm:$0xff]
        %v1513 = vld [vmem:[%s3 + $0x38] sm:$0xff]
        %v1514 = vld [vmem:[%s3 + $0x40] sm:$0xff]
        %v1515 = vld [vmem:[%s3 + $0x48] sm:$0xff]
        %v1516 = vld [vmem:[%s3 + $0x50] sm:$0xff]
        %v1517 = vld [vmem:[%s3 + $0x58] sm:$0xff]
        %v1518 = vld [vmem:[%s3 + $0x60] sm:$0xff]
        %v1519 = vld [vmem:[%s3 + $0x68] sm:$0xff]
        %v1520 = vld [vmem:[%s3 + $0x70] sm:$0xff]
        %v1521 = vld [vmem:[%s3 + $0x78] sm:$0xff]
        %v1522 = vld [vmem:[%s3 + $0x80] sm:$0xff]
        %v1523 = vld [vmem:[%s3 + $0x88] sm:$0xff]
        %v1524 = vld [vmem:[%s3 + $0x90] sm:$0xff]
        %v1525 = vld [vmem:[%s3 + $0x98] sm:$0xff]
        %v1526 = vld [vmem:[%s3 + $0xa0] sm:$0xff]
        %v1527 = vld [vmem:[%s3 + $0xa8] sm:$0xff]
        %v1528 = vld [vmem:[%s3 + $0xb0] sm:$0xff]
        %v1529 = vld [vmem:[%s3 + $0xb8] sm:$0xff]
        %v1530 = vld [vmem:[%s3 + $0xc0] sm:$0xff]
        %v1531 = vld [vmem:[%s3 + $0xc8] sm:$0xff]
        %v1532 = vld [vmem:[%s3 + $0xd0] sm:$0xff]
        %v1533 = vld [vmem:[%s3 + $0xd8] sm:$0xff]
        %v1534 = vld [vmem:[%s3 + $0xe0] sm:$0xff]
        %v1535 = vld [vmem:[%s3 + $0xe8] sm:$0xff]
        %v1536 = vld [vmem:[%s3 + $0xf0] sm:$0xff]
        %v1537 = vld [vmem:[%s3 + $0xf8] sm:$0xff]
        %v1570 = vunpack.c.l.b16 %v1506
        %v1571 = vunpack.c.h.b16 %v1506
        %v1572 = vunpack.c.l.b16 %v1507
        %v1573 = vunpack.c.h.b16 %v1507
        %v1574 = vunpack.c.l.b16 %v1508
        %v1575 = vunpack.c.h.b16 %v1508
        %v1576 = vunpack.c.l.b16 %v1509
        %v1577 = vunpack.c.h.b16 %v1509
        %v1578 = vunpack.c.l.b16 %v1510
        %v1579 = vunpack.c.h.b16 %v1510
        %v1580 = vunpack.c.l.b16 %v1511
        %v1581 = vunpack.c.h.b16 %v1511
        %v1582 = vunpack.c.l.b16 %v1512
        %v1583 = vunpack.c.h.b16 %v1512
        %v1584 = vunpack.c.l.b16 %v1513
        %v1585 = vunpack.c.h.b16 %v1513
        %v1586 = vunpack.c.l.b16 %v1514
        %v1587 = vunpack.c.h.b16 %v1514
        %v1588 = vunpack.c.l.b16 %v1515
        %v1589 = vunpack.c.h.b16 %v1515
        %v1590 = vunpack.c.l.b16 %v1516
        %v1591 = vunpack.c.h.b16 %v1516
        %v1592 = vunpack.c.l.b16 %v1517
        %v1593 = vunpack.c.h.b16 %v1517
        %v1594 = vunpack.c.l.b16 %v1518
        %v1595 = vunpack.c.h.b16 %v1518
        %v1596 = vunpack.c.l.b16 %v1519
        %v1597 = vunpack.c.h.b16 %v1519
        %v1598 = vunpack.c.l.b16 %v1520
        %v1599 = vunpack.c.h.b16 %v1520
        %v1600 = vunpack.c.l.b16 %v1521
        %v1601 = vunpack.c.h.b16 %v1521
        %v1602 = vunpack.c.l.b16 %v1522
        %v1603 = vunpack.c.h.b16 %v1522
        %v1604 = vunpack.c.l.b16 %v1523
        %v1605 = vunpack.c.h.b16 %v1523
        %v1606 = vunpack.c.l.b16 %v1524
        %v1607 = vunpack.c.h.b16 %v1524
        %v1608 = vunpack.c.l.b16 %v1525
        %v1609 = vunpack.c.h.b16 %v1525
        %v1610 = vunpack.c.l.b16 %v1526
        %v1611 = vunpack.c.h.b16 %v1526
        %v1612 = vunpack.c.l.b16 %v1527
        %v1613 = vunpack.c.h.b16 %v1527
        %v1614 = vunpack.c.l.b16 %v1528
        %v1615 = vunpack.c.h.b16 %v1528
        %v1616 = vunpack.c.l.b16 %v1529
        %v1617 = vunpack.c.h.b16 %v1529
        %v1618 = vunpack.c.l.b16 %v1530
        %v1619 = vunpack.c.h.b16 %v1530
        %v1620 = vunpack.c.l.b16 %v1531
        %v1621 = vunpack.c.h.b16 %v1531
        %v1622 = vunpack.c.l.b16 %v1532
        %v1623 = vunpack.c.h.b16 %v1532
        %v1624 = vunpack.c.l.b16 %v1533
        %v1625 = vunpack.c.h.b16 %v1533
        %v1626 = vunpack.c.l.b16 %v1534
        %v1627 = vunpack.c.h.b16 %v1534
        %v1628 = vunpack.c.l.b16 %v1535
        %v1629 = vunpack.c.h.b16 %v1535
        %v1630 = vunpack.c.l.b16 %v1536
        %v1631 = vunpack.c.h.b16 %v1536
        %v1632 = vunpack.c.l.b16 %v1537
        %v1633 = vunpack.c.h.b16 %v1537
        %v1634 = vpack.c.b16 %v1572, %v1570
        %v1635 = vpack.c.b16 %v1573, %v1571
        %v1636 = vpack.c.b16 %v1576, %v1574
        %v1637 = vpack.c.b16 %v1577, %v1575
        %v1638 = vpack.c.b16 %v1580, %v1578
        %v1639 = vpack.c.b16 %v1581, %v1579
        %v1640 = vpack.c.b16 %v1584, %v1582
        %v1641 = vpack.c.b16 %v1585, %v1583
        %v1642 = vpack.c.b16 %v1588, %v1586
        %v1643 = vpack.c.b16 %v1589, %v1587
        %v1644 = vpack.c.b16 %v1592, %v1590
        %v1645 = vpack.c.b16 %v1593, %v1591
        %v1646 = vpack.c.b16 %v1596, %v1594
        %v1647 = vpack.c.b16 %v1597, %v1595
        %v1648 = vpack.c.b16 %v1600, %v1598
        %v1649 = vpack.c.b16 %v1601, %v1599
        %v1650 = vpack.c.b16 %v1604, %v1602
        %v1651 = vpack.c.b16 %v1605, %v1603
        %v1652 = vpack.c.b16 %v1608, %v1606
        %v1653 = vpack.c.b16 %v1609, %v1607
        %v1654 = vpack.c.b16 %v1612, %v1610
        %v1655 = vpack.c.b16 %v1613, %v1611
        %v1656 = vpack.c.b16 %v1616, %v1614
        %v1657 = vpack.c.b16 %v1617, %v1615
        %v1658 = vpack.c.b16 %v1620, %v1618
        %v1659 = vpack.c.b16 %v1621, %v1619
        %v1660 = vpack.c.b16 %v1624, %v1622
        %v1661 = vpack.c.b16 %v1625, %v1623
        %v1662 = vpack.c.b16 %v1628, %v1626
        %v1663 = vpack.c.b16 %v1629, %v1627
        %v1664 = vpack.c.b16 %v1632, %v1630
        %v1665 = vpack.c.b16 %v1633, %v1631
        %1698 = vmatpush.bf16.msra.mxu0 %v1648
        %1699 = vmatpush.bf16.msra.mxu0 %v1646
        %1700 = vmatpush.bf16.msra.mxu0 %v1644
        %1701 = vmatpush.bf16.msra.mxu0 %v1642
        %1702 = vmatpush.bf16.msra.mxu0 %v1640
        %1703 = vmatpush.bf16.msra.mxu0 %v1638
        %1704 = vmatpush.bf16.msra.mxu0 %v1636
        %1705 = vmatpush.bf16.msra.mxu0 %v1634
        %1706 = vmatmul.bf16.gmra.mxu0 %v1504
        %v1707 = vpop.f32.mrf.mxu0
        %v1708 = vadd.f32 0.0, %v1707
        %v1709 = vpop.f32.mrf.mxu0
        %1710 = vdwg.mxu0
        %1711 = vmatpush.bf16.msra.mxu0 %v1664
        %1712 = vmatpush.bf16.msra.mxu0 %v1662
        %1713 = vmatpush.bf16.msra.mxu0 %v1660
        %1714 = vmatpush.bf16.msra.mxu0 %v1658
        %1715 = vmatpush.bf16.msra.mxu0 %v1656
        %1716 = vmatpush.bf16.msra.mxu0 %v1654
        %1717 = vmatpush.bf16.msra.mxu0 %v1652
        %1718 = vmatpush.bf16.msra.mxu0 %v1650
        %1719 = vmatmul.bf16.gmra.mxu0 %v1505
        %v1720 = vpop.f32.mrf.mxu0
        %v1721 = vadd.f32 %v1708, %v1720
        %v1722 = vpop.f32.mrf.mxu0
        %1723 = vdwg.mxu0
        %1724 = vmatpush.bf16.msra.mxu0 %v1649
        %1725 = vmatpush.bf16.msra.mxu0 %v1647
        %1726 = vmatpush.bf16.msra.mxu0 %v1645
        %1727 = vmatpush.bf16.msra.mxu0 %v1643
        %1728 = vmatpush.bf16.msra.mxu0 %v1641
        %1729 = vmatpush.bf16.msra.mxu0 %v1639
        %1730 = vmatpush.bf16.msra.mxu0 %v1637
        %1731 = vmatpush.bf16.msra.mxu0 %v1635
        %1732 = vmatmul.bf16.gmra.mxu0 %v1504
        %v1733 = vpop.f32.mrf.mxu0
        %v1734 = vadd.f32 0.0, %v1733
        %v1735 = vpop.f32.mrf.mxu0
        %1736 = vdwg.mxu0
        %1737 = vmatpush.bf16.msra.mxu0 %v1665
        %1738 = vmatpush.bf16.msra.mxu0 %v1663
        %1739 = vmatpush.bf16.msra.mxu0 %v1661
        %1740 = vmatpush.bf16.msra.mxu0 %v1659
        %1741 = vmatpush.bf16.msra.mxu0 %v1657
        %1742 = vmatpush.bf16.msra.mxu0 %v1655
        %1743 = vmatpush.bf16.msra.mxu0 %v1653
        %1744 = vmatpush.bf16.msra.mxu0 %v1651
        %1745 = vmatmul.bf16.gmra.mxu0 %v1505
        %v1746 = vpop.f32.mrf.mxu0
        %v1747 = vadd.f32 %v1734, %v1746
        %v1748 = vpop.f32.mrf.mxu0
        %1749 = vdwg.mxu0
        %v1750 = vrot.slane %v1721, 4
        %v1751 = vadd.f32 %v1721, %v1750
        %v1752 = vrot.slane %v1751, 2
        %v1753 = vadd.f32 %v1751, %v1752
        %v1754 = vrot.slane %v1753, 1
        %v1755 = vadd.f32 %v1753, %v1754
        %v1756 = vrot.slane %v1747, 4
        %v1757 = vadd.f32 %v1747, %v1756
        %v1758 = vrot.slane %v1757, 2
        %v1759 = vadd.f32 %v1757, %v1758
        %v1760 = vrot.slane %v1759, 1
        %v1761 = vadd.f32 %v1759, %v1760
        %v1762 = vmul.f32 %v1755, %v1457
        %v1763 = vmul.f32 %v1761, %v1457
        %v1764 = vsub.f32 %v1721, %v1762
        %v1765 = vsub.f32 %v1747, %v1763
        %v1766 = vmul.f32 %v1764, %v1764
        %v1767 = vmul.f32 %v1765, %v1765
        %v1768 = vrot.slane %v1766, 4
        %v1769 = vadd.f32 %v1766, %v1768
        %v1770 = vrot.slane %v1769, 2
        %v1771 = vadd.f32 %v1769, %v1770
        %v1772 = vrot.slane %v1771, 1
        %v1773 = vadd.f32 %v1771, %v1772
        %v1774 = vrot.slane %v1767, 4
        %v1775 = vadd.f32 %v1767, %v1774
        %v1776 = vrot.slane %v1775, 2
        %v1777 = vadd.f32 %v1775, %v1776
        %v1778 = vrot.slane %v1777, 1
        %v1779 = vadd.f32 %v1777, %v1778
        %v1780 = vmul.f32 %v1773, %v1457
        %v1781 = vmul.f32 %v1779, %v1457
        %v1782 = vadd.f32 %v1780, 1e-05
        %v1783 = vadd.f32 %v1781, 1e-05
        %v1784 = vrsqrt.pop %v1782
        %v1785 = vmul.f32 %v1784, %v1782
        %v1786 = vmul.f32 %v1785, %v1784
        %v1787 = vmul.f32 0.5, %v1786
        %v1788 = vsub.f32 1.5, %v1787
        %v1789 = vmul.f32 %v1784, %v1788
        %vm1790 = vweird.f32 %v1782
        %vm1791 = vweird.f32 %v1784
        %vm1792 = vmor %vm1790, %vm1791
        %v1793 = vsel %vm1792, %v1784, %v1789
        %v1794 = vrsqrt.pop %v1783
        %v1795 = vmul.f32 %v1794, %v1783
        %v1796 = vmul.f32 %v1795, %v1794
        %v1797 = vmul.f32 0.5, %v1796
        %v1798 = vsub.f32 1.5, %v1797
        %v1799 = vmul.f32 %v1794, %v1798
        %vm1800 = vweird.f32 %v1783
        %vm1801 = vweird.f32 %v1794
        %vm1802 = vmor %vm1800, %vm1801
        %v1803 = vsel %vm1802, %v1794, %v1799
        %v1804 = vmul.f32 %v1764, %v1793
        %v1805 = vmul.f32 %v1765, %v1803
        %v1806 = vmax.f32 %v1804, 0.0
        %v1807 = vmax.f32 %v1805, 0.0
        %v1808 = vpack.c.bf16 %v1806, %v1806
        %v1809 = vpack.c.bf16 %v1807, %v1807
        %v1810 = vld [vmem:[#allocation2] sm:$0xf]
        %v1811 = vld [vmem:[#allocation2 + $0x4] sm:$0xf]
        %v1812 = vld [vmem:[#allocation2 + $0x8] sm:$0xf]
        %v1813 = vld [vmem:[#allocation2 + $0xc] sm:$0xf]
        %v1814 = vld [vmem:[#allocation2 + $0x10] sm:$0xf]
        %v1815 = vld [vmem:[#allocation2 + $0x14] sm:$0xf]
        %v1816 = vld [vmem:[#allocation2 + $0x18] sm:$0xf]
        %v1817 = vld [vmem:[#allocation2 + $0x1c] sm:$0xf]
        %v1818 = vld [vmem:[#allocation2 + $0x20] sm:$0xf]
        %v1819 = vld [vmem:[#allocation2 + $0x24] sm:$0xf]
        %v1820 = vld [vmem:[#allocation2 + $0x28] sm:$0xf]
        %v1821 = vld [vmem:[#allocation2 + $0x2c] sm:$0xf]
        %v1822 = vld [vmem:[#allocation2 + $0x30] sm:$0xf]
        %v1823 = vld [vmem:[#allocation2 + $0x34] sm:$0xf]
        %v1824 = vld [vmem:[#allocation2 + $0x38] sm:$0xf]
        %v1825 = vld [vmem:[#allocation2 + $0x3c] sm:$0xf]
        %v1826 = vld [vmem:[#allocation2 + $0x40] sm:$0xf]
        %v1827 = vld [vmem:[#allocation2 + $0x44] sm:$0xf]
        %v1828 = vld [vmem:[#allocation2 + $0x48] sm:$0xf]
        %v1829 = vld [vmem:[#allocation2 + $0x4c] sm:$0xf]
        %v1830 = vld [vmem:[#allocation2 + $0x50] sm:$0xf]
        %v1831 = vld [vmem:[#allocation2 + $0x54] sm:$0xf]
        %v1832 = vld [vmem:[#allocation2 + $0x58] sm:$0xf]
        %v1833 = vld [vmem:[#allocation2 + $0x5c] sm:$0xf]
        %v1834 = vld [vmem:[#allocation2 + $0x60] sm:$0xf]
        %v1835 = vld [vmem:[#allocation2 + $0x64] sm:$0xf]
        %v1836 = vld [vmem:[#allocation2 + $0x68] sm:$0xf]
        %v1837 = vld [vmem:[#allocation2 + $0x6c] sm:$0xf]
        %v1838 = vld [vmem:[#allocation2 + $0x70] sm:$0xf]
        %v1839 = vld [vmem:[#allocation2 + $0x74] sm:$0xf]
        %v1840 = vld [vmem:[#allocation2 + $0x78] sm:$0xf]
        %v1841 = vld [vmem:[#allocation2 + $0x7c] sm:$0xf]
        %v1842 = vld [vmem:[%s5] sm:$0x1]
        %v1844 = vperm.slane %v1842, 0
        %v1878 = vunpack.c.l.b16 %v1810
        %v1879 = vunpack.c.l.b16 %v1811
        %v1880 = vunpack.c.l.b16 %v1812
        %v1881 = vunpack.c.l.b16 %v1813
        %v1882 = vunpack.c.l.b16 %v1814
        %v1883 = vunpack.c.l.b16 %v1815
        %v1884 = vunpack.c.l.b16 %v1816
        %v1885 = vunpack.c.l.b16 %v1817
        %v1886 = vunpack.c.l.b16 %v1818
        %v1887 = vunpack.c.l.b16 %v1819
        %v1888 = vunpack.c.l.b16 %v1820
        %v1889 = vunpack.c.l.b16 %v1821
        %v1890 = vunpack.c.l.b16 %v1822
        %v1891 = vunpack.c.l.b16 %v1823
        %v1892 = vunpack.c.l.b16 %v1824
        %v1893 = vunpack.c.l.b16 %v1825
        %v1894 = vunpack.c.l.b16 %v1826
        %v1895 = vunpack.c.l.b16 %v1827
        %v1896 = vunpack.c.l.b16 %v1828
        %v1897 = vunpack.c.l.b16 %v1829
        %v1898 = vunpack.c.l.b16 %v1830
        %v1899 = vunpack.c.l.b16 %v1831
        %v1900 = vunpack.c.l.b16 %v1832
        %v1901 = vunpack.c.l.b16 %v1833
        %v1902 = vunpack.c.l.b16 %v1834
        %v1903 = vunpack.c.l.b16 %v1835
        %v1904 = vunpack.c.l.b16 %v1836
        %v1905 = vunpack.c.l.b16 %v1837
        %v1906 = vunpack.c.l.b16 %v1838
        %v1907 = vunpack.c.l.b16 %v1839
        %v1908 = vunpack.c.l.b16 %v1840
        %v1909 = vunpack.c.l.b16 %v1841
        %v1910 = vpack.c.b16 %v1879, %v1878
        %v1911 = vpack.c.b16 %v1881, %v1880
        %v1912 = vpack.c.b16 %v1883, %v1882
        %v1913 = vpack.c.b16 %v1885, %v1884
        %v1914 = vpack.c.b16 %v1887, %v1886
        %v1915 = vpack.c.b16 %v1889, %v1888
        %v1916 = vpack.c.b16 %v1891, %v1890
        %v1917 = vpack.c.b16 %v1893, %v1892
        %v1918 = vpack.c.b16 %v1895, %v1894
        %v1919 = vpack.c.b16 %v1897, %v1896
        %v1920 = vpack.c.b16 %v1899, %v1898
        %v1921 = vpack.c.b16 %v1901, %v1900
        %v1922 = vpack.c.b16 %v1903, %v1902
        %v1923 = vpack.c.b16 %v1905, %v1904
        %v1924 = vpack.c.b16 %v1907, %v1906
        %v1925 = vpack.c.b16 %v1909, %v1908
        %1942 = vmatpush.bf16.msra.mxu0 %v1917
        %1943 = vmatpush.bf16.msra.mxu0 %v1916
        %1944 = vmatpush.bf16.msra.mxu0 %v1915
        %1945 = vmatpush.bf16.msra.mxu0 %v1914
        %1946 = vmatpush.bf16.msra.mxu0 %v1913
        %1947 = vmatpush.bf16.msra.mxu0 %v1912
        %1948 = vmatpush.bf16.msra.mxu0 %v1911
        %1949 = vmatpush.bf16.msra.mxu0 %v1910
        %1950 = vmatmul.bf16.gmra.mxu0 %v1808
        %v1951 = vpop.f32.mrf.mxu0
        %v1952 = vadd.f32 %v1844, %v1951
        %v1953 = vpop.f32.mrf.mxu0
        %1954 = vdwg.mxu0
        %1955 = vmatpush.bf16.msra.mxu0 %v1925
        %1956 = vmatpush.bf16.msra.mxu0 %v1924
        %1957 = vmatpush.bf16.msra.mxu0 %v1923
        %1958 = vmatpush.bf16.msra.mxu0 %v1922
        %1959 = vmatpush.bf16.msra.mxu0 %v1921
        %1960 = vmatpush.bf16.msra.mxu0 %v1920
        %1961 = vmatpush.bf16.msra.mxu0 %v1919
        %1962 = vmatpush.bf16.msra.mxu0 %v1918
        %1963 = vmatmul.bf16.gmra.mxu0 %v1809
        %v1964 = vpop.f32.mrf.mxu0
        %v1965 = vadd.f32 %v1952, %v1964
        %v1966 = vpop.f32.mrf.mxu0
        %1967 = vdwg.mxu0
        %v1968 = vrot.slane %v1965, 4
        %v1969 = vadd.f32 %v1965, %v1968
        %v1970 = vrot.slane %v1969, 2
        %v1971 = vadd.f32 %v1969, %v1970
        %v1972 = vrot.slane %v1971, 1
        %v1973 = vadd.f32 %v1971, %v1972
        %v1974 = vmul.f32 %v1973, %v1457
        %v1975 = vsub.f32 %v1965, %v1974
        %v1976 = vmul.f32 %v1975, %v1975
        %v1977 = vrot.slane %v1976, 4
        %v1978 = vadd.f32 %v1976, %v1977
        %v1979 = vrot.slane %v1978, 2
        %v1980 = vadd.f32 %v1978, %v1979
        %v1981 = vrot.slane %v1980, 1
        %v1982 = vadd.f32 %v1980, %v1981
        %v1983 = vmul.f32 %v1982, %v1457
        %v1984 = vadd.f32 %v1983, 1e-05
        %v1985 = vrsqrt.pop %v1984
        %v1986 = vmul.f32 %v1985, %v1984
        %v1987 = vmul.f32 %v1986, %v1985
        %v1988 = vmul.f32 0.5, %v1987
        %v1989 = vsub.f32 1.5, %v1988
        %v1990 = vmul.f32 %v1985, %v1989
        %vm1991 = vweird.f32 %v1984
        %vm1992 = vweird.f32 %v1985
        %vm1993 = vmor %vm1991, %vm1992
        %v1994 = vsel %vm1993, %v1985, %v1990
        %v1995 = vmul.f32 %v1975, %v1994
        %1996 = vst [vmem:[%s414] sm:$0xff] %v1995
        %v1997 = vpack.c.bf16 %v1995, %v1995
        %v1998 = vld [vmem:[#allocation4] sm:$0xf]
        %v1999 = vld [vmem:[#allocation4 + $0x4] sm:$0xf]
        %v2000 = vld [vmem:[#allocation4 + $0x8] sm:$0xf]
        %v2001 = vld [vmem:[#allocation4 + $0xc] sm:$0xf]
        %v2002 = vld [vmem:[#allocation4 + $0x10] sm:$0xf]
        %v2003 = vld [vmem:[#allocation4 + $0x14] sm:$0xf]
        %v2004 = vld [vmem:[#allocation4 + $0x18] sm:$0xf]
        %v2005 = vld [vmem:[#allocation4 + $0x1c] sm:$0xf]
        %v2006 = vld [vmem:[#allocation4 + $0x20] sm:$0xf]
        %v2007 = vld [vmem:[#allocation4 + $0x24] sm:$0xf]
        %v2008 = vld [vmem:[#allocation4 + $0x28] sm:$0xf]
        %v2009 = vld [vmem:[#allocation4 + $0x2c] sm:$0xf]
        %v2010 = vld [vmem:[#allocation4 + $0x30] sm:$0xf]
        %v2011 = vld [vmem:[#allocation4 + $0x34] sm:$0xf]
        %v2012 = vld [vmem:[#allocation4 + $0x38] sm:$0xf]
        %v2013 = vld [vmem:[#allocation4 + $0x3c] sm:$0xf]
        %v2030 = vunpack.c.l.b16 %v1998
        %v2031 = vunpack.c.l.b16 %v1999
        %v2032 = vunpack.c.l.b16 %v2000
        %v2033 = vunpack.c.l.b16 %v2001
        %v2034 = vunpack.c.l.b16 %v2002
        %v2035 = vunpack.c.l.b16 %v2003
        %v2036 = vunpack.c.l.b16 %v2004
        %v2037 = vunpack.c.l.b16 %v2005
        %v2038 = vunpack.c.l.b16 %v2006
        %v2039 = vunpack.c.l.b16 %v2007
        %v2040 = vunpack.c.l.b16 %v2008
        %v2041 = vunpack.c.l.b16 %v2009
        %v2042 = vunpack.c.l.b16 %v2010
        %v2043 = vunpack.c.l.b16 %v2011
        %v2044 = vunpack.c.l.b16 %v2012
        %v2045 = vunpack.c.l.b16 %v2013
        %v2046 = vpack.c.b16 %v2031, %v2030
        %v2047 = vpack.c.b16 %v2033, %v2032
        %v2048 = vpack.c.b16 %v2035, %v2034
        %v2049 = vpack.c.b16 %v2037, %v2036
        %v2050 = vpack.c.b16 %v2039, %v2038
        %v2051 = vpack.c.b16 %v2041, %v2040
        %v2052 = vpack.c.b16 %v2043, %v2042
        %v2053 = vpack.c.b16 %v2045, %v2044
        %2062 = vmatpush.bf16.msra.mxu0 %v2053
        %2063 = vmatpush.bf16.msra.mxu0 %v2052
        %2064 = vmatpush.bf16.msra.mxu0 %v2051
        %2065 = vmatpush.bf16.msra.mxu0 %v2050
        %2066 = vmatpush.bf16.msra.mxu0 %v2049
        %2067 = vmatpush.bf16.msra.mxu0 %v2048
        %2068 = vmatpush.bf16.msra.mxu0 %v2047
        %2069 = vmatpush.bf16.msra.mxu0 %v2046
        %2070 = vmatmul.bf16.gmra.mxu0 %v1997
        %v2071 = vpop.f32.mrf.mxu0
        %v2072 = vadd.f32 0.0, %v2071
        %v2073 = vpop.f32.mrf.mxu0
        %2074 = vdwg.mxu0
        %v2075 = vrot.slane %v2072, 4
        %v2076 = vadd.f32 %v2072, %v2075
        %v2077 = vrot.slane %v2076, 2
        %v2078 = vadd.f32 %v2076, %v2077
        %v2079 = vrot.slane %v2078, 1
        %v2080 = vadd.f32 %v2078, %v2079
        %v2081 = vmul.f32 %v2080, %v1457
        %v2082 = vsub.f32 %v2072, %v2081
        %v2083 = vmul.f32 %v2082, %v2082
        %v2084 = vrot.slane %v2083, 4
        %v2085 = vadd.f32 %v2083, %v2084
        %v2086 = vrot.slane %v2085, 2
        %v2087 = vadd.f32 %v2085, %v2086
        %v2088 = vrot.slane %v2087, 1
        %v2089 = vadd.f32 %v2087, %v2088
        %v2090 = vmul.f32 %v2089, %v1457
        %v2091 = vadd.f32 %v2090, 1e-05
        %v2092 = vrsqrt.pop %v2091
        %v2093 = vmul.f32 %v2092, %v2091
        %v2094 = vmul.f32 %v2093, %v2092
        %v2095 = vmul.f32 0.5, %v2094
        %v2096 = vsub.f32 1.5, %v2095
        %v2097 = vmul.f32 %v2092, %v2096
        %vm2098 = vweird.f32 %v2091
        %vm2099 = vweird.f32 %v2092
        %vm2100 = vmor %vm2098, %vm2099
        %v2101 = vsel %vm2100, %v2092, %v2097
        %v2102 = vmul.f32 %v2082, %v2101
        %v2103 = vmax.f32 %v2102, 0.0
        %v2104 = vpack.c.bf16 %v2103, %v2103
        %v2105 = vld [vmem:[#allocation6] sm:$0xf]
        %v2106 = vld [vmem:[#allocation6 + $0x4] sm:$0xf]
        %v2107 = vld [vmem:[#allocation6 + $0x8] sm:$0xf]
        %v2108 = vld [vmem:[#allocation6 + $0xc] sm:$0xf]
        %v2109 = vld [vmem:[#allocation6 + $0x10] sm:$0xf]
        %v2110 = vld [vmem:[#allocation6 + $0x14] sm:$0xf]
        %v2111 = vld [vmem:[#allocation6 + $0x18] sm:$0xf]
        %v2112 = vld [vmem:[#allocation6 + $0x1c] sm:$0xf]
        %v2113 = vld [vmem:[#allocation6 + $0x20] sm:$0xf]
        %v2114 = vld [vmem:[#allocation6 + $0x24] sm:$0xf]
        %v2115 = vld [vmem:[#allocation6 + $0x28] sm:$0xf]
        %v2116 = vld [vmem:[#allocation6 + $0x2c] sm:$0xf]
        %v2117 = vld [vmem:[#allocation6 + $0x30] sm:$0xf]
        %v2118 = vld [vmem:[#allocation6 + $0x34] sm:$0xf]
        %v2119 = vld [vmem:[#allocation6 + $0x38] sm:$0xf]
        %v2120 = vld [vmem:[#allocation6 + $0x3c] sm:$0xf]
        %v2121 = vld [vmem:[%s8] sm:$0x1]
        %v2123 = vperm.slane %v2121, 0
        %v2141 = vunpack.c.l.b16 %v2105
        %v2142 = vunpack.c.l.b16 %v2106
        %v2143 = vunpack.c.l.b16 %v2107
        %v2144 = vunpack.c.l.b16 %v2108
        %v2145 = vunpack.c.l.b16 %v2109
        %v2146 = vunpack.c.l.b16 %v2110
        %v2147 = vunpack.c.l.b16 %v2111
        %v2148 = vunpack.c.l.b16 %v2112
        %v2149 = vunpack.c.l.b16 %v2113
        %v2150 = vunpack.c.l.b16 %v2114
        %v2151 = vunpack.c.l.b16 %v2115
        %v2152 = vunpack.c.l.b16 %v2116
        %v2153 = vunpack.c.l.b16 %v2117
        %v2154 = vunpack.c.l.b16 %v2118
        %v2155 = vunpack.c.l.b16 %v2119
        %v2156 = vunpack.c.l.b16 %v2120
        %v2157 = vpack.c.b16 %v2142, %v2141
        %v2158 = vpack.c.b16 %v2144, %v2143
        %v2159 = vpack.c.b16 %v2146, %v2145
        %v2160 = vpack.c.b16 %v2148, %v2147
        %v2161 = vpack.c.b16 %v2150, %v2149
        %v2162 = vpack.c.b16 %v2152, %v2151
        %v2163 = vpack.c.b16 %v2154, %v2153
        %v2164 = vpack.c.b16 %v2156, %v2155
        %2173 = vmatpush.bf16.msra.mxu0 %v2164
        %2174 = vmatpush.bf16.msra.mxu0 %v2163
        %2175 = vmatpush.bf16.msra.mxu0 %v2162
        %2176 = vmatpush.bf16.msra.mxu0 %v2161
        %2177 = vmatpush.bf16.msra.mxu0 %v2160
        %2178 = vmatpush.bf16.msra.mxu0 %v2159
        %2179 = vmatpush.bf16.msra.mxu0 %v2158
        %2180 = vmatpush.bf16.msra.mxu0 %v2157
        %2181 = vmatmul.bf16.gmra.mxu0 %v2104
        %v2182 = vpop.f32.mrf.mxu0
        %v2183 = vadd.f32 %v2123, %v2182
        %v2184 = vpop.f32.mrf.mxu0
        %2185 = vdwg.mxu0
        %2186 = vst [vmem:[%s418] sm:$0xff] %v2183
        %p2187 = scmp.lt.s32.totalorder %s24, 1
        %s2188 = scalar_select %p2187, %s24, 1
        %s2189 = smul.addr %s2188, 8
        %s2190 = scalar_lea.vmem %s9, %s2189
        %p2191 = scmp.lt.s32.totalorder %s24, 1
        %s2192 = scalar_select %p2191, %s24, 1
        %s2193 = smul.addr %s2192, 8
        %s2194 = scalar_lea.vmem %s10, %s2193
        // Predicated region
        $region69: #{mec_forward.2} parent=55 // pred_check
          %p2195 = pneg %p236
        $region70: #{mec_forward.2} parent=55 // pred_check_branch
          %2197 = sbr.rel (%p2195) target = $region72
        $region71: #{mec_forward.2} parent=55 // pred_region
          _
        $region72: #{mec_forward.2} parent=55 // pred_fallthru
          _
        // Predicated region
        $region73: #{mec_forward.2} parent=55 // pred_check
          %p2198 = pneg %p262
        $region74: #{mec_forward.2} parent=55 // pred_check_branch
          %2200 = sbr.rel (%p2198) target = $region76
        $region75: #{mec_forward.2} parent=55 // pred_region
          _
        $region76: #{mec_forward.2} parent=55 // pred_fallthru
          _
      $region56: #{mec_forward.2} parent=5 // pred_fallthru
        _
      %p2201 = scmp.le.s32.totalorder 2, %s19
      // Predicated region
      $region77: #{mec_forward.2} parent=5 // pred_check
        %p2202 = pneg %p2201
      $region78: #{mec_forward.2} parent=5 // pred_check_branch
        %2204 = sbr.rel (%p2202) target = $region80
      $region79: #{mec_forward.2} parent=5 // pred_region
        %s2205 = ssub.s32 %s19, 2
        // Predicated region
        $region81: #{mec_forward.2} parent=79 // pred_check
          %p2206 = pneg %p242
        $region82: #{mec_forward.2} parent=79 // pred_check_branch
          %2208 = sbr.rel (%p2206) target = $region84
        $region83: #{mec_forward.2} parent=79 // pred_region
          %p2209 = scmp.lt.s32.totalorder %s25, 1
          %s2210 = scalar_select %p2209, %s25, 1
          %s2211 = smul.addr %s2210, 8
          %s2212 = scalar_lea.vmem %s9, %s2211
        $region84: #{mec_forward.2} parent=79 // pred_fallthru
          _
        // Predicated region
        $region85: #{mec_forward.2} parent=79 // pred_check
          %p2213 = pneg %p268
        $region86: #{mec_forward.2} parent=79 // pred_check_branch
          %2215 = sbr.rel (%p2213) target = $region88
        $region87: #{mec_forward.2} parent=79 // pred_region
          %p2216 = scmp.lt.s32.totalorder %s25, 1
          %s2217 = scalar_select %p2216, %s25, 1
          %s2218 = smul.addr %s2217, 8
          %s2219 = scalar_lea.vmem %s10, %s2218
        $region88: #{mec_forward.2} parent=79 // pred_fallthru
          _
      $region80: #{mec_forward.2} parent=5 // pred_fallthru
        _
    $region6: #{mec_forward.2} parent=1 // loop_footer
      %s23 = sadd.s32 1, %s19
    $region7: #{mec_forward.2} parent=1 // loop_footer_branch
      %18 = sbr.rel target = $region3
    $region8: #{mec_forward.2} parent=1 // loop_exit
      _
    %2220 = vsyncpa [#allocation3], 1
    %s2221 = scalar_lea.sflag [#allocation3], 1
    %2222 = vsyncpa %s2221, 1
    %2223 = vsyncpa [#allocation5], 1

</llo_original>
